<compile_context>
chip_gen: v5e
topology: v5e:2x2
jax: 0.10.0
libtpu: 0.0.40
codegen_flags: <defaults>
</compile_context>

<pallas_src>
import functools

import jax
import jax.numpy as jnp
from jax.experimental import pallas as pl
from jax.experimental.pallas import tpu as pltpu

# Above v5e (16 MiB) / v6e (32 MiB) scoped defaults, within v7x 64 MiB physical.
_VMEM_LIMIT_BYTES = 64 * 1024 * 1024


# --------------------------------------------------------------------------
# Padding helpers (wrapper-side layout plumbing, not compute)
# --------------------------------------------------------------------------
def _round_up(x, m):
    return ((x + m - 1) // m) * m


def _pad_to(a, shape):
    return jnp.pad(a, [(0, s - d) for d, s in zip(a.shape, shape)])


def _pad_gates_last(a, h, h_pad):
    """(..., 3h) -> (..., 3*h_pad), zero-padding each gate block separately so
    the kernel can slice gates at h_pad-aligned lane offsets."""
    parts = []
    for g in range(3):
        part = a[..., g * h:(g + 1) * h]
        parts.append(jnp.pad(part, [(0, 0)] * (a.ndim - 1) + [(0, h_pad - h)]))
    return jnp.concatenate(parts, axis=-1)


# --------------------------------------------------------------------------
# Hoisted matmul (+bias, optional sigmoid) kernel — used only for the large
# vocab head fallback path.  N-tiled, weight block single-buffered.
# --------------------------------------------------------------------------
def _matmul_bias_kernel(x_ref, w_ref, b_ref, out_ref, *, apply_sigmoid):
    y = jnp.dot(x_ref[...], w_ref[...],
                preferred_element_type=jnp.float32) + b_ref[...]
    if apply_sigmoid:
        # TODO(synk): for huge vocab heads on v6e, consider a bf16 pre-activation
        # before sigmoid to double EUP throughput.
        y = jax.nn.sigmoid(y)
    out_ref[...] = y.astype(out_ref.dtype)


def _matmul_bias(x, w, b, *, apply_sigmoid=False, row_block=256, n_block=512):
    """x: (R, K), w: (K, N), b: (1, N).  K, N multiples of 128; R multiple of 8."""
    R, K = x.shape
    _, N = w.shape
    row_block = min(row_block, _round_up(R, 8))
    n_block = min(n_block, N)
    R_pad = _round_up(R, row_block)
    N_pad = _round_up(N, n_block)
    x_p = _pad_to(x, (R_pad, K))
    w_p = _pad_to(w, (K, N_pad))
    b_p = _pad_to(b, (1, N_pad))

    kernel = functools.partial(_matmul_bias_kernel, apply_sigmoid=apply_sigmoid)
    out = pl.pallas_call(
        kernel,
        out_shape=jax.ShapeDtypeStruct((R_pad, N_pad), jnp.float32),
        grid_spec=pltpu.PrefetchScalarGridSpec(
            num_scalar_prefetch=0,
            # Rows innermost so the (K, n_block) weight block is reused across
            # row blocks (constant index on the inner axis -> fetched once per j).
            grid=(N_pad // n_block, R_pad // row_block),
            in_specs=[
                pl.BlockSpec((row_block, K), lambda j, i: (i, 0)),
                pl.BlockSpec((K, n_block), lambda j, i: (0, j),
                             pipeline_mode=pl.Buffered(1)),
                pl.BlockSpec((1, n_block), lambda j, i: (0, j),
                             pipeline_mode=pl.Buffered(1)),
            ],
            out_specs=pl.BlockSpec((row_block, n_block), lambda j, i: (i, j)),
        ),
        compiler_params=pltpu.CompilerParams(
            dimension_semantics=("parallel", "parallel"),
            vmem_limit_bytes=_VMEM_LIMIT_BYTES,
        ),
    )(x_p, w_p, b_p)
    return out[:R, :N]


# --------------------------------------------------------------------------
# Fused GRU scan kernel: per grid step it does
#   (1) one (t_block*B, E)@(E, 3H) input-projection matmul,
#   (2) t_block sequential recurrence steps (one fused (B,H)@(H,3H) matmul each),
#   (3) optionally the (t_block*B, H)@(H, T) Linear+Sigmoid head,
# carrying the hidden state in a VMEM scratch across grid steps.
# --------------------------------------------------------------------------
def _gru_scan_kernel(x_ref, h0_ref, wih_ref, bgi_ref, whh_ref, bhn_ref, *rest,
                     seq_len, fuse_head, unroll):
    if fuse_head:
        wout_ref, bout_ref, out_ref, hfin_ref, gi_sc, hs_sc, h_sc = rest
    else:
        hs_out_ref, hfin_ref, gi_sc, hs_sc, h_sc = rest

    tb, bp, ep = x_ref.shape
    hp = h_sc.shape[-1]

    @pl.when(pl.program_id(0) == 0)
    def _():
        h_sc[...] = h0_ref[...]

    # (1) Block-level input projection, hoisted off the serial chain.
    x2 = x_ref[...].reshape(tb * bp, ep)
    gi = jnp.dot(x2, wih_ref[...],
                 preferred_element_type=jnp.float32) + bgi_ref[...]
    gi_sc[...] = gi.reshape(tb, bp, 3 * hp)

    base = pl.program_id(0) * tb

    # (2) Sequential recurrence over the t_block timesteps.
    def step(t, carry):
        h = h_sc[...]                                    # (B, H) f32
        gi_t = gi_sc[t]                                  # (B, 3H) f32
        # One fused bf16 MXU matmul per timestep.
        # TODO(synk): stage W_hh in the MXU once per grid step (matmul_push_rhs)
        # and reuse across the unrolled steps at realistic H.
        gh = jnp.dot(h.astype(whh_ref.dtype), whh_ref[...],
                     preferred_element_type=jnp.float32)
        # PyTorch GRU gate math (gate order r, z, n); b_hh_n stays inside r*(.).
        r = jax.nn.sigmoid(gi_t[:, 0:hp] + gh[:, 0:hp])
        z = jax.nn.sigmoid(gi_t[:, hp:2 * hp] + gh[:, hp:2 * hp])
        n = jnp.tanh(gi_t[:, 2 * hp:3 * hp] +
                     r * (gh[:, 2 * hp:3 * hp] + bhn_ref[...]))
        h_new = (1.0 - z) * n + z * h
        # Freeze the carry on padded timesteps so the final hidden is the state
        # after exactly seq_len real steps.
        keep = (base + t < seq_len).astype(jnp.float32)
        h_new = keep * h_new + (1.0 - keep) * h
        h_sc[...] = h_new
        hs_sc[t] = h_new
        return carry

    jax.lax.fori_loop(0, tb, step, 0, unroll=unroll)

    hfin_ref[...] = h_sc[...]

    if fuse_head:
        # (3) Fused Linear + Sigmoid head: one matmul over all t_block*B rows.
        hs2 = hs_sc[...].reshape(tb * bp, hp).astype(wout_ref.dtype)
        y = jnp.dot(hs2, wout_ref[...],
                    preferred_element_type=jnp.float32) + bout_ref[...]
        y = jax.nn.sigmoid(y)
        out_ref[...] = y.reshape(tb, bp, -1).astype(out_ref.dtype)
    else:
        hs_out_ref[...] = hs_sc[...].astype(hs_out_ref.dtype)


# --------------------------------------------------------------------------
# Forward wrapper
# --------------------------------------------------------------------------
def decoder_rnn_forward(token_ids, hidden, params, *, t_block=16, fuse_head=None,
                        compute_dtype=jnp.bfloat16):
    """Pallas implementation of DecoderRNN.forward.

    token_ids : (S, B) int32
    hidden    : (1, B, H) float32
    returns (output (S, B, T), hidden (1, B, H))
    """
    S, B = token_ids.shape
    emb = params["embedding"]
    E = emb.shape[1]
    w_hh = params["w_hh"]
    H = w_hh.shape[0]
    T = params["w_out"].shape[1]

    B_pad = _round_up(max(B, 8), 8)
    E_pad = _round_up(E, 128)
    H_pad = _round_up(H, 128)
    T_pad = _round_up(T, 128)
    GH = 3 * H_pad

    t_block = max(1, min(t_block, S))
    S_pad = _round_up(S, t_block)

    if fuse_head is None:
        # Fuse the output head when W_out (bf16, single-buffered) plus the
        # double-buffered output block stays well within VMEM.
        head_bytes = H_pad * T_pad * 2 + 2 * t_block * B_pad * T_pad * 4
        fuse_head = head_bytes <= 16 * 1024 * 1024

    # ---- 1. Embedding lookup (data-dependent gather; XLA glue) -------------
    # TODO(synk): on v5e, fuse this gather into the scan via scalar-prefetched
    # token ids + a pl.Element row-gather BlockSpec on the embedding table.
    x = emb[token_ids]                                      # (S, B, E)
    x = _pad_to(x, (S_pad, B_pad, E_pad)).astype(compute_dtype)

    # ---- 2. Padded / gate-blocked / bf16 weights ----------------------------
    # Fold biases: r/z gates take b_ih+b_hh; the n gate only takes b_ih since
    # b_hh_n must stay inside the r*(...) term of the recurrence.
    b_ih, b_hh = params["b_ih"], params["b_hh"]
    bias_gi = jnp.concatenate([
        b_ih[0:H] + b_hh[0:H],
        b_ih[H:2 * H] + b_hh[H:2 * H],
        b_ih[2 * H:3 * H],
    ])
    w_ih_p = _pad_gates_last(_pad_to(params["w_ih"], (E_pad, 3 * H)),
                             H, H_pad).astype(compute_dtype)
    bias_gi_p = _pad_gates_last(bias_gi, H, H_pad).reshape(1, GH)
    w_hh_p = _pad_gates_last(_pad_to(w_hh, (H_pad, 3 * H)),
                             H, H_pad).astype(compute_dtype)
    b_hn_p = _pad_to(b_hh[2 * H:3 * H], (H_pad,)).reshape(1, H_pad)
    h0_p = _pad_to(hidden[0].astype(jnp.float32), (B_pad, H_pad))
    w_out_p = _pad_to(params["w_out"], (H_pad, T_pad)).astype(compute_dtype)
    b_out_p = _pad_to(params["b_out"], (T_pad,)).reshape(1, T_pad)

    # ---- 3. Fused scan kernel ------------------------------------------------
    unroll = t_block if H_pad < 512 else min(4, t_block)
    resident = dict(pipeline_mode=pl.Buffered(1))   # loop-invariant inputs

    in_specs = [
        pl.BlockSpec((t_block, B_pad, E_pad), lambda i: (i, 0, 0)),     # x
        pl.BlockSpec((B_pad, H_pad), lambda i: (0, 0), **resident),     # h0
        pl.BlockSpec((E_pad, GH), lambda i: (0, 0), **resident),        # W_ih
        pl.BlockSpec((1, GH), lambda i: (0, 0), **resident),            # bias_gi
        pl.BlockSpec((H_pad, GH), lambda i: (0, 0), **resident),        # W_hh
        pl.BlockSpec((1, H_pad), lambda i: (0, 0), **resident),         # b_hh_n
    ]
    args = [x, h0_p, w_ih_p, bias_gi_p, w_hh_p, b_hn_p]

    if fuse_head:
        in_specs += [
            pl.BlockSpec((H_pad, T_pad), lambda i: (0, 0), **resident), # W_out
            pl.BlockSpec((1, T_pad), lambda i: (0, 0), **resident),     # b_out
        ]
        args += [w_out_p, b_out_p]
        out_shape = (
            jax.ShapeDtypeStruct((S_pad, B_pad, T_pad), jnp.float32),
            jax.ShapeDtypeStruct((B_pad, H_pad), jnp.float32),
        )
        out_specs = (
            pl.BlockSpec((t_block, B_pad, T_pad), lambda i: (i, 0, 0)),
            pl.BlockSpec((B_pad, H_pad), lambda i: (0, 0)),
        )
    else:
        out_shape = (
            jax.ShapeDtypeStruct((S_pad, B_pad, H_pad), compute_dtype),
            jax.ShapeDtypeStruct((B_pad, H_pad), jnp.float32),
        )
        out_specs = (
            pl.BlockSpec((t_block, B_pad, H_pad), lambda i: (i, 0, 0)),
            pl.BlockSpec((B_pad, H_pad), lambda i: (0, 0)),
        )

    kernel = functools.partial(_gru_scan_kernel, seq_len=S,
                               fuse_head=fuse_head, unroll=unroll)
    scratch_shapes = [
        pltpu.VMEM((t_block, B_pad, GH), jnp.float32),      # gi block
        pltpu.VMEM((t_block, B_pad, H_pad), jnp.float32),   # per-step hidden
        pltpu.VMEM((B_pad, H_pad), jnp.float32),            # carry
    ]

    outs = pl.pallas_call(
        kernel,
        out_shape=out_shape,
        grid_spec=pltpu.PrefetchScalarGridSpec(
            num_scalar_prefetch=0,
            grid=(S_pad // t_block,),
            in_specs=in_specs,
            out_specs=out_specs,
            scratch_shapes=scratch_shapes,
        ),
        compiler_params=pltpu.CompilerParams(
            dimension_semantics=("arbitrary",),      # recurrent over time
            vmem_limit_bytes=_VMEM_LIMIT_BYTES,
        ),
    )(*args)

    if fuse_head:
        out_p, hfin = outs
    else:
        hs, hfin = outs
        out_flat = _matmul_bias(hs.reshape(S_pad * B_pad, H_pad),
                                w_out_p, b_out_p, apply_sigmoid=True)
        out_p = out_flat.reshape(S_pad, B_pad, T_pad)

    out = out_p[:S, :B, :T]
    h_final = hfin[:B, :H][None]                             # (1, B, H)
    return out, h_final


# --------------------------------------------------------------------------
# Parameters & pure-JAX reference
# --------------------------------------------------------------------------
def make_params(key, token_size, embed_size, hidden_size):
    """Deterministic synthetic parameters (shapes match the nn.Module).

    PyTorch stores weight_ih_l0 as (3H, E) with gate order (r, z, n); here the
    weights are kept gate-fused and pre-transposed: w_ih (E, 3H), w_hh (H, 3H),
    w_out = linear.weight.T (H, T)."""
    ks = jax.random.split(key, 7)
    s = 0.1
    w_ih = s * jax.random.normal(ks[0], (embed_size, 3 * hidden_size), jnp.float32)
    w_hh = s * jax.random.normal(ks[1], (hidden_size, 3 * hidden_size), jnp.float32)
    b_ih = s * jax.random.normal(ks[2], (3 * hidden_size,), jnp.float32)
    b_hh = s * jax.random.normal(ks[3], (3 * hidden_size,), jnp.float32)
    w_out = s * jax.random.normal(ks[4], (hidden_size, token_size), jnp.float32)
    b_out = s * jax.random.normal(ks[5], (token_size,), jnp.float32)
    embedding = s * jax.random.normal(ks[6], (token_size, embed_size), jnp.float32)
    return dict(w_ih=w_ih, w_hh=w_hh, b_ih=b_ih, b_hh=b_hh,
                w_out=w_out, b_out=b_out, embedding=embedding)


def reference_forward(token_ids, hidden, params):
    """Pure-JAX f32 reference with identical semantics (for verification)."""
    x = params["embedding"][token_ids]                   # (S, B, E)
    w_ih, w_hh = params["w_ih"], params["w_hh"]
    b_ih, b_hh = params["b_ih"], params["b_hh"]
    H = w_hh.shape[0]

    def step(h, x_t):
        gi = x_t @ w_ih + b_ih                           # (B, 3H)
        gh = h @ w_hh + b_hh                             # (B, 3H)
        r = jax.nn.sigmoid(gi[:, 0:H] + gh[:, 0:H])
        z = jax.nn.sigmoid(gi[:, H:2 * H] + gh[:, H:2 * H])
        n = jnp.tanh(gi[:, 2 * H:] + r * gh[:, 2 * H:])
        h_new = (1.0 - z) * n + z * h
        return h_new, h_new

    h_last, hs = jax.lax.scan(step, hidden[0], x)
    out = jax.nn.sigmoid(hs @ params["w_out"] + params["b_out"])
    return out, h_last[None]


if __name__ == "__main__":
    token_size, embed_size, hidden_size = 16, 32, 32
    seq_len, batch = 8, 2

    key = jax.random.PRNGKey(0)
    k_tok, k_h, k_p = jax.random.split(key, 3)

    params = make_params(k_p, token_size, embed_size, hidden_size)
    token_ids = jax.random.randint(k_tok, (seq_len, batch), 0, token_size,
                                   dtype=jnp.int32)
    hidden0 = 0.1 * jax.random.normal(k_h, (1, batch, hidden_size), jnp.float32)

    out_ref, h_ref = reference_forward(token_ids, hidden0, params)

    # Default path: head fused into the scan kernel.
    fwd_fused = jax.jit(functools.partial(decoder_rnn_forward, params=params,
                                          fuse_head=True))
    out_f, h_f = fwd_fused(token_ids, hidden0)
    jax.block_until_ready((out_f, h_f))

    # Large-vocab fallback path: hoisted, N-tiled Linear+Sigmoid head.
    fwd_split = jax.jit(functools.partial(decoder_rnn_forward, params=params,
                                          fuse_head=False))
    out_s, h_s = fwd_split(token_ids, hidden0)
    jax.block_until_ready((out_s, h_s))

    for out, h_final in ((out_f, h_f), (out_s, h_s)):
        assert out.shape == (seq_len, batch, token_size)
        assert h_final.shape == (1, batch, hidden_size)
        # bf16 MXU operands (f32 accumulation) -> tolerance loosened vs f32.
        assert jnp.allclose(out, out_ref, atol=2e-2, rtol=2e-2)
        assert jnp.allclose(h_final, h_ref, atol=2e-2, rtol=2e-2)

    print("KERNEL_OK")
</pallas_src>

<mosaic_0001>
module attributes {stable_mosaic.version = 11 : i64} {
  func.func @_gru_scan_kernel(%arg0: i32, %arg1: memref<8x8x128xbf16, #tpu.memory_space<vmem>>, %arg2: memref<8x128xf32, #tpu.memory_space<vmem>>, %arg3: memref<128x384xbf16, #tpu.memory_space<vmem>>, %arg4: memref<1x384xf32, #tpu.memory_space<vmem>>, %arg5: memref<128x384xbf16, #tpu.memory_space<vmem>>, %arg6: memref<1x128xf32, #tpu.memory_space<vmem>>, %arg7: memref<128x128xbf16, #tpu.memory_space<vmem>>, %arg8: memref<1x128xf32, #tpu.memory_space<vmem>>, %arg9: memref<8x8x128xf32, #tpu.memory_space<vmem>>, %arg10: memref<8x128xf32, #tpu.memory_space<vmem>>, %arg11: memref<8x8x384xf32, #tpu.memory_space<vmem>>, %arg12: memref<8x8x128xf32, #tpu.memory_space<vmem>>, %arg13: memref<8x128xf32, #tpu.memory_space<vmem>>) attributes {dimension_semantics = [#tpu.dimension_semantics<arbitrary>], iteration_bounds = array<i64: 1>, scalar_prefetch = 0 : i64, scratch_operands = 3 : i64, tpu.core_type = #tpu.core_type<tc>, window_params = [{transform_indices = @transform_0, window_bounds = array<i64: 8, 8, 128>}, {pipeline_mode = #tpu.pipeline_mode<synchronous>, transform_indices = @transform_1, window_bounds = array<i64: 8, 128>}, {pipeline_mode = #tpu.pipeline_mode<synchronous>, transform_indices = @transform_2, window_bounds = array<i64: 128, 384>}, {pipeline_mode = #tpu.pipeline_mode<synchronous>, transform_indices = @transform_3, window_bounds = array<i64: 1, 384>}, {pipeline_mode = #tpu.pipeline_mode<synchronous>, transform_indices = @transform_4, window_bounds = array<i64: 128, 384>}, {pipeline_mode = #tpu.pipeline_mode<synchronous>, transform_indices = @transform_5, window_bounds = array<i64: 1, 128>}, {pipeline_mode = #tpu.pipeline_mode<synchronous>, transform_indices = @transform_6, window_bounds = array<i64: 128, 128>}, {pipeline_mode = #tpu.pipeline_mode<synchronous>, transform_indices = @transform_7, window_bounds = array<i64: 1, 128>}, {transform_indices = @transform_8, window_bounds = array<i64: 8, 8, 128>}, {pipeline_mode = #tpu.pipeline_mode<synchronous>, transform_indices = @transform_9, window_bounds = array<i64: 8, 128>}]} {
    %c0_i32 = arith.constant 0 : i32
    %0 = arith.cmpi eq, %arg0, %c0_i32 : i32
    %1 = arith.extui %0 : i1 to i32
    %c0_i32_0 = arith.constant 0 : i32
    %2 = arith.cmpi ne, %1, %c0_i32_0 : i32
    scf.if %2 {
      %c0_172 = arith.constant 0 : index
      %c0_173 = arith.constant 0 : index
      %438 = vector.load %arg2[%c0_172, %c0_173] : memref<8x128xf32, #tpu.memory_space<vmem>>, vector<8x128xf32>
      %c0_174 = arith.constant 0 : index
      %c0_175 = arith.constant 0 : index
      %439 = vector.load %arg13[%c0_174, %c0_175] : memref<8x128xf32, #tpu.memory_space<vmem>>, vector<8x128xf32>
      tpu.vector_store %arg13[%c0_174, %c0_175], %438 {strides = array<i32>} : memref<8x128xf32, #tpu.memory_space<vmem>>, vector<8x128xf32>,
    } else {
    }
    %c0 = arith.constant 0 : index
    %c0_1 = arith.constant 0 : index
    %c0_2 = arith.constant 0 : index
    %3 = vector.load %arg1[%c0, %c0_1, %c0_2] : memref<8x8x128xbf16, #tpu.memory_space<vmem>>, vector<8x8x128xbf16>
    %4 = vector.shape_cast %3 : vector<8x8x128xbf16> to vector<64x128xbf16>
    %c0_3 = arith.constant 0 : index
    %c0_4 = arith.constant 0 : index
    %5 = vector.load %arg3[%c0_3, %c0_4] : memref<128x384xbf16, #tpu.memory_space<vmem>>, vector<128x384xbf16>
    %cst = arith.constant dense<0.000000e+00> : vector<64x384xf32>
    %6 = tpu.matmul %4, %5, %cst {dimension_numbers = #tpu.dot_dimension_numbers<[1], [0], [0], [1], [0, 0, 1, 1], [], []>} : vector<64x128xbf16>, vector<128x384xbf16>, vector<64x384xf32> -> vector<64x384xf32>
    %c0_5 = arith.constant 0 : index
    %c0_6 = arith.constant 0 : index
    %7 = vector.load %arg4[%c0_5, %c0_6] : memref<1x384xf32, #tpu.memory_space<vmem>>, vector<1x384xf32>
    %8 = vector.broadcast %7 : vector<1x384xf32> to vector<64x384xf32>
    %9 = arith.addf %6, %8 : vector<64x384xf32>
    %10 = vector.shape_cast %9 : vector<64x384xf32> to vector<8x8x384xf32>
    %c0_7 = arith.constant 0 : index
    %c0_8 = arith.constant 0 : index
    %c0_9 = arith.constant 0 : index
    %11 = vector.load %arg11[%c0_7, %c0_8, %c0_9] : memref<8x8x384xf32, #tpu.memory_space<vmem>>, vector<8x8x384xf32>
    tpu.vector_store %arg11[%c0_7, %c0_8, %c0_9], %10 {strides = array<i32>} : memref<8x8x384xf32, #tpu.memory_space<vmem>>, vector<8x8x384xf32>,
    %c8_i32 = arith.constant 8 : i32
    %12 = arith.muli %arg0, %c8_i32 : i32
    %c0_i32_10 = arith.constant 0 : i32
    %c0_11 = arith.constant 0 : index
    %c0_12 = arith.constant 0 : index
    %13 = vector.load %arg13[%c0_11, %c0_12] : memref<8x128xf32, #tpu.memory_space<vmem>>, vector<8x128xf32>
    %14 = arith.index_cast %c0_i32_10 : i32 to index
    %c0_13 = arith.constant 0 : index
    %c0_14 = arith.constant 0 : index
    %15 = vector.load %arg11[%14, %c0_13, %c0_14] : memref<8x8x384xf32, #tpu.memory_space<vmem>>, vector<1x8x384xf32>
    %16 = vector.shape_cast %15 : vector<1x8x384xf32> to vector<8x384xf32>
    %17 = arith.truncf %13 : vector<8x128xf32> to vector<8x128xbf16>
    %c0_15 = arith.constant 0 : index
    %c0_16 = arith.constant 0 : index
    %18 = vector.load %arg5[%c0_15, %c0_16] : memref<128x384xbf16, #tpu.memory_space<vmem>>, vector<128x384xbf16>
    %cst_17 = arith.constant dense<0.000000e+00> : vector<8x384xf32>
    %19 = tpu.matmul %17, %18, %cst_17 {dimension_numbers = #tpu.dot_dimension_numbers<[1], [0], [0], [1], [0, 0, 1, 1], [], []>} : vector<8x128xbf16>, vector<128x384xbf16>, vector<8x384xf32> -> vector<8x384xf32>
    %20 = vector.extract_strided_slice %16 {offsets = [0, 0], sizes = [8, 128], strides = [1, 1]} : vector<8x384xf32> to vector<8x128xf32>
    %21 = vector.extract_strided_slice %19 {offsets = [0, 0], sizes = [8, 128], strides = [1, 1]} : vector<8x384xf32> to vector<8x128xf32>
    %22 = arith.addf %20, %21 : vector<8x128xf32>
    %23 = arith.negf %22 : vector<8x128xf32>
    %24 = math.exp %23 : vector<8x128xf32>
    %cst_18 = arith.constant 1.000000e+00 : f32
    %25 = vector.broadcast %cst_18 : f32 to vector<8x128xf32>
    %26 = arith.addf %25, %24 : vector<8x128xf32>
    %27 = arith.divf %25, %26 : vector<8x128xf32>
    %28 = vector.extract_strided_slice %16 {offsets = [0, 128], sizes = [8, 128], strides = [1, 1]} : vector<8x384xf32> to vector<8x128xf32>
    %29 = vector.extract_strided_slice %19 {offsets = [0, 128], sizes = [8, 128], strides = [1, 1]} : vector<8x384xf32> to vector<8x128xf32>
    %30 = arith.addf %28, %29 : vector<8x128xf32>
    %31 = arith.negf %30 : vector<8x128xf32>
    %32 = math.exp %31 : vector<8x128xf32>
    %cst_19 = arith.constant 1.000000e+00 : f32
    %33 = vector.broadcast %cst_19 : f32 to vector<8x128xf32>
    %34 = arith.addf %33, %32 : vector<8x128xf32>
    %35 = arith.divf %33, %34 : vector<8x128xf32>
    %36 = vector.extract_strided_slice %16 {offsets = [0, 256], sizes = [8, 128], strides = [1, 1]} : vector<8x384xf32> to vector<8x128xf32>
    %37 = vector.extract_strided_slice %19 {offsets = [0, 256], sizes = [8, 128], strides = [1, 1]} : vector<8x384xf32> to vector<8x128xf32>
    %c0_20 = arith.constant 0 : index
    %c0_21 = arith.constant 0 : index
    %38 = vector.load %arg6[%c0_20, %c0_21] : memref<1x128xf32, #tpu.memory_space<vmem>>, vector<1x128xf32>
    %39 = vector.broadcast %38 : vector<1x128xf32> to vector<8x128xf32>
    %40 = arith.addf %37, %39 : vector<8x128xf32>
    %41 = arith.mulf %27, %40 : vector<8x128xf32>
    %42 = arith.addf %36, %41 : vector<8x128xf32>
    %43 = math.tanh %42 : vector<8x128xf32>
    %cst_22 = arith.constant 1.000000e+00 : f32
    %44 = vector.broadcast %cst_22 : f32 to vector<8x128xf32>
    %45 = arith.subf %44, %35 : vector<8x128xf32>
    %46 = arith.mulf %45, %43 : vector<8x128xf32>
    %47 = arith.mulf %35, %13 : vector<8x128xf32>
    %48 = arith.addf %46, %47 : vector<8x128xf32>
    %49 = arith.addi %12, %c0_i32_10 : i32
    %c8_i32_23 = arith.constant 8 : i32
    %50 = arith.cmpi slt, %49, %c8_i32_23 : i32
    %51 = arith.extui %50 : i1 to i32
    %52 = arith.sitofp %51 : i32 to f32
    %53 = vector.broadcast %52 : f32 to vector<8x128xf32>
    %54 = arith.mulf %53, %48 : vector<8x128xf32>
    %cst_24 = arith.constant 1.000000e+00 : f32
    %55 = arith.subf %cst_24, %52 : f32
    %56 = vector.broadcast %55 : f32 to vector<8x128xf32>
    %57 = arith.mulf %56, %13 : vector<8x128xf32>
    %58 = arith.addf %54, %57 : vector<8x128xf32>
    %c0_25 = arith.constant 0 : index
    %c0_26 = arith.constant 0 : index
    %59 = vector.load %arg13[%c0_25, %c0_26] : memref<8x128xf32, #tpu.memory_space<vmem>>, vector<8x128xf32>
    tpu.vector_store %arg13[%c0_25, %c0_26], %58 {strides = array<i32>} : memref<8x128xf32, #tpu.memory_space<vmem>>, vector<8x128xf32>,
    %60 = arith.index_cast %c0_i32_10 : i32 to index
    %c0_27 = arith.constant 0 : index
    %c0_28 = arith.constant 0 : index
    %61 = vector.load %arg12[%60, %c0_27, %c0_28] : memref<8x8x128xf32, #tpu.memory_space<vmem>>, vector<1x8x128xf32>
    %62 = vector.shape_cast %61 : vector<1x8x128xf32> to vector<8x128xf32>
    %63 = vector.shape_cast %58 : vector<8x128xf32> to vector<1x8x128xf32>
    tpu.vector_store %arg12[%60, %c0_27, %c0_28], %63 {strides = array<i32>} : memref<8x8x128xf32, #tpu.memory_space<vmem>>, vector<1x8x128xf32>,
    %c1_i32 = arith.constant 1 : i32
    %c0_29 = arith.constant 0 : index
    %c0_30 = arith.constant 0 : index
    %64 = vector.load %arg13[%c0_29, %c0_30] : memref<8x128xf32, #tpu.memory_space<vmem>>, vector<8x128xf32>
    %65 = arith.index_cast %c1_i32 : i32 to index
    %c0_31 = arith.constant 0 : index
    %c0_32 = arith.constant 0 : index
    %66 = vector.load %arg11[%65, %c0_31, %c0_32] : memref<8x8x384xf32, #tpu.memory_space<vmem>>, vector<1x8x384xf32>
    %67 = vector.shape_cast %66 : vector<1x8x384xf32> to vector<8x384xf32>
    %68 = arith.truncf %64 : vector<8x128xf32> to vector<8x128xbf16>
    %c0_33 = arith.constant 0 : index
    %c0_34 = arith.constant 0 : index
    %69 = vector.load %arg5[%c0_33, %c0_34] : memref<128x384xbf16, #tpu.memory_space<vmem>>, vector<128x384xbf16>
    %cst_35 = arith.constant dense<0.000000e+00> : vector<8x384xf32>
    %70 = tpu.matmul %68, %69, %cst_35 {dimension_numbers = #tpu.dot_dimension_numbers<[1], [0], [0], [1], [0, 0, 1, 1], [], []>} : vector<8x128xbf16>, vector<128x384xbf16>, vector<8x384xf32> -> vector<8x384xf32>
    %71 = vector.extract_strided_slice %67 {offsets = [0, 0], sizes = [8, 128], strides = [1, 1]} : vector<8x384xf32> to vector<8x128xf32>
    %72 = vector.extract_strided_slice %70 {offsets = [0, 0], sizes = [8, 128], strides = [1, 1]} : vector<8x384xf32> to vector<8x128xf32>
    %73 = arith.addf %71, %72 : vector<8x128xf32>
    %74 = arith.negf %73 : vector<8x128xf32>
    %75 = math.exp %74 : vector<8x128xf32>
    %cst_36 = arith.constant 1.000000e+00 : f32
    %76 = vector.broadcast %cst_36 : f32 to vector<8x128xf32>
    %77 = arith.addf %76, %75 : vector<8x128xf32>
    %78 = arith.divf %76, %77 : vector<8x128xf32>
    %79 = vector.extract_strided_slice %67 {offsets = [0, 128], sizes = [8, 128], strides = [1, 1]} : vector<8x384xf32> to vector<8x128xf32>
    %80 = vector.extract_strided_slice %70 {offsets = [0, 128], sizes = [8, 128], strides = [1, 1]} : vector<8x384xf32> to vector<8x128xf32>
    %81 = arith.addf %79, %80 : vector<8x128xf32>
    %82 = arith.negf %81 : vector<8x128xf32>
    %83 = math.exp %82 : vector<8x128xf32>
    %cst_37 = arith.constant 1.000000e+00 : f32
    %84 = vector.broadcast %cst_37 : f32 to vector<8x128xf32>
    %85 = arith.addf %84, %83 : vector<8x128xf32>
    %86 = arith.divf %84, %85 : vector<8x128xf32>
    %87 = vector.extract_strided_slice %67 {offsets = [0, 256], sizes = [8, 128], strides = [1, 1]} : vector<8x384xf32> to vector<8x128xf32>
    %88 = vector.extract_strided_slice %70 {offsets = [0, 256], sizes = [8, 128], strides = [1, 1]} : vector<8x384xf32> to vector<8x128xf32>
    %c0_38 = arith.constant 0 : index
    %c0_39 = arith.constant 0 : index
    %89 = vector.load %arg6[%c0_38, %c0_39] : memref<1x128xf32, #tpu.memory_space<vmem>>, vector<1x128xf32>
    %90 = vector.broadcast %89 : vector<1x128xf32> to vector<8x128xf32>
    %91 = arith.addf %88, %90 : vector<8x128xf32>
    %92 = arith.mulf %78, %91 : vector<8x128xf32>
    %93 = arith.addf %87, %92 : vector<8x128xf32>
    %94 = math.tanh %93 : vector<8x128xf32>
    %cst_40 = arith.constant 1.000000e+00 : f32
    %95 = vector.broadcast %cst_40 : f32 to vector<8x128xf32>
    %96 = arith.subf %95, %86 : vector<8x128xf32>
    %97 = arith.mulf %96, %94 : vector<8x128xf32>
    %98 = arith.mulf %86, %64 : vector<8x128xf32>
    %99 = arith.addf %97, %98 : vector<8x128xf32>
    %100 = arith.addi %12, %c1_i32 : i32
    %c8_i32_41 = arith.constant 8 : i32
    %101 = arith.cmpi slt, %100, %c8_i32_41 : i32
    %102 = arith.extui %101 : i1 to i32
    %103 = arith.sitofp %102 : i32 to f32
    %104 = vector.broadcast %103 : f32 to vector<8x128xf32>
    %105 = arith.mulf %104, %99 : vector<8x128xf32>
    %cst_42 = arith.constant 1.000000e+00 : f32
    %106 = arith.subf %cst_42, %103 : f32
    %107 = vector.broadcast %106 : f32 to vector<8x128xf32>
    %108 = arith.mulf %107, %64 : vector<8x128xf32>
    %109 = arith.addf %105, %108 : vector<8x128xf32>
    %c0_43 = arith.constant 0 : index
    %c0_44 = arith.constant 0 : index
    %110 = vector.load %arg13[%c0_43, %c0_44] : memref<8x128xf32, #tpu.memory_space<vmem>>, vector<8x128xf32>
    tpu.vector_store %arg13[%c0_43, %c0_44], %109 {strides = array<i32>} : memref<8x128xf32, #tpu.memory_space<vmem>>, vector<8x128xf32>,
    %111 = arith.index_cast %c1_i32 : i32 to index
    %c0_45 = arith.constant 0 : index
    %c0_46 = arith.constant 0 : index
    %112 = vector.load %arg12[%111, %c0_45, %c0_46] : memref<8x8x128xf32, #tpu.memory_space<vmem>>, vector<1x8x128xf32>
    %113 = vector.shape_cast %112 : vector<1x8x128xf32> to vector<8x128xf32>
    %114 = vector.shape_cast %109 : vector<8x128xf32> to vector<1x8x128xf32>
    tpu.vector_store %arg12[%111, %c0_45, %c0_46], %114 {strides = array<i32>} : memref<8x8x128xf32, #tpu.memory_space<vmem>>, vector<1x8x128xf32>,
    %c2_i32 = arith.constant 2 : i32
    %c0_47 = arith.constant 0 : index
    %c0_48 = arith.constant 0 : index
    %115 = vector.load %arg13[%c0_47, %c0_48] : memref<8x128xf32, #tpu.memory_space<vmem>>, vector<8x128xf32>
    %116 = arith.index_cast %c2_i32 : i32 to index
    %c0_49 = arith.constant 0 : index
    %c0_50 = arith.constant 0 : index
    %117 = vector.load %arg11[%116, %c0_49, %c0_50] : memref<8x8x384xf32, #tpu.memory_space<vmem>>, vector<1x8x384xf32>
    %118 = vector.shape_cast %117 : vector<1x8x384xf32> to vector<8x384xf32>
    %119 = arith.truncf %115 : vector<8x128xf32> to vector<8x128xbf16>
    %c0_51 = arith.constant 0 : index
    %c0_52 = arith.constant 0 : index
    %120 = vector.load %arg5[%c0_51, %c0_52] : memref<128x384xbf16, #tpu.memory_space<vmem>>, vector<128x384xbf16>
    %cst_53 = arith.constant dense<0.000000e+00> : vector<8x384xf32>
    %121 = tpu.matmul %119, %120, %cst_53 {dimension_numbers = #tpu.dot_dimension_numbers<[1], [0], [0], [1], [0, 0, 1, 1], [], []>} : vector<8x128xbf16>, vector<128x384xbf16>, vector<8x384xf32> -> vector<8x384xf32>
    %122 = vector.extract_strided_slice %118 {offsets = [0, 0], sizes = [8, 128], strides = [1, 1]} : vector<8x384xf32> to vector<8x128xf32>
    %123 = vector.extract_strided_slice %121 {offsets = [0, 0], sizes = [8, 128], strides = [1, 1]} : vector<8x384xf32> to vector<8x128xf32>
    %124 = arith.addf %122, %123 : vector<8x128xf32>
    %125 = arith.negf %124 : vector<8x128xf32>
    %126 = math.exp %125 : vector<8x128xf32>
    %cst_54 = arith.constant 1.000000e+00 : f32
    %127 = vector.broadcast %cst_54 : f32 to vector<8x128xf32>
    %128 = arith.addf %127, %126 : vector<8x128xf32>
    %129 = arith.divf %127, %128 : vector<8x128xf32>
    %130 = vector.extract_strided_slice %118 {offsets = [0, 128], sizes = [8, 128], strides = [1, 1]} : vector<8x384xf32> to vector<8x128xf32>
    %131 = vector.extract_strided_slice %121 {offsets = [0, 128], sizes = [8, 128], strides = [1, 1]} : vector<8x384xf32> to vector<8x128xf32>
    %132 = arith.addf %130, %131 : vector<8x128xf32>
    %133 = arith.negf %132 : vector<8x128xf32>
    %134 = math.exp %133 : vector<8x128xf32>
    %cst_55 = arith.constant 1.000000e+00 : f32
    %135 = vector.broadcast %cst_55 : f32 to vector<8x128xf32>
    %136 = arith.addf %135, %134 : vector<8x128xf32>
    %137 = arith.divf %135, %136 : vector<8x128xf32>
    %138 = vector.extract_strided_slice %118 {offsets = [0, 256], sizes = [8, 128], strides = [1, 1]} : vector<8x384xf32> to vector<8x128xf32>
    %139 = vector.extract_strided_slice %121 {offsets = [0, 256], sizes = [8, 128], strides = [1, 1]} : vector<8x384xf32> to vector<8x128xf32>
    %c0_56 = arith.constant 0 : index
    %c0_57 = arith.constant 0 : index
    %140 = vector.load %arg6[%c0_56, %c0_57] : memref<1x128xf32, #tpu.memory_space<vmem>>, vector<1x128xf32>
    %141 = vector.broadcast %140 : vector<1x128xf32> to vector<8x128xf32>
    %142 = arith.addf %139, %141 : vector<8x128xf32>
    %143 = arith.mulf %129, %142 : vector<8x128xf32>
    %144 = arith.addf %138, %143 : vector<8x128xf32>
    %145 = math.tanh %144 : vector<8x128xf32>
    %cst_58 = arith.constant 1.000000e+00 : f32
    %146 = vector.broadcast %cst_58 : f32 to vector<8x128xf32>
    %147 = arith.subf %146, %137 : vector<8x128xf32>
    %148 = arith.mulf %147, %145 : vector<8x128xf32>
    %149 = arith.mulf %137, %115 : vector<8x128xf32>
    %150 = arith.addf %148, %149 : vector<8x128xf32>
    %151 = arith.addi %12, %c2_i32 : i32
    %c8_i32_59 = arith.constant 8 : i32
    %152 = arith.cmpi slt, %151, %c8_i32_59 : i32
    %153 = arith.extui %152 : i1 to i32
    %154 = arith.sitofp %153 : i32 to f32
    %155 = vector.broadcast %154 : f32 to vector<8x128xf32>
    %156 = arith.mulf %155, %150 : vector<8x128xf32>
    %cst_60 = arith.constant 1.000000e+00 : f32
    %157 = arith.subf %cst_60, %154 : f32
    %158 = vector.broadcast %157 : f32 to vector<8x128xf32>
    %159 = arith.mulf %158, %115 : vector<8x128xf32>
    %160 = arith.addf %156, %159 : vector<8x128xf32>
    %c0_61 = arith.constant 0 : index
    %c0_62 = arith.constant 0 : index
    %161 = vector.load %arg13[%c0_61, %c0_62] : memref<8x128xf32, #tpu.memory_space<vmem>>, vector<8x128xf32>
    tpu.vector_store %arg13[%c0_61, %c0_62], %160 {strides = array<i32>} : memref<8x128xf32, #tpu.memory_space<vmem>>, vector<8x128xf32>,
    %162 = arith.index_cast %c2_i32 : i32 to index
    %c0_63 = arith.constant 0 : index
    %c0_64 = arith.constant 0 : index
    %163 = vector.load %arg12[%162, %c0_63, %c0_64] : memref<8x8x128xf32, #tpu.memory_space<vmem>>, vector<1x8x128xf32>
    %164 = vector.shape_cast %163 : vector<1x8x128xf32> to vector<8x128xf32>
    %165 = vector.shape_cast %160 : vector<8x128xf32> to vector<1x8x128xf32>
    tpu.vector_store %arg12[%162, %c0_63, %c0_64], %165 {strides = array<i32>} : memref<8x8x128xf32, #tpu.memory_space<vmem>>, vector<1x8x128xf32>,
    %c3_i32 = arith.constant 3 : i32
    %c0_65 = arith.constant 0 : index
    %c0_66 = arith.constant 0 : index
    %166 = vector.load %arg13[%c0_65, %c0_66] : memref<8x128xf32, #tpu.memory_space<vmem>>, vector<8x128xf32>
    %167 = arith.index_cast %c3_i32 : i32 to index
    %c0_67 = arith.constant 0 : index
    %c0_68 = arith.constant 0 : index
    %168 = vector.load %arg11[%167, %c0_67, %c0_68] : memref<8x8x384xf32, #tpu.memory_space<vmem>>, vector<1x8x384xf32>
    %169 = vector.shape_cast %168 : vector<1x8x384xf32> to vector<8x384xf32>
    %170 = arith.truncf %166 : vector<8x128xf32> to vector<8x128xbf16>
    %c0_69 = arith.constant 0 : index
    %c0_70 = arith.constant 0 : index
    %171 = vector.load %arg5[%c0_69, %c0_70] : memref<128x384xbf16, #tpu.memory_space<vmem>>, vector<128x384xbf16>
    %cst_71 = arith.constant dense<0.000000e+00> : vector<8x384xf32>
    %172 = tpu.matmul %170, %171, %cst_71 {dimension_numbers = #tpu.dot_dimension_numbers<[1], [0], [0], [1], [0, 0, 1, 1], [], []>} : vector<8x128xbf16>, vector<128x384xbf16>, vector<8x384xf32> -> vector<8x384xf32>
    %173 = vector.extract_strided_slice %169 {offsets = [0, 0], sizes = [8, 128], strides = [1, 1]} : vector<8x384xf32> to vector<8x128xf32>
    %174 = vector.extract_strided_slice %172 {offsets = [0, 0], sizes = [8, 128], strides = [1, 1]} : vector<8x384xf32> to vector<8x128xf32>
    %175 = arith.addf %173, %174 : vector<8x128xf32>
    %176 = arith.negf %175 : vector<8x128xf32>
    %177 = math.exp %176 : vector<8x128xf32>
    %cst_72 = arith.constant 1.000000e+00 : f32
    %178 = vector.broadcast %cst_72 : f32 to vector<8x128xf32>
    %179 = arith.addf %178, %177 : vector<8x128xf32>
    %180 = arith.divf %178, %179 : vector<8x128xf32>
    %181 = vector.extract_strided_slice %169 {offsets = [0, 128], sizes = [8, 128], strides = [1, 1]} : vector<8x384xf32> to vector<8x128xf32>
    %182 = vector.extract_strided_slice %172 {offsets = [0, 128], sizes = [8, 128], strides = [1, 1]} : vector<8x384xf32> to vector<8x128xf32>
    %183 = arith.addf %181, %182 : vector<8x128xf32>
    %184 = arith.negf %183 : vector<8x128xf32>
    %185 = math.exp %184 : vector<8x128xf32>
    %cst_73 = arith.constant 1.000000e+00 : f32
    %186 = vector.broadcast %cst_73 : f32 to vector<8x128xf32>
    %187 = arith.addf %186, %185 : vector<8x128xf32>
    %188 = arith.divf %186, %187 : vector<8x128xf32>
    %189 = vector.extract_strided_slice %169 {offsets = [0, 256], sizes = [8, 128], strides = [1, 1]} : vector<8x384xf32> to vector<8x128xf32>
    %190 = vector.extract_strided_slice %172 {offsets = [0, 256], sizes = [8, 128], strides = [1, 1]} : vector<8x384xf32> to vector<8x128xf32>
    %c0_74 = arith.constant 0 : index
    %c0_75 = arith.constant 0 : index
    %191 = vector.load %arg6[%c0_74, %c0_75] : memref<1x128xf32, #tpu.memory_space<vmem>>, vector<1x128xf32>
    %192 = vector.broadcast %191 : vector<1x128xf32> to vector<8x128xf32>
    %193 = arith.addf %190, %192 : vector<8x128xf32>
    %194 = arith.mulf %180, %193 : vector<8x128xf32>
    %195 = arith.addf %189, %194 : vector<8x128xf32>
    %196 = math.tanh %195 : vector<8x128xf32>
    %cst_76 = arith.constant 1.000000e+00 : f32
    %197 = vector.broadcast %cst_76 : f32 to vector<8x128xf32>
    %198 = arith.subf %197, %188 : vector<8x128xf32>
    %199 = arith.mulf %198, %196 : vector<8x128xf32>
    %200 = arith.mulf %188, %166 : vector<8x128xf32>
    %201 = arith.addf %199, %200 : vector<8x128xf32>
    %202 = arith.addi %12, %c3_i32 : i32
    %c8_i32_77 = arith.constant 8 : i32
    %203 = arith.cmpi slt, %202, %c8_i32_77 : i32
    %204 = arith.extui %203 : i1 to i32
    %205 = arith.sitofp %204 : i32 to f32
    %206 = vector.broadcast %205 : f32 to vector<8x128xf32>
    %207 = arith.mulf %206, %201 : vector<8x128xf32>
    %cst_78 = arith.constant 1.000000e+00 : f32
    %208 = arith.subf %cst_78, %205 : f32
    %209 = vector.broadcast %208 : f32 to vector<8x128xf32>
    %210 = arith.mulf %209, %166 : vector<8x128xf32>
    %211 = arith.addf %207, %210 : vector<8x128xf32>
    %c0_79 = arith.constant 0 : index
    %c0_80 = arith.constant 0 : index
    %212 = vector.load %arg13[%c0_79, %c0_80] : memref<8x128xf32, #tpu.memory_space<vmem>>, vector<8x128xf32>
    tpu.vector_store %arg13[%c0_79, %c0_80], %211 {strides = array<i32>} : memref<8x128xf32, #tpu.memory_space<vmem>>, vector<8x128xf32>,
    %213 = arith.index_cast %c3_i32 : i32 to index
    %c0_81 = arith.constant 0 : index
    %c0_82 = arith.constant 0 : index
    %214 = vector.load %arg12[%213, %c0_81, %c0_82] : memref<8x8x128xf32, #tpu.memory_space<vmem>>, vector<1x8x128xf32>
    %215 = vector.shape_cast %214 : vector<1x8x128xf32> to vector<8x128xf32>
    %216 = vector.shape_cast %211 : vector<8x128xf32> to vector<1x8x128xf32>
    tpu.vector_store %arg12[%213, %c0_81, %c0_82], %216 {strides = array<i32>} : memref<8x8x128xf32, #tpu.memory_space<vmem>>, vector<1x8x128xf32>,
    %c4_i32 = arith.constant 4 : i32
    %c0_83 = arith.constant 0 : index
    %c0_84 = arith.constant 0 : index
    %217 = vector.load %arg13[%c0_83, %c0_84] : memref<8x128xf32, #tpu.memory_space<vmem>>, vector<8x128xf32>
    %218 = arith.index_cast %c4_i32 : i32 to index
    %c0_85 = arith.constant 0 : index
    %c0_86 = arith.constant 0 : index
    %219 = vector.load %arg11[%218, %c0_85, %c0_86] : memref<8x8x384xf32, #tpu.memory_space<vmem>>, vector<1x8x384xf32>
    %220 = vector.shape_cast %219 : vector<1x8x384xf32> to vector<8x384xf32>
    %221 = arith.truncf %217 : vector<8x128xf32> to vector<8x128xbf16>
    %c0_87 = arith.constant 0 : index
    %c0_88 = arith.constant 0 : index
    %222 = vector.load %arg5[%c0_87, %c0_88] : memref<128x384xbf16, #tpu.memory_space<vmem>>, vector<128x384xbf16>
    %cst_89 = arith.constant dense<0.000000e+00> : vector<8x384xf32>
    %223 = tpu.matmul %221, %222, %cst_89 {dimension_numbers = #tpu.dot_dimension_numbers<[1], [0], [0], [1], [0, 0, 1, 1], [], []>} : vector<8x128xbf16>, vector<128x384xbf16>, vector<8x384xf32> -> vector<8x384xf32>
    %224 = vector.extract_strided_slice %220 {offsets = [0, 0], sizes = [8, 128], strides = [1, 1]} : vector<8x384xf32> to vector<8x128xf32>
    %225 = vector.extract_strided_slice %223 {offsets = [0, 0], sizes = [8, 128], strides = [1, 1]} : vector<8x384xf32> to vector<8x128xf32>
    %226 = arith.addf %224, %225 : vector<8x128xf32>
    %227 = arith.negf %226 : vector<8x128xf32>
    %228 = math.exp %227 : vector<8x128xf32>
    %cst_90 = arith.constant 1.000000e+00 : f32
    %229 = vector.broadcast %cst_90 : f32 to vector<8x128xf32>
    %230 = arith.addf %229, %228 : vector<8x128xf32>
    %231 = arith.divf %229, %230 : vector<8x128xf32>
    %232 = vector.extract_strided_slice %220 {offsets = [0, 128], sizes = [8, 128], strides = [1, 1]} : vector<8x384xf32> to vector<8x128xf32>
    %233 = vector.extract_strided_slice %223 {offsets = [0, 128], sizes = [8, 128], strides = [1, 1]} : vector<8x384xf32> to vector<8x128xf32>
    %234 = arith.addf %232, %233 : vector<8x128xf32>
    %235 = arith.negf %234 : vector<8x128xf32>
    %236 = math.exp %235 : vector<8x128xf32>
    %cst_91 = arith.constant 1.000000e+00 : f32
    %237 = vector.broadcast %cst_91 : f32 to vector<8x128xf32>
    %238 = arith.addf %237, %236 : vector<8x128xf32>
    %239 = arith.divf %237, %238 : vector<8x128xf32>
    %240 = vector.extract_strided_slice %220 {offsets = [0, 256], sizes = [8, 128], strides = [1, 1]} : vector<8x384xf32> to vector<8x128xf32>
    %241 = vector.extract_strided_slice %223 {offsets = [0, 256], sizes = [8, 128], strides = [1, 1]} : vector<8x384xf32> to vector<8x128xf32>
    %c0_92 = arith.constant 0 : index
    %c0_93 = arith.constant 0 : index
    %242 = vector.load %arg6[%c0_92, %c0_93] : memref<1x128xf32, #tpu.memory_space<vmem>>, vector<1x128xf32>
    %243 = vector.broadcast %242 : vector<1x128xf32> to vector<8x128xf32>
    %244 = arith.addf %241, %243 : vector<8x128xf32>
    %245 = arith.mulf %231, %244 : vector<8x128xf32>
    %246 = arith.addf %240, %245 : vector<8x128xf32>
    %247 = math.tanh %246 : vector<8x128xf32>
    %cst_94 = arith.constant 1.000000e+00 : f32
    %248 = vector.broadcast %cst_94 : f32 to vector<8x128xf32>
    %249 = arith.subf %248, %239 : vector<8x128xf32>
    %250 = arith.mulf %249, %247 : vector<8x128xf32>
    %251 = arith.mulf %239, %217 : vector<8x128xf32>
    %252 = arith.addf %250, %251 : vector<8x128xf32>
    %253 = arith.addi %12, %c4_i32 : i32
    %c8_i32_95 = arith.constant 8 : i32
    %254 = arith.cmpi slt, %253, %c8_i32_95 : i32
    %255 = arith.extui %254 : i1 to i32
    %256 = arith.sitofp %255 : i32 to f32
    %257 = vector.broadcast %256 : f32 to vector<8x128xf32>
    %258 = arith.mulf %257, %252 : vector<8x128xf32>
    %cst_96 = arith.constant 1.000000e+00 : f32
    %259 = arith.subf %cst_96, %256 : f32
    %260 = vector.broadcast %259 : f32 to vector<8x128xf32>
    %261 = arith.mulf %260, %217 : vector<8x128xf32>
    %262 = arith.addf %258, %261 : vector<8x128xf32>
    %c0_97 = arith.constant 0 : index
    %c0_98 = arith.constant 0 : index
    %263 = vector.load %arg13[%c0_97, %c0_98] : memref<8x128xf32, #tpu.memory_space<vmem>>, vector<8x128xf32>
    tpu.vector_store %arg13[%c0_97, %c0_98], %262 {strides = array<i32>} : memref<8x128xf32, #tpu.memory_space<vmem>>, vector<8x128xf32>,
    %264 = arith.index_cast %c4_i32 : i32 to index
    %c0_99 = arith.constant 0 : index
    %c0_100 = arith.constant 0 : index
    %265 = vector.load %arg12[%264, %c0_99, %c0_100] : memref<8x8x128xf32, #tpu.memory_space<vmem>>, vector<1x8x128xf32>
    %266 = vector.shape_cast %265 : vector<1x8x128xf32> to vector<8x128xf32>
    %267 = vector.shape_cast %262 : vector<8x128xf32> to vector<1x8x128xf32>
    tpu.vector_store %arg12[%264, %c0_99, %c0_100], %267 {strides = array<i32>} : memref<8x8x128xf32, #tpu.memory_space<vmem>>, vector<1x8x128xf32>,
    %c5_i32 = arith.constant 5 : i32
    %c0_101 = arith.constant 0 : index
    %c0_102 = arith.constant 0 : index
    %268 = vector.load %arg13[%c0_101, %c0_102] : memref<8x128xf32, #tpu.memory_space<vmem>>, vector<8x128xf32>
    %269 = arith.index_cast %c5_i32 : i32 to index
    %c0_103 = arith.constant 0 : index
    %c0_104 = arith.constant 0 : index
    %270 = vector.load %arg11[%269, %c0_103, %c0_104] : memref<8x8x384xf32, #tpu.memory_space<vmem>>, vector<1x8x384xf32>
    %271 = vector.shape_cast %270 : vector<1x8x384xf32> to vector<8x384xf32>
    %272 = arith.truncf %268 : vector<8x128xf32> to vector<8x128xbf16>
    %c0_105 = arith.constant 0 : index
    %c0_106 = arith.constant 0 : index
    %273 = vector.load %arg5[%c0_105, %c0_106] : memref<128x384xbf16, #tpu.memory_space<vmem>>, vector<128x384xbf16>
    %cst_107 = arith.constant dense<0.000000e+00> : vector<8x384xf32>
    %274 = tpu.matmul %272, %273, %cst_107 {dimension_numbers = #tpu.dot_dimension_numbers<[1], [0], [0], [1], [0, 0, 1, 1], [], []>} : vector<8x128xbf16>, vector<128x384xbf16>, vector<8x384xf32> -> vector<8x384xf32>
    %275 = vector.extract_strided_slice %271 {offsets = [0, 0], sizes = [8, 128], strides = [1, 1]} : vector<8x384xf32> to vector<8x128xf32>
    %276 = vector.extract_strided_slice %274 {offsets = [0, 0], sizes = [8, 128], strides = [1, 1]} : vector<8x384xf32> to vector<8x128xf32>
    %277 = arith.addf %275, %276 : vector<8x128xf32>
    %278 = arith.negf %277 : vector<8x128xf32>
    %279 = math.exp %278 : vector<8x128xf32>
    %cst_108 = arith.constant 1.000000e+00 : f32
    %280 = vector.broadcast %cst_108 : f32 to vector<8x128xf32>
    %281 = arith.addf %280, %279 : vector<8x128xf32>
    %282 = arith.divf %280, %281 : vector<8x128xf32>
    %283 = vector.extract_strided_slice %271 {offsets = [0, 128], sizes = [8, 128], strides = [1, 1]} : vector<8x384xf32> to vector<8x128xf32>
    %284 = vector.extract_strided_slice %274 {offsets = [0, 128], sizes = [8, 128], strides = [1, 1]} : vector<8x384xf32> to vector<8x128xf32>
    %285 = arith.addf %283, %284 : vector<8x128xf32>
    %286 = arith.negf %285 : vector<8x128xf32>
    %287 = math.exp %286 : vector<8x128xf32>
    %cst_109 = arith.constant 1.000000e+00 : f32
    %288 = vector.broadcast %cst_109 : f32 to vector<8x128xf32>
    %289 = arith.addf %288, %287 : vector<8x128xf32>
    %290 = arith.divf %288, %289 : vector<8x128xf32>
    %291 = vector.extract_strided_slice %271 {offsets = [0, 256], sizes = [8, 128], strides = [1, 1]} : vector<8x384xf32> to vector<8x128xf32>
    %292 = vector.extract_strided_slice %274 {offsets = [0, 256], sizes = [8, 128], strides = [1, 1]} : vector<8x384xf32> to vector<8x128xf32>
    %c0_110 = arith.constant 0 : index
    %c0_111 = arith.constant 0 : index
    %293 = vector.load %arg6[%c0_110, %c0_111] : memref<1x128xf32, #tpu.memory_space<vmem>>, vector<1x128xf32>
    %294 = vector.broadcast %293 : vector<1x128xf32> to vector<8x128xf32>
    %295 = arith.addf %292, %294 : vector<8x128xf32>
    %296 = arith.mulf %282, %295 : vector<8x128xf32>
    %297 = arith.addf %291, %296 : vector<8x128xf32>
    %298 = math.tanh %297 : vector<8x128xf32>
    %cst_112 = arith.constant 1.000000e+00 : f32
    %299 = vector.broadcast %cst_112 : f32 to vector<8x128xf32>
    %300 = arith.subf %299, %290 : vector<8x128xf32>
    %301 = arith.mulf %300, %298 : vector<8x128xf32>
    %302 = arith.mulf %290, %268 : vector<8x128xf32>
    %303 = arith.addf %301, %302 : vector<8x128xf32>
    %304 = arith.addi %12, %c5_i32 : i32
    %c8_i32_113 = arith.constant 8 : i32
    %305 = arith.cmpi slt, %304, %c8_i32_113 : i32
    %306 = arith.extui %305 : i1 to i32
    %307 = arith.sitofp %306 : i32 to f32
    %308 = vector.broadcast %307 : f32 to vector<8x128xf32>
    %309 = arith.mulf %308, %303 : vector<8x128xf32>
    %cst_114 = arith.constant 1.000000e+00 : f32
    %310 = arith.subf %cst_114, %307 : f32
    %311 = vector.broadcast %310 : f32 to vector<8x128xf32>
    %312 = arith.mulf %311, %268 : vector<8x128xf32>
    %313 = arith.addf %309, %312 : vector<8x128xf32>
    %c0_115 = arith.constant 0 : index
    %c0_116 = arith.constant 0 : index
    %314 = vector.load %arg13[%c0_115, %c0_116] : memref<8x128xf32, #tpu.memory_space<vmem>>, vector<8x128xf32>
    tpu.vector_store %arg13[%c0_115, %c0_116], %313 {strides = array<i32>} : memref<8x128xf32, #tpu.memory_space<vmem>>, vector<8x128xf32>,
    %315 = arith.index_cast %c5_i32 : i32 to index
    %c0_117 = arith.constant 0 : index
    %c0_118 = arith.constant 0 : index
    %316 = vector.load %arg12[%315, %c0_117, %c0_118] : memref<8x8x128xf32, #tpu.memory_space<vmem>>, vector<1x8x128xf32>
    %317 = vector.shape_cast %316 : vector<1x8x128xf32> to vector<8x128xf32>
    %318 = vector.shape_cast %313 : vector<8x128xf32> to vector<1x8x128xf32>
    tpu.vector_store %arg12[%315, %c0_117, %c0_118], %318 {strides = array<i32>} : memref<8x8x128xf32, #tpu.memory_space<vmem>>, vector<1x8x128xf32>,
    %c6_i32 = arith.constant 6 : i32
    %c0_119 = arith.constant 0 : index
    %c0_120 = arith.constant 0 : index
    %319 = vector.load %arg13[%c0_119, %c0_120] : memref<8x128xf32, #tpu.memory_space<vmem>>, vector<8x128xf32>
    %320 = arith.index_cast %c6_i32 : i32 to index
    %c0_121 = arith.constant 0 : index
    %c0_122 = arith.constant 0 : index
    %321 = vector.load %arg11[%320, %c0_121, %c0_122] : memref<8x8x384xf32, #tpu.memory_space<vmem>>, vector<1x8x384xf32>
    %322 = vector.shape_cast %321 : vector<1x8x384xf32> to vector<8x384xf32>
    %323 = arith.truncf %319 : vector<8x128xf32> to vector<8x128xbf16>
    %c0_123 = arith.constant 0 : index
    %c0_124 = arith.constant 0 : index
    %324 = vector.load %arg5[%c0_123, %c0_124] : memref<128x384xbf16, #tpu.memory_space<vmem>>, vector<128x384xbf16>
    %cst_125 = arith.constant dense<0.000000e+00> : vector<8x384xf32>
    %325 = tpu.matmul %323, %324, %cst_125 {dimension_numbers = #tpu.dot_dimension_numbers<[1], [0], [0], [1], [0, 0, 1, 1], [], []>} : vector<8x128xbf16>, vector<128x384xbf16>, vector<8x384xf32> -> vector<8x384xf32>
    %326 = vector.extract_strided_slice %322 {offsets = [0, 0], sizes = [8, 128], strides = [1, 1]} : vector<8x384xf32> to vector<8x128xf32>
    %327 = vector.extract_strided_slice %325 {offsets = [0, 0], sizes = [8, 128], strides = [1, 1]} : vector<8x384xf32> to vector<8x128xf32>
    %328 = arith.addf %326, %327 : vector<8x128xf32>
    %329 = arith.negf %328 : vector<8x128xf32>
    %330 = math.exp %329 : vector<8x128xf32>
    %cst_126 = arith.constant 1.000000e+00 : f32
    %331 = vector.broadcast %cst_126 : f32 to vector<8x128xf32>
    %332 = arith.addf %331, %330 : vector<8x128xf32>
    %333 = arith.divf %331, %332 : vector<8x128xf32>
    %334 = vector.extract_strided_slice %322 {offsets = [0, 128], sizes = [8, 128], strides = [1, 1]} : vector<8x384xf32> to vector<8x128xf32>
    %335 = vector.extract_strided_slice %325 {offsets = [0, 128], sizes = [8, 128], strides = [1, 1]} : vector<8x384xf32> to vector<8x128xf32>
    %336 = arith.addf %334, %335 : vector<8x128xf32>
    %337 = arith.negf %336 : vector<8x128xf32>
    %338 = math.exp %337 : vector<8x128xf32>
    %cst_127 = arith.constant 1.000000e+00 : f32
    %339 = vector.broadcast %cst_127 : f32 to vector<8x128xf32>
    %340 = arith.addf %339, %338 : vector<8x128xf32>
    %341 = arith.divf %339, %340 : vector<8x128xf32>
    %342 = vector.extract_strided_slice %322 {offsets = [0, 256], sizes = [8, 128], strides = [1, 1]} : vector<8x384xf32> to vector<8x128xf32>
    %343 = vector.extract_strided_slice %325 {offsets = [0, 256], sizes = [8, 128], strides = [1, 1]} : vector<8x384xf32> to vector<8x128xf32>
    %c0_128 = arith.constant 0 : index
    %c0_129 = arith.constant 0 : index
    %344 = vector.load %arg6[%c0_128, %c0_129] : memref<1x128xf32, #tpu.memory_space<vmem>>, vector<1x128xf32>
    %345 = vector.broadcast %344 : vector<1x128xf32> to vector<8x128xf32>
    %346 = arith.addf %343, %345 : vector<8x128xf32>
    %347 = arith.mulf %333, %346 : vector<8x128xf32>
    %348 = arith.addf %342, %347 : vector<8x128xf32>
    %349 = math.tanh %348 : vector<8x128xf32>
    %cst_130 = arith.constant 1.000000e+00 : f32
    %350 = vector.broadcast %cst_130 : f32 to vector<8x128xf32>
    %351 = arith.subf %350, %341 : vector<8x128xf32>
    %352 = arith.mulf %351, %349 : vector<8x128xf32>
    %353 = arith.mulf %341, %319 : vector<8x128xf32>
    %354 = arith.addf %352, %353 : vector<8x128xf32>
    %355 = arith.addi %12, %c6_i32 : i32
    %c8_i32_131 = arith.constant 8 : i32
    %356 = arith.cmpi slt, %355, %c8_i32_131 : i32
    %357 = arith.extui %356 : i1 to i32
    %358 = arith.sitofp %357 : i32 to f32
    %359 = vector.broadcast %358 : f32 to vector<8x128xf32>
    %360 = arith.mulf %359, %354 : vector<8x128xf32>
    %cst_132 = arith.constant 1.000000e+00 : f32
    %361 = arith.subf %cst_132, %358 : f32
    %362 = vector.broadcast %361 : f32 to vector<8x128xf32>
    %363 = arith.mulf %362, %319 : vector<8x128xf32>
    %364 = arith.addf %360, %363 : vector<8x128xf32>
    %c0_133 = arith.constant 0 : index
    %c0_134 = arith.constant 0 : index
    %365 = vector.load %arg13[%c0_133, %c0_134] : memref<8x128xf32, #tpu.memory_space<vmem>>, vector<8x128xf32>
    tpu.vector_store %arg13[%c0_133, %c0_134], %364 {strides = array<i32>} : memref<8x128xf32, #tpu.memory_space<vmem>>, vector<8x128xf32>,
    %366 = arith.index_cast %c6_i32 : i32 to index
    %c0_135 = arith.constant 0 : index
    %c0_136 = arith.constant 0 : index
    %367 = vector.load %arg12[%366, %c0_135, %c0_136] : memref<8x8x128xf32, #tpu.memory_space<vmem>>, vector<1x8x128xf32>
    %368 = vector.shape_cast %367 : vector<1x8x128xf32> to vector<8x128xf32>
    %369 = vector.shape_cast %364 : vector<8x128xf32> to vector<1x8x128xf32>
    tpu.vector_store %arg12[%366, %c0_135, %c0_136], %369 {strides = array<i32>} : memref<8x8x128xf32, #tpu.memory_space<vmem>>, vector<1x8x128xf32>,
    %c7_i32 = arith.constant 7 : i32
    %c0_137 = arith.constant 0 : index
    %c0_138 = arith.constant 0 : index
    %370 = vector.load %arg13[%c0_137, %c0_138] : memref<8x128xf32, #tpu.memory_space<vmem>>, vector<8x128xf32>
    %371 = arith.index_cast %c7_i32 : i32 to index
    %c0_139 = arith.constant 0 : index
    %c0_140 = arith.constant 0 : index
    %372 = vector.load %arg11[%371, %c0_139, %c0_140] : memref<8x8x384xf32, #tpu.memory_space<vmem>>, vector<1x8x384xf32>
    %373 = vector.shape_cast %372 : vector<1x8x384xf32> to vector<8x384xf32>
    %374 = arith.truncf %370 : vector<8x128xf32> to vector<8x128xbf16>
    %c0_141 = arith.constant 0 : index
    %c0_142 = arith.constant 0 : index
    %375 = vector.load %arg5[%c0_141, %c0_142] : memref<128x384xbf16, #tpu.memory_space<vmem>>, vector<128x384xbf16>
    %cst_143 = arith.constant dense<0.000000e+00> : vector<8x384xf32>
    %376 = tpu.matmul %374, %375, %cst_143 {dimension_numbers = #tpu.dot_dimension_numbers<[1], [0], [0], [1], [0, 0, 1, 1], [], []>} : vector<8x128xbf16>, vector<128x384xbf16>, vector<8x384xf32> -> vector<8x384xf32>
    %377 = vector.extract_strided_slice %373 {offsets = [0, 0], sizes = [8, 128], strides = [1, 1]} : vector<8x384xf32> to vector<8x128xf32>
    %378 = vector.extract_strided_slice %376 {offsets = [0, 0], sizes = [8, 128], strides = [1, 1]} : vector<8x384xf32> to vector<8x128xf32>
    %379 = arith.addf %377, %378 : vector<8x128xf32>
    %380 = arith.negf %379 : vector<8x128xf32>
    %381 = math.exp %380 : vector<8x128xf32>
    %cst_144 = arith.constant 1.000000e+00 : f32
    %382 = vector.broadcast %cst_144 : f32 to vector<8x128xf32>
    %383 = arith.addf %382, %381 : vector<8x128xf32>
    %384 = arith.divf %382, %383 : vector<8x128xf32>
    %385 = vector.extract_strided_slice %373 {offsets = [0, 128], sizes = [8, 128], strides = [1, 1]} : vector<8x384xf32> to vector<8x128xf32>
    %386 = vector.extract_strided_slice %376 {offsets = [0, 128], sizes = [8, 128], strides = [1, 1]} : vector<8x384xf32> to vector<8x128xf32>
    %387 = arith.addf %385, %386 : vector<8x128xf32>
    %388 = arith.negf %387 : vector<8x128xf32>
    %389 = math.exp %388 : vector<8x128xf32>
    %cst_145 = arith.constant 1.000000e+00 : f32
    %390 = vector.broadcast %cst_145 : f32 to vector<8x128xf32>
    %391 = arith.addf %390, %389 : vector<8x128xf32>
    %392 = arith.divf %390, %391 : vector<8x128xf32>
    %393 = vector.extract_strided_slice %373 {offsets = [0, 256], sizes = [8, 128], strides = [1, 1]} : vector<8x384xf32> to vector<8x128xf32>
    %394 = vector.extract_strided_slice %376 {offsets = [0, 256], sizes = [8, 128], strides = [1, 1]} : vector<8x384xf32> to vector<8x128xf32>
    %c0_146 = arith.constant 0 : index
    %c0_147 = arith.constant 0 : index
    %395 = vector.load %arg6[%c0_146, %c0_147] : memref<1x128xf32, #tpu.memory_space<vmem>>, vector<1x128xf32>
    %396 = vector.broadcast %395 : vector<1x128xf32> to vector<8x128xf32>
    %397 = arith.addf %394, %396 : vector<8x128xf32>
    %398 = arith.mulf %384, %397 : vector<8x128xf32>
    %399 = arith.addf %393, %398 : vector<8x128xf32>
    %400 = math.tanh %399 : vector<8x128xf32>
    %cst_148 = arith.constant 1.000000e+00 : f32
    %401 = vector.broadcast %cst_148 : f32 to vector<8x128xf32>
    %402 = arith.subf %401, %392 : vector<8x128xf32>
    %403 = arith.mulf %402, %400 : vector<8x128xf32>
    %404 = arith.mulf %392, %370 : vector<8x128xf32>
    %405 = arith.addf %403, %404 : vector<8x128xf32>
    %406 = arith.addi %12, %c7_i32 : i32
    %c8_i32_149 = arith.constant 8 : i32
    %407 = arith.cmpi slt, %406, %c8_i32_149 : i32
    %408 = arith.extui %407 : i1 to i32
    %409 = arith.sitofp %408 : i32 to f32
    %410 = vector.broadcast %409 : f32 to vector<8x128xf32>
    %411 = arith.mulf %410, %405 : vector<8x128xf32>
    %cst_150 = arith.constant 1.000000e+00 : f32
    %412 = arith.subf %cst_150, %409 : f32
    %413 = vector.broadcast %412 : f32 to vector<8x128xf32>
    %414 = arith.mulf %413, %370 : vector<8x128xf32>
    %415 = arith.addf %411, %414 : vector<8x128xf32>
    %c0_151 = arith.constant 0 : index
    %c0_152 = arith.constant 0 : index
    %416 = vector.load %arg13[%c0_151, %c0_152] : memref<8x128xf32, #tpu.memory_space<vmem>>, vector<8x128xf32>
    tpu.vector_store %arg13[%c0_151, %c0_152], %415 {strides = array<i32>} : memref<8x128xf32, #tpu.memory_space<vmem>>, vector<8x128xf32>,
    %417 = arith.index_cast %c7_i32 : i32 to index
    %c0_153 = arith.constant 0 : index
    %c0_154 = arith.constant 0 : index
    %418 = vector.load %arg12[%417, %c0_153, %c0_154] : memref<8x8x128xf32, #tpu.memory_space<vmem>>, vector<1x8x128xf32>
    %419 = vector.shape_cast %418 : vector<1x8x128xf32> to vector<8x128xf32>
    %420 = vector.shape_cast %415 : vector<8x128xf32> to vector<1x8x128xf32>
    tpu.vector_store %arg12[%417, %c0_153, %c0_154], %420 {strides = array<i32>} : memref<8x8x128xf32, #tpu.memory_space<vmem>>, vector<1x8x128xf32>,
    %c8_i32_155 = arith.constant 8 : i32
    %c0_156 = arith.constant 0 : index
    %c0_157 = arith.constant 0 : index
    %421 = vector.load %arg13[%c0_156, %c0_157] : memref<8x128xf32, #tpu.memory_space<vmem>>, vector<8x128xf32>
    %c0_158 = arith.constant 0 : index
    %c0_159 = arith.constant 0 : index
    %422 = vector.load %arg10[%c0_158, %c0_159] : memref<8x128xf32, #tpu.memory_space<vmem>>, vector<8x128xf32>
    tpu.vector_store %arg10[%c0_158, %c0_159], %421 {strides = array<i32>} : memref<8x128xf32, #tpu.memory_space<vmem>>, vector<8x128xf32>,
    %c0_160 = arith.constant 0 : index
    %c0_161 = arith.constant 0 : index
    %c0_162 = arith.constant 0 : index
    %423 = vector.load %arg12[%c0_160, %c0_161, %c0_162] : memref<8x8x128xf32, #tpu.memory_space<vmem>>, vector<8x8x128xf32>
    %424 = vector.shape_cast %423 : vector<8x8x128xf32> to vector<64x128xf32>
    %425 = arith.truncf %424 : vector<64x128xf32> to vector<64x128xbf16>
    %c0_163 = arith.constant 0 : index
    %c0_164 = arith.constant 0 : index
    %426 = vector.load %arg7[%c0_163, %c0_164] : memref<128x128xbf16, #tpu.memory_space<vmem>>, vector<128x128xbf16>
    %cst_165 = arith.constant dense<0.000000e+00> : vector<64x128xf32>
    %427 = tpu.matmul %425, %426, %cst_165 {dimension_numbers = #tpu.dot_dimension_numbers<[1], [0], [0], [1], [0, 0, 1, 1], [], []>} : vector<64x128xbf16>, vector<128x128xbf16>, vector<64x128xf32> -> vector<64x128xf32>
    %c0_166 = arith.constant 0 : index
    %c0_167 = arith.constant 0 : index
    %428 = vector.load %arg8[%c0_166, %c0_167] : memref<1x128xf32, #tpu.memory_space<vmem>>, vector<1x128xf32>
    %429 = vector.broadcast %428 : vector<1x128xf32> to vector<64x128xf32>
    %430 = arith.addf %427, %429 : vector<64x128xf32>
    %431 = arith.negf %430 : vector<64x128xf32>
    %432 = math.exp %431 : vector<64x128xf32>
    %cst_168 = arith.constant 1.000000e+00 : f32
    %433 = vector.broadcast %cst_168 : f32 to vector<64x128xf32>
    %434 = arith.addf %433, %432 : vector<64x128xf32>
    %435 = arith.divf %433, %434 : vector<64x128xf32>
    %436 = vector.shape_cast %435 : vector<64x128xf32> to vector<8x8x128xf32>
    %c0_169 = arith.constant 0 : index
    %c0_170 = arith.constant 0 : index
    %c0_171 = arith.constant 0 : index
    %437 = vector.load %arg9[%c0_169, %c0_170, %c0_171] : memref<8x8x128xf32, #tpu.memory_space<vmem>>, vector<8x8x128xf32>
    tpu.vector_store %arg9[%c0_169, %c0_170, %c0_171], %436 {strides = array<i32>} : memref<8x8x128xf32, #tpu.memory_space<vmem>>, vector<8x8x128xf32>,
    return
  }
  func.func @transform_0(%arg0: i32) -> (i32, i32, i32) {
    %c0_i32 = arith.constant 0 : i32
    %c0_i32_0 = arith.constant 0 : i32
    %c0_i32_1 = arith.constant 0 : i32
    return %arg0, %c0_i32, %c0_i32_0 : i32, i32, i32
  }
  func.func @transform_1(%arg0: i32) -> (i32, i32) {
    %c0_i32 = arith.constant 0 : i32
    %c0_i32_0 = arith.constant 0 : i32
    %c0_i32_1 = arith.constant 0 : i32
    return %c0_i32, %c0_i32_0 : i32, i32
  }
  func.func @transform_2(%arg0: i32) -> (i32, i32) {
    %c0_i32 = arith.constant 0 : i32
    %c0_i32_0 = arith.constant 0 : i32
    %c0_i32_1 = arith.constant 0 : i32
    return %c0_i32, %c0_i32_0 : i32, i32
  }
  func.func @transform_3(%arg0: i32) -> (i32, i32) {
    %c0_i32 = arith.constant 0 : i32
    %c0_i32_0 = arith.constant 0 : i32
    %c0_i32_1 = arith.constant 0 : i32
    return %c0_i32, %c0_i32_0 : i32, i32
  }
  func.func @transform_4(%arg0: i32) -> (i32, i32) {
    %c0_i32 = arith.constant 0 : i32
    %c0_i32_0 = arith.constant 0 : i32
    %c0_i32_1 = arith.constant 0 : i32
    return %c0_i32, %c0_i32_0 : i32, i32
  }
  func.func @transform_5(%arg0: i32) -> (i32, i32) {
    %c0_i32 = arith.constant 0 : i32
    %c0_i32_0 = arith.constant 0 : i32
    %c0_i32_1 = arith.constant 0 : i32
    return %c0_i32, %c0_i32_0 : i32, i32
  }
  func.func @transform_6(%arg0: i32) -> (i32, i32) {
    %c0_i32 = arith.constant 0 : i32
    %c0_i32_0 = arith.constant 0 : i32
    %c0_i32_1 = arith.constant 0 : i32
    return %c0_i32, %c0_i32_0 : i32, i32
  }
  func.func @transform_7(%arg0: i32) -> (i32, i32) {
    %c0_i32 = arith.constant 0 : i32
    %c0_i32_0 = arith.constant 0 : i32
    %c0_i32_1 = arith.constant 0 : i32
    return %c0_i32, %c0_i32_0 : i32, i32
  }
  func.func @transform_8(%arg0: i32) -> (i32, i32, i32) {
    %c0_i32 = arith.constant 0 : i32
    %c0_i32_0 = arith.constant 0 : i32
    %c0_i32_1 = arith.constant 0 : i32
    return %arg0, %c0_i32, %c0_i32_0 : i32, i32, i32
  }
  func.func @transform_9(%arg0: i32) -> (i32, i32) {
    %c0_i32 = arith.constant 0 : i32
    %c0_i32_0 = arith.constant 0 : i32
    %c0_i32_1 = arith.constant 0 : i32
    return %c0_i32, %c0_i32_0 : i32, i32
  }
}

</mosaic_0001>

<llo_original>
// kernel: decoder_rnn_forward.1
$region0: #{decoder_rnn_forward.1}
  #allocation0 [shape = 'u32[]', space=smem, size = 0x4, offset = 0x4, fixed_abs, tag = 'smem constant byte address 0x4 - core index']
  #allocation1 [shape = 'u32[72,128]{1,0:T(1,128)}', space=vmem, size = 0x9000, scoped, tag = 'internal scratch']
  #allocation2 [shape = 'f32[8,8,384]{2,1,0:T(8,128)}', space=vmem, size = 0x18000, scoped, tag = 'scratch operand']
  #allocation3 [shape = 'f32[8,8,128]{2,1,0:T(8,128)}', space=vmem, size = 0x8000, scoped, tag = 'scratch operand']
  #allocation4 [shape = 'f32[8,128]{1,0:T(8,128)}', space=vmem, size = 0x1000, scoped, tag = 'scratch operand']
  %s0 = inlined_call_operand.vmem [shape: bf16[8,8,128], index: 0, kind: input, shape index: {}]
  %s1 = inlined_call_operand.vmem [shape: f32[8,128], index: 1, kind: input, shape index: {}]
  %s2 = inlined_call_operand.hbm [shape: bf16[128,384], index: 2, kind: input, shape index: {}]
  %s3 = inlined_call_operand.vmem [shape: f32[1,384], index: 3, kind: input, shape index: {}]
  %s4 = inlined_call_operand.hbm [shape: bf16[128,384], index: 4, kind: input, shape index: {}]
  %s5 = inlined_call_operand.vmem [shape: f32[1,128], index: 5, kind: input, shape index: {}]
  %s6 = inlined_call_operand.vmem [shape: bf16[128,128], index: 6, kind: input, shape index: {}]
  %s7 = inlined_call_operand.vmem [shape: f32[1,128], index: 7, kind: input, shape index: {}]
  %s8 = inlined_call_operand.vmem [shape: f32[8,8,128], index: 8, kind: output, shape index: {0}]
  %s9 = inlined_call_operand.vmem [shape: f32[8,128], index: 9, kind: output, shape index: {1}]
  %10 = xla_tuple %s8, %s9
  %s11 = sld [smem:[#allocation0]]
  $region62: #{decoder_rnn_forward.1} parent=0
    _
  %s13 = ssub.s32 1, %s11
  %s14 = scalar_select 0, %s13, %s11
  $region1: #{decoder_rnn_forward.1} parent=0
    #allocation5 [shape = 'u8[98304]{0}', space=vmem, size = 0x18000, scoped, tag = 'input window, operand 2, single buffered']
    #allocation6 [shape = 's32[1]{0}', space=sflag, size = 0x4, scoped, tag = 'scoped memory for decoder_rnn_forward.1']
    #allocation7 [shape = 'u8[98304]{0}', space=vmem, size = 0x18000, scoped, tag = 'input window, operand 4, single buffered']
    #allocation8 [shape = 's32[1]{0}', space=sflag, size = 0x4, scoped, tag = 'scoped memory for decoder_rnn_forward.1']
    %15 = vsyncpa [#allocation6], 0
    %16 = vsyncpa [#allocation8], 0
    // Predicated region
    $region2: #{decoder_rnn_forward.1} parent=1 // pred_check
      _
    $region3: #{decoder_rnn_forward.1} parent=1 // pred_check_branch
      %18 = sbr.rel (0) target = $region5
    $region4: #{decoder_rnn_forward.1} parent=1 // pred_region
      _
    $region5: #{decoder_rnn_forward.1} parent=1 // pred_fallthru
      _
    // Predicated region
    $region6: #{decoder_rnn_forward.1} parent=1 // pred_check
      _
    $region7: #{decoder_rnn_forward.1} parent=1 // pred_check_branch
      %20 = sbr.rel (0) target = $region9
    $region8: #{decoder_rnn_forward.1} parent=1 // pred_region
      _
    $region9: #{decoder_rnn_forward.1} parent=1 // pred_fallthru
      _
    // Predicated region
    $region10: #{decoder_rnn_forward.1} parent=1 // pred_check
      _
    $region11: #{decoder_rnn_forward.1} parent=1 // pred_check_branch
      %22 = sbr.rel (0) target = $region13
    $region12: #{decoder_rnn_forward.1} parent=1 // pred_region
      %24 = vsyncadd [#allocation6], 0
      %s25 = sshll.u32 %s2, 4
      %s26 = int_to_ptr.hbm [resolvable:$true] %s25
      %s27 = sshll.u32 [#allocation5], 4
      %s28 = int_to_ptr.vmem [resolvable:$true] %s27
      %33 = dma.hbm_to_vmem [thread:$0]  %s26, 3072, %s28, [#allocation6], 192, 192, 12
    $region13: #{decoder_rnn_forward.1} parent=1 // pred_fallthru
      _
    // Predicated region
    $region14: #{decoder_rnn_forward.1} parent=1 // pred_check
      _
    $region15: #{decoder_rnn_forward.1} parent=1 // pred_check_branch
      %35 = sbr.rel (0) target = $region17
    $region16: #{decoder_rnn_forward.1} parent=1 // pred_region
      _
    $region17: #{decoder_rnn_forward.1} parent=1 // pred_fallthru
      _
    // Predicated region
    $region18: #{decoder_rnn_forward.1} parent=1 // pred_check
      _
    $region19: #{decoder_rnn_forward.1} parent=1 // pred_check_branch
      %37 = sbr.rel (0) target = $region21
    $region20: #{decoder_rnn_forward.1} parent=1 // pred_region
      %39 = vsyncadd [#allocation8], 0
      %s40 = sshll.u32 %s4, 4
      %s41 = int_to_ptr.hbm [resolvable:$true] %s40
      %s42 = sshll.u32 [#allocation7], 4
      %s43 = int_to_ptr.vmem [resolvable:$true] %s42
      %48 = dma.hbm_to_vmem [thread:$0]  %s41, 3072, %s43, [#allocation8], 192, 192, 12
    $region21: #{decoder_rnn_forward.1} parent=1 // pred_fallthru
      _
    // Predicated region
    $region22: #{decoder_rnn_forward.1} parent=1 // pred_check
      _
    $region23: #{decoder_rnn_forward.1} parent=1 // pred_check_branch
      %50 = sbr.rel (0) target = $region25
    $region24: #{decoder_rnn_forward.1} parent=1 // pred_region
      _
    $region25: #{decoder_rnn_forward.1} parent=1 // pred_fallthru
      _
    // Predicated region
    $region26: #{decoder_rnn_forward.1} parent=1 // pred_check
      _
    $region27: #{decoder_rnn_forward.1} parent=1 // pred_check_branch
      %52 = sbr.rel (0) target = $region29
    $region28: #{decoder_rnn_forward.1} parent=1 // pred_region
      _
    $region29: #{decoder_rnn_forward.1} parent=1 // pred_fallthru
      _
    // Predicated region
    $region30: #{decoder_rnn_forward.1} parent=1 // pred_check
      _
    $region31: #{decoder_rnn_forward.1} parent=1 // pred_check_branch
      %54 = sbr.rel (0) target = $region33
    $region32: #{decoder_rnn_forward.1} parent=1 // pred_region
      _
    $region33: #{decoder_rnn_forward.1} parent=1 // pred_fallthru
      _
    // Predicated region
    $region34: #{decoder_rnn_forward.1} parent=1 // pred_check
      _
    $region35: #{decoder_rnn_forward.1} parent=1 // pred_check_branch
      %56 = sbr.rel (0) target = $region37
    $region36: #{decoder_rnn_forward.1} parent=1 // pred_region
      %58 = dma.done [#allocation6], 3072
    $region37: #{decoder_rnn_forward.1} parent=1 // pred_fallthru
      _
    // Predicated region
    $region38: #{decoder_rnn_forward.1} parent=1 // pred_check
      _
    $region39: #{decoder_rnn_forward.1} parent=1 // pred_check_branch
      %60 = sbr.rel (0) target = $region41
    $region40: #{decoder_rnn_forward.1} parent=1 // pred_region
      %62 = dma.done [#allocation8], 3072
    $region41: #{decoder_rnn_forward.1} parent=1 // pred_fallthru
      _
    %p63 = scmp.eq.s32.totalorder 0, 0
    // Predicated region
    $region42: #{decoder_rnn_forward.1} parent=1 // pred_check
      %p64 = pneg %p63
    $region43: #{decoder_rnn_forward.1} parent=1 // pred_check_branch
      %66 = sbr.rel (%p64) target = $region45
    $region44: #{decoder_rnn_forward.1} parent=1 // pred_region
      %v67 = vld [vmem:[%s1] sm:$0xff]
      %68 = vst [vmem:[#allocation4] sm:$0xff] %v67
    $region45: #{decoder_rnn_forward.1} parent=1 // pred_fallthru
      _
    %v69 = vld [vmem:[%s0] sm:$0xf]
    %v70 = vld [vmem:[%s0 + $0x4] sm:$0xf]
    %v71 = vld [vmem:[%s0 + $0x8] sm:$0xf]
    %v72 = vld [vmem:[%s0 + $0xc] sm:$0xf]
    %v73 = vld [vmem:[%s0 + $0x10] sm:$0xf]
    %v74 = vld [vmem:[%s0 + $0x14] sm:$0xf]
    %v75 = vld [vmem:[%s0 + $0x18] sm:$0xf]
    %v76 = vld [vmem:[%s0 + $0x1c] sm:$0xf]
    %v77 = vld [vmem:[#allocation5] sm:$0xff]
    %v78 = vld [vmem:[#allocation5 + $0x8] sm:$0xf]
    %v79 = vld [vmem:[#allocation5 + $0xc] sm:$0xff]
    %v80 = vld [vmem:[#allocation5 + $0x14] sm:$0xf]
    %v81 = vld [vmem:[#allocation5 + $0x18] sm:$0xff]
    %v82 = vld [vmem:[#allocation5 + $0x20] sm:$0xf]
    %v83 = vld [vmem:[#allocation5 + $0x24] sm:$0xff]
    %v84 = vld [vmem:[#allocation5 + $0x2c] sm:$0xf]
    %v85 = vld [vmem:[#allocation5 + $0x30] sm:$0xff]
    %v86 = vld [vmem:[#allocation5 + $0x38] sm:$0xf]
    %v87 = vld [vmem:[#allocation5 + $0x3c] sm:$0xff]
    %v88 = vld [vmem:[#allocation5 + $0x44] sm:$0xf]
    %v89 = vld [vmem:[#allocation5 + $0x48] sm:$0xff]
    %v90 = vld [vmem:[#allocation5 + $0x50] sm:$0xf]
    %v91 = vld [vmem:[#allocation5 + $0x54] sm:$0xff]
    %v92 = vld [vmem:[#allocation5 + $0x5c] sm:$0xf]
    %v93 = vld [vmem:[#allocation5 + $0x60] sm:$0xff]
    %v94 = vld [vmem:[#allocation5 + $0x68] sm:$0xf]
    %v95 = vld [vmem:[#allocation5 + $0x6c] sm:$0xff]
    %v96 = vld [vmem:[#allocation5 + $0x74] sm:$0xf]
    %v97 = vld [vmem:[#allocation5 + $0x78] sm:$0xff]
    %v98 = vld [vmem:[#allocation5 + $0x80] sm:$0xf]
    %v99 = vld [vmem:[#allocation5 + $0x84] sm:$0xff]
    %v100 = vld [vmem:[#allocation5 + $0x8c] sm:$0xf]
    %v101 = vld [vmem:[#allocation5 + $0x90] sm:$0xff]
    %v102 = vld [vmem:[#allocation5 + $0x98] sm:$0xf]
    %v103 = vld [vmem:[#allocation5 + $0x9c] sm:$0xff]
    %v104 = vld [vmem:[#allocation5 + $0xa4] sm:$0xf]
    %v105 = vld [vmem:[#allocation5 + $0xa8] sm:$0xff]
    %v106 = vld [vmem:[#allocation5 + $0xb0] sm:$0xf]
    %v107 = vld [vmem:[#allocation5 + $0xb4] sm:$0xff]
    %v108 = vld [vmem:[#allocation5 + $0xbc] sm:$0xf]
    %v109 = vld [vmem:[%s3] sm:$0x7]
    %v111 = vperm.slane %v109, 0
    %v112 = vperm.slane %v109, 1
    %v113 = vperm.slane %v109, 2
    %v125 = vunpack.c.l.b16 %v69
    %v126 = vunpack.c.l.b16 %v70
    %v127 = vunpack.c.l.b16 %v71
    %v128 = vunpack.c.l.b16 %v72
    %v129 = vunpack.c.l.b16 %v73
    %v130 = vunpack.c.l.b16 %v74
    %v131 = vunpack.c.l.b16 %v75
    %v132 = vunpack.c.l.b16 %v76
    %v133 = vpack.c.b16 %v126, %v125
    %v134 = vpack.c.b16 %v128, %v127
    %v135 = vpack.c.b16 %v130, %v129
    %v136 = vpack.c.b16 %v132, %v131
    %v173 = vunpack.c.l.b16 %v77
    %v174 = vunpack.c.h.b16 %v77
    %v175 = vunpack.c.l.b16 %v78
    %v176 = vunpack.c.l.b16 %v79
    %v177 = vunpack.c.h.b16 %v79
    %v178 = vunpack.c.l.b16 %v80
    %v179 = vunpack.c.l.b16 %v81
    %v180 = vunpack.c.h.b16 %v81
    %v181 = vunpack.c.l.b16 %v82
    %v182 = vunpack.c.l.b16 %v83
    %v183 = vunpack.c.h.b16 %v83
    %v184 = vunpack.c.l.b16 %v84
    %v185 = vunpack.c.l.b16 %v85
    %v186 = vunpack.c.h.b16 %v85
    %v187 = vunpack.c.l.b16 %v86
    %v188 = vunpack.c.l.b16 %v87
    %v189 = vunpack.c.h.b16 %v87
    %v190 = vunpack.c.l.b16 %v88
    %v191 = vunpack.c.l.b16 %v89
    %v192 = vunpack.c.h.b16 %v89
    %v193 = vunpack.c.l.b16 %v90
    %v194 = vunpack.c.l.b16 %v91
    %v195 = vunpack.c.h.b16 %v91
    %v196 = vunpack.c.l.b16 %v92
    %v197 = vunpack.c.l.b16 %v93
    %v198 = vunpack.c.h.b16 %v93
    %v199 = vunpack.c.l.b16 %v94
    %v200 = vunpack.c.l.b16 %v95
    %v201 = vunpack.c.h.b16 %v95
    %v202 = vunpack.c.l.b16 %v96
    %v203 = vunpack.c.l.b16 %v97
    %v204 = vunpack.c.h.b16 %v97
    %v205 = vunpack.c.l.b16 %v98
    %v206 = vunpack.c.l.b16 %v99
    %v207 = vunpack.c.h.b16 %v99
    %v208 = vunpack.c.l.b16 %v100
    %v209 = vunpack.c.l.b16 %v101
    %v210 = vunpack.c.h.b16 %v101
    %v211 = vunpack.c.l.b16 %v102
    %v212 = vunpack.c.l.b16 %v103
    %v213 = vunpack.c.h.b16 %v103
    %v214 = vunpack.c.l.b16 %v104
    %v215 = vunpack.c.l.b16 %v105
    %v216 = vunpack.c.h.b16 %v105
    %v217 = vunpack.c.l.b16 %v106
    %v218 = vunpack.c.l.b16 %v107
    %v219 = vunpack.c.h.b16 %v107
    %v220 = vunpack.c.l.b16 %v108
    %v221 = vpack.c.b16 %v176, %v173
    %v222 = vpack.c.b16 %v177, %v174
    %v223 = vpack.c.b16 %v178, %v175
    %v224 = vpack.c.b16 %v182, %v179
    %v225 = vpack.c.b16 %v183, %v180
    %v226 = vpack.c.b16 %v184, %v181
    %v227 = vpack.c.b16 %v188, %v185
    %v228 = vpack.c.b16 %v189, %v186
    %v229 = vpack.c.b16 %v190, %v187
    %v230 = vpack.c.b16 %v194, %v191
    %v231 = vpack.c.b16 %v195, %v192
    %v232 = vpack.c.b16 %v196, %v193
    %v233 = vpack.c.b16 %v200, %v197
    %v234 = vpack.c.b16 %v201, %v198
    %v235 = vpack.c.b16 %v202, %v199
    %v236 = vpack.c.b16 %v206, %v203
    %v237 = vpack.c.b16 %v207, %v204
    %v238 = vpack.c.b16 %v208, %v205
    %v239 = vpack.c.b16 %v212, %v209
    %v240 = vpack.c.b16 %v213, %v210
    %v241 = vpack.c.b16 %v214, %v211
    %v242 = vpack.c.b16 %v218, %v215
    %v243 = vpack.c.b16 %v219, %v216
    %v244 = vpack.c.b16 %v220, %v217
    %269 = vmatpush.bf16.msra.mxu0 %v242
    %270 = vmatpush.bf16.msra.mxu0 %v239
    %271 = vmatpush.bf16.msra.mxu0 %v236
    %272 = vmatpush.bf16.msra.mxu0 %v233
    %273 = vmatpush.bf16.msra.mxu0 %v230
    %274 = vmatpush.bf16.msra.mxu0 %v227
    %275 = vmatpush.bf16.msra.mxu0 %v224
    %276 = vmatpush.bf16.msra.mxu0 %v221
    %277 = vmatmul.bf16.gmra.mxu0 %v133
    %v278 = vpop.f32.mrf.mxu0
    %v279 = vadd.f32 %v111, %v278
    %v280 = vpop.f32.mrf.mxu0
    %v281 = vadd.f32 %v111, %v280
    %282 = vmatmul.bf16.gmra.mxu0 %v134
    %v283 = vpop.f32.mrf.mxu0
    %v284 = vadd.f32 %v111, %v283
    %v285 = vpop.f32.mrf.mxu0
    %v286 = vadd.f32 %v111, %v285
    %287 = vmatmul.bf16.gmra.mxu0 %v135
    %v288 = vpop.f32.mrf.mxu0
    %v289 = vadd.f32 %v111, %v288
    %v290 = vpop.f32.mrf.mxu0
    %v291 = vadd.f32 %v111, %v290
    %292 = vmatmul.bf16.gmra.mxu0 %v136
    %v293 = vpop.f32.mrf.mxu0
    %v294 = vadd.f32 %v111, %v293
    %v295 = vpop.f32.mrf.mxu0
    %v296 = vadd.f32 %v111, %v295
    %297 = vdwg.mxu0
    %298 = vmatpush.bf16.msra.mxu0 %v243
    %299 = vmatpush.bf16.msra.mxu0 %v240
    %300 = vmatpush.bf16.msra.mxu0 %v237
    %301 = vmatpush.bf16.msra.mxu0 %v234
    %302 = vmatpush.bf16.msra.mxu0 %v231
    %303 = vmatpush.bf16.msra.mxu0 %v228
    %304 = vmatpush.bf16.msra.mxu0 %v225
    %305 = vmatpush.bf16.msra.mxu0 %v222
    %306 = vmatmul.bf16.gmra.mxu0 %v133
    %v307 = vpop.f32.mrf.mxu0
    %v308 = vadd.f32 %v112, %v307
    %v309 = vpop.f32.mrf.mxu0
    %v310 = vadd.f32 %v112, %v309
    %311 = vmatmul.bf16.gmra.mxu0 %v134
    %v312 = vpop.f32.mrf.mxu0
    %v313 = vadd.f32 %v112, %v312
    %v314 = vpop.f32.mrf.mxu0
    %v315 = vadd.f32 %v112, %v314
    %316 = vmatmul.bf16.gmra.mxu0 %v135
    %v317 = vpop.f32.mrf.mxu0
    %v318 = vadd.f32 %v112, %v317
    %v319 = vpop.f32.mrf.mxu0
    %v320 = vadd.f32 %v112, %v319
    %321 = vmatmul.bf16.gmra.mxu0 %v136
    %v322 = vpop.f32.mrf.mxu0
    %v323 = vadd.f32 %v112, %v322
    %v324 = vpop.f32.mrf.mxu0
    %v325 = vadd.f32 %v112, %v324
    %326 = vdwg.mxu0
    %327 = vmatpush.bf16.msra.mxu0 %v244
    %328 = vmatpush.bf16.msra.mxu0 %v241
    %329 = vmatpush.bf16.msra.mxu0 %v238
    %330 = vmatpush.bf16.msra.mxu0 %v235
    %331 = vmatpush.bf16.msra.mxu0 %v232
    %332 = vmatpush.bf16.msra.mxu0 %v229
    %333 = vmatpush.bf16.msra.mxu0 %v226
    %334 = vmatpush.bf16.msra.mxu0 %v223
    %335 = vmatmul.bf16.gmra.mxu0 %v133
    %v336 = vpop.f32.mrf.mxu0
    %v337 = vadd.f32 %v113, %v336
    %v338 = vpop.f32.mrf.mxu0
    %v339 = vadd.f32 %v113, %v338
    %340 = vmatmul.bf16.gmra.mxu0 %v134
    %v341 = vpop.f32.mrf.mxu0
    %v342 = vadd.f32 %v113, %v341
    %v343 = vpop.f32.mrf.mxu0
    %v344 = vadd.f32 %v113, %v343
    %345 = vmatmul.bf16.gmra.mxu0 %v135
    %v346 = vpop.f32.mrf.mxu0
    %v347 = vadd.f32 %v113, %v346
    %v348 = vpop.f32.mrf.mxu0
    %v349 = vadd.f32 %v113, %v348
    %350 = vmatmul.bf16.gmra.mxu0 %v136
    %v351 = vpop.f32.mrf.mxu0
    %v352 = vadd.f32 %v113, %v351
    %v353 = vpop.f32.mrf.mxu0
    %v354 = vadd.f32 %v113, %v353
    %355 = vdwg.mxu0
    %356 = vst [vmem:[#allocation2] sm:$0xff] %v279
    %357 = vst [vmem:[#allocation2 + $0x8] sm:$0xff] %v308
    %358 = vst [vmem:[#allocation2 + $0x10] sm:$0xff] %v337
    %359 = vst [vmem:[#allocation2 + $0x18] sm:$0xff] %v281
    %360 = vst [vmem:[#allocation2 + $0x20] sm:$0xff] %v310
    %361 = vst [vmem:[#allocation2 + $0x28] sm:$0xff] %v339
    %362 = vst [vmem:[#allocation2 + $0x30] sm:$0xff] %v284
    %363 = vst [vmem:[#allocation2 + $0x38] sm:$0xff] %v313
    %364 = vst [vmem:[#allocation2 + $0x40] sm:$0xff] %v342
    %365 = vst [vmem:[#allocation2 + $0x48] sm:$0xff] %v286
    %366 = vst [vmem:[#allocation2 + $0x50] sm:$0xff] %v315
    %367 = vst [vmem:[#allocation2 + $0x58] sm:$0xff] %v344
    %368 = vst [vmem:[#allocation2 + $0x60] sm:$0xff] %v289
    %369 = vst [vmem:[#allocation2 + $0x68] sm:$0xff] %v318
    %370 = vst [vmem:[#allocation2 + $0x70] sm:$0xff] %v347
    %371 = vst [vmem:[#allocation2 + $0x78] sm:$0xff] %v291
    %372 = vst [vmem:[#allocation2 + $0x80] sm:$0xff] %v320
    %373 = vst [vmem:[#allocation2 + $0x88] sm:$0xff] %v349
    %374 = vst [vmem:[#allocation2 + $0x90] sm:$0xff] %v294
    %375 = vst [vmem:[#allocation2 + $0x98] sm:$0xff] %v323
    %376 = vst [vmem:[#allocation2 + $0xa0] sm:$0xff] %v352
    %377 = vst [vmem:[#allocation2 + $0xa8] sm:$0xff] %v296
    %378 = vst [vmem:[#allocation2 + $0xb0] sm:$0xff] %v325
    %379 = vst [vmem:[#allocation2 + $0xb8] sm:$0xff] %v354
    %s380 = smul.u32 0, 8
    %v381 = vld [vmem:[#allocation4] sm:$0xff]
    %v382 = vld [vmem:[#allocation2] sm:$0xff]
    %v383 = vld [vmem:[#allocation2 + $0x8] sm:$0xff]
    %v384 = vld [vmem:[#allocation2 + $0x10] sm:$0xff]
    %v385 = vpack.c.bf16 %v381, %v381
    %v386 = vld [vmem:[#allocation7] sm:$0xff]
    %v387 = vld [vmem:[#allocation7 + $0x8] sm:$0xf]
    %v388 = vld [vmem:[#allocation7 + $0xc] sm:$0xff]
    %v389 = vld [vmem:[#allocation7 + $0x14] sm:$0xf]
    %v390 = vld [vmem:[#allocation7 + $0x18] sm:$0xff]
    %v391 = vld [vmem:[#allocation7 + $0x20] sm:$0xf]
    %v392 = vld [vmem:[#allocation7 + $0x24] sm:$0xff]
    %v393 = vld [vmem:[#allocation7 + $0x2c] sm:$0xf]
    %v394 = vld [vmem:[#allocation7 + $0x30] sm:$0xff]
    %v395 = vld [vmem:[#allocation7 + $0x38] sm:$0xf]
    %v396 = vld [vmem:[#allocation7 + $0x3c] sm:$0xff]
    %v397 = vld [vmem:[#allocation7 + $0x44] sm:$0xf]
    %v398 = vld [vmem:[#allocation7 + $0x48] sm:$0xff]
    %v399 = vld [vmem:[#allocation7 + $0x50] sm:$0xf]
    %v400 = vld [vmem:[#allocation7 + $0x54] sm:$0xff]
    %v401 = vld [vmem:[#allocation7 + $0x5c] sm:$0xf]
    %v402 = vld [vmem:[#allocation7 + $0x60] sm:$0xff]
    %v403 = vld [vmem:[#allocation7 + $0x68] sm:$0xf]
    %v404 = vld [vmem:[#allocation7 + $0x6c] sm:$0xff]
    %v405 = vld [vmem:[#allocation7 + $0x74] sm:$0xf]
    %v406 = vld [vmem:[#allocation7 + $0x78] sm:$0xff]
    %v407 = vld [vmem:[#allocation7 + $0x80] sm:$0xf]
    %v408 = vld [vmem:[#allocation7 + $0x84] sm:$0xff]
    %v409 = vld [vmem:[#allocation7 + $0x8c] sm:$0xf]
    %v410 = vld [vmem:[#allocation7 + $0x90] sm:$0xff]
    %v411 = vld [vmem:[#allocation7 + $0x98] sm:$0xf]
    %v412 = vld [vmem:[#allocation7 + $0x9c] sm:$0xff]
    %v413 = vld [vmem:[#allocation7 + $0xa4] sm:$0xf]
    %v414 = vld [vmem:[#allocation7 + $0xa8] sm:$0xff]
    %v415 = vld [vmem:[#allocation7 + $0xb0] sm:$0xf]
    %v416 = vld [vmem:[#allocation7 + $0xb4] sm:$0xff]
    %v417 = vld [vmem:[#allocation7 + $0xbc] sm:$0xf]
    %v450 = vunpack.c.l.b16 %v386
    %v451 = vunpack.c.h.b16 %v386
    %v452 = vunpack.c.l.b16 %v387
    %v453 = vunpack.c.l.b16 %v388
    %v454 = vunpack.c.h.b16 %v388
    %v455 = vunpack.c.l.b16 %v389
    %v456 = vunpack.c.l.b16 %v390
    %v457 = vunpack.c.h.b16 %v390
    %v458 = vunpack.c.l.b16 %v391
    %v459 = vunpack.c.l.b16 %v392
    %v460 = vunpack.c.h.b16 %v392
    %v461 = vunpack.c.l.b16 %v393
    %v462 = vunpack.c.l.b16 %v394
    %v463 = vunpack.c.h.b16 %v394
    %v464 = vunpack.c.l.b16 %v395
    %v465 = vunpack.c.l.b16 %v396
    %v466 = vunpack.c.h.b16 %v396
    %v467 = vunpack.c.l.b16 %v397
    %v468 = vunpack.c.l.b16 %v398
    %v469 = vunpack.c.h.b16 %v398
    %v470 = vunpack.c.l.b16 %v399
    %v471 = vunpack.c.l.b16 %v400
    %v472 = vunpack.c.h.b16 %v400
    %v473 = vunpack.c.l.b16 %v401
    %v474 = vunpack.c.l.b16 %v402
    %v475 = vunpack.c.h.b16 %v402
    %v476 = vunpack.c.l.b16 %v403
    %v477 = vunpack.c.l.b16 %v404
    %v478 = vunpack.c.h.b16 %v404
    %v479 = vunpack.c.l.b16 %v405
    %v480 = vunpack.c.l.b16 %v406
    %v481 = vunpack.c.h.b16 %v406
    %v482 = vunpack.c.l.b16 %v407
    %v483 = vunpack.c.l.b16 %v408
    %v484 = vunpack.c.h.b16 %v408
    %v485 = vunpack.c.l.b16 %v409
    %v486 = vunpack.c.l.b16 %v410
    %v487 = vunpack.c.h.b16 %v410
    %v488 = vunpack.c.l.b16 %v411
    %v489 = vunpack.c.l.b16 %v412
    %v490 = vunpack.c.h.b16 %v412
    %v491 = vunpack.c.l.b16 %v413
    %v492 = vunpack.c.l.b16 %v414
    %v493 = vunpack.c.h.b16 %v414
    %v494 = vunpack.c.l.b16 %v415
    %v495 = vunpack.c.l.b16 %v416
    %v496 = vunpack.c.h.b16 %v416
    %v497 = vunpack.c.l.b16 %v417
    %v498 = vpack.c.b16 %v453, %v450
    %v499 = vpack.c.b16 %v454, %v451
    %v500 = vpack.c.b16 %v455, %v452
    %v501 = vpack.c.b16 %v459, %v456
    %v502 = vpack.c.b16 %v460, %v457
    %v503 = vpack.c.b16 %v461, %v458
    %v504 = vpack.c.b16 %v465, %v462
    %v505 = vpack.c.b16 %v466, %v463
    %v506 = vpack.c.b16 %v467, %v464
    %v507 = vpack.c.b16 %v471, %v468
    %v508 = vpack.c.b16 %v472, %v469
    %v509 = vpack.c.b16 %v473, %v470
    %v510 = vpack.c.b16 %v477, %v474
    %v511 = vpack.c.b16 %v478, %v475
    %v512 = vpack.c.b16 %v479, %v476
    %v513 = vpack.c.b16 %v483, %v480
    %v514 = vpack.c.b16 %v484, %v481
    %v515 = vpack.c.b16 %v485, %v482
    %v516 = vpack.c.b16 %v489, %v486
    %v517 = vpack.c.b16 %v490, %v487
    %v518 = vpack.c.b16 %v491, %v488
    %v519 = vpack.c.b16 %v495, %v492
    %v520 = vpack.c.b16 %v496, %v493
    %v521 = vpack.c.b16 %v497, %v494
    %546 = vmatpush.bf16.msra.mxu0 %v519
    %547 = vmatpush.bf16.msra.mxu0 %v516
    %548 = vmatpush.bf16.msra.mxu0 %v513
    %549 = vmatpush.bf16.msra.mxu0 %v510
    %550 = vmatpush.bf16.msra.mxu0 %v507
    %551 = vmatpush.bf16.msra.mxu0 %v504
    %552 = vmatpush.bf16.msra.mxu0 %v501
    %553 = vmatpush.bf16.msra.mxu0 %v498
    %554 = vmatmul.bf16.gmra.mxu0 %v385
    %v555 = vpop.f32.mrf.mxu0
    %v556 = vadd.f32 0.0, %v555
    %v557 = vpop.f32.mrf.mxu0
    %558 = vdwg.mxu0
    %559 = vmatpush.bf16.msra.mxu0 %v520
    %560 = vmatpush.bf16.msra.mxu0 %v517
    %561 = vmatpush.bf16.msra.mxu0 %v514
    %562 = vmatpush.bf16.msra.mxu0 %v511
    %563 = vmatpush.bf16.msra.mxu0 %v508
    %564 = vmatpush.bf16.msra.mxu0 %v505
    %565 = vmatpush.bf16.msra.mxu0 %v502
    %566 = vmatpush.bf16.msra.mxu0 %v499
    %567 = vmatmul.bf16.gmra.mxu0 %v385
    %v568 = vpop.f32.mrf.mxu0
    %v569 = vadd.f32 0.0, %v568
    %v570 = vpop.f32.mrf.mxu0
    %571 = vdwg.mxu0
    %572 = vmatpush.bf16.msra.mxu0 %v521
    %573 = vmatpush.bf16.msra.mxu0 %v518
    %574 = vmatpush.bf16.msra.mxu0 %v515
    %575 = vmatpush.bf16.msra.mxu0 %v512
    %576 = vmatpush.bf16.msra.mxu0 %v509
    %577 = vmatpush.bf16.msra.mxu0 %v506
    %578 = vmatpush.bf16.msra.mxu0 %v503
    %579 = vmatpush.bf16.msra.mxu0 %v500
    %580 = vmatmul.bf16.gmra.mxu0 %v385
    %v581 = vpop.f32.mrf.mxu0
    %v582 = vadd.f32 0.0, %v581
    %v583 = vpop.f32.mrf.mxu0
    %584 = vdwg.mxu0
    %v585 = vadd.f32 %v382, %v556
    %v586 = vxor.u32 %v585, 2147483648
    %v587 = vmul.f32 %v586, 1.442695
    %v588 = vpow.pop %v587
    %v589 = vadd.f32 %v588, 1.0
    %v590 = vrcp.pop %v589
    %v591 = vmul.f32 %v589, %v590
    %v592 = vsub.f32 1.0, %v591
    %v593 = vmul.f32 %v590, %v592
    %v594 = vadd.f32 %v590, %v593
    %vm595 = vweird.f32 %v589
    %vm596 = vweird.f32 %v590
    %vm597 = vmor %vm595, %vm596
    %v598 = vsel %vm597, %v590, %v594
    %v599 = vand.u32 2147483647, %v589
    %vm600 = vcmp.eq.f32.partialorder %v599, 8.507059e+37
    %v601 = vand.u32 %v589, 2147483648
    %v602 = vor.u32 1.1754944e-38, %v601
    %v603 = vsel %vm600, %v602, %v598
    %v604 = vmul.f32 1.0, %v603
    %v605 = vadd.f32 %v383, %v569
    %v606 = vxor.u32 %v605, 2147483648
    %v607 = vmul.f32 %v606, 1.442695
    %v608 = vpow.pop %v607
    %v609 = vadd.f32 %v608, 1.0
    %v610 = vrcp.pop %v609
    %v611 = vmul.f32 %v609, %v610
    %v612 = vsub.f32 1.0, %v611
    %v613 = vmul.f32 %v610, %v612
    %v614 = vadd.f32 %v610, %v613
    %vm615 = vweird.f32 %v609
    %vm616 = vweird.f32 %v610
    %vm617 = vmor %vm615, %vm616
    %v618 = vsel %vm617, %v610, %v614
    %v619 = vand.u32 2147483647, %v609
    %vm620 = vcmp.eq.f32.partialorder %v619, 8.507059e+37
    %v621 = vand.u32 %v609, 2147483648
    %v622 = vor.u32 1.1754944e-38, %v621
    %v623 = vsel %vm620, %v622, %v618
    %v624 = vmul.f32 1.0, %v623
    %v625 = vld [vmem:[%s5] sm:$0x1]
    %v627 = vperm.slane %v625, 0
    %v629 = vadd.f32 %v582, %v627
    %v630 = vmul.f32 %v604, %v629
    %v631 = vadd.f32 %v384, %v630
    %v632 = vtanh.pop %v631
    %v633 = vsub.f32 1.0, %v624
    %v634 = vmul.f32 %v633, %v632
    %v635 = vmul.f32 %v624, %v381
    %v636 = vadd.f32 %v634, %v635
    %p637 = scmp.lt.s32.totalorder %s380, 8
    %s638 = scalar_select %p637, 1, 0
    %s639 = scvt.s32.f32 %s638
    %v640 = vstv %s639
    %v641 = vmul.f32 %v640, %v636
    %s642 = ssub.f32 1.0, %s639
    %v643 = vstv %s642
    %v644 = vmul.f32 %v643, %v381
    %v645 = vadd.f32 %v641, %v644
    %646 = vst [vmem:[#allocation4] sm:$0xff] %v645
    %647 = vst [vmem:[#allocation3] sm:$0xff] %v645
    %v648 = vld [vmem:[#allocation4] sm:$0xff]
    %s649 = scalar_lea.vmem [#allocation2], 24
    %v650 = vld [vmem:[%s649] sm:$0xff]
    %v651 = vld [vmem:[%s649 + $0x8] sm:$0xff]
    %v652 = vld [vmem:[%s649 + $0x10] sm:$0xff]
    %v653 = vpack.c.bf16 %v648, %v648
    %v654 = vld [vmem:[#allocation7] sm:$0xff]
    %v655 = vld [vmem:[#allocation7 + $0x8] sm:$0xf]
    %v656 = vld [vmem:[#allocation7 + $0xc] sm:$0xff]
    %v657 = vld [vmem:[#allocation7 + $0x14] sm:$0xf]
    %v658 = vld [vmem:[#allocation7 + $0x18] sm:$0xff]
    %v659 = vld [vmem:[#allocation7 + $0x20] sm:$0xf]
    %v660 = vld [vmem:[#allocation7 + $0x24] sm:$0xff]
    %v661 = vld [vmem:[#allocation7 + $0x2c] sm:$0xf]
    %v662 = vld [vmem:[#allocation7 + $0x30] sm:$0xff]
    %v663 = vld [vmem:[#allocation7 + $0x38] sm:$0xf]
    %v664 = vld [vmem:[#allocation7 + $0x3c] sm:$0xff]
    %v665 = vld [vmem:[#allocation7 + $0x44] sm:$0xf]
    %v666 = vld [vmem:[#allocation7 + $0x48] sm:$0xff]
    %v667 = vld [vmem:[#allocation7 + $0x50] sm:$0xf]
    %v668 = vld [vmem:[#allocation7 + $0x54] sm:$0xff]
    %v669 = vld [vmem:[#allocation7 + $0x5c] sm:$0xf]
    %v670 = vld [vmem:[#allocation7 + $0x60] sm:$0xff]
    %v671 = vld [vmem:[#allocation7 + $0x68] sm:$0xf]
    %v672 = vld [vmem:[#allocation7 + $0x6c] sm:$0xff]
    %v673 = vld [vmem:[#allocation7 + $0x74] sm:$0xf]
    %v674 = vld [vmem:[#allocation7 + $0x78] sm:$0xff]
    %v675 = vld [vmem:[#allocation7 + $0x80] sm:$0xf]
    %v676 = vld [vmem:[#allocation7 + $0x84] sm:$0xff]
    %v677 = vld [vmem:[#allocation7 + $0x8c] sm:$0xf]
    %v678 = vld [vmem:[#allocation7 + $0x90] sm:$0xff]
    %v679 = vld [vmem:[#allocation7 + $0x98] sm:$0xf]
    %v680 = vld [vmem:[#allocation7 + $0x9c] sm:$0xff]
    %v681 = vld [vmem:[#allocation7 + $0xa4] sm:$0xf]
    %v682 = vld [vmem:[#allocation7 + $0xa8] sm:$0xff]
    %v683 = vld [vmem:[#allocation7 + $0xb0] sm:$0xf]
    %v684 = vld [vmem:[#allocation7 + $0xb4] sm:$0xff]
    %v685 = vld [vmem:[#allocation7 + $0xbc] sm:$0xf]
    %v718 = vunpack.c.l.b16 %v654
    %v719 = vunpack.c.h.b16 %v654
    %v720 = vunpack.c.l.b16 %v655
    %v721 = vunpack.c.l.b16 %v656
    %v722 = vunpack.c.h.b16 %v656
    %v723 = vunpack.c.l.b16 %v657
    %v724 = vunpack.c.l.b16 %v658
    %v725 = vunpack.c.h.b16 %v658
    %v726 = vunpack.c.l.b16 %v659
    %v727 = vunpack.c.l.b16 %v660
    %v728 = vunpack.c.h.b16 %v660
    %v729 = vunpack.c.l.b16 %v661
    %v730 = vunpack.c.l.b16 %v662
    %v731 = vunpack.c.h.b16 %v662
    %v732 = vunpack.c.l.b16 %v663
    %v733 = vunpack.c.l.b16 %v664
    %v734 = vunpack.c.h.b16 %v664
    %v735 = vunpack.c.l.b16 %v665
    %v736 = vunpack.c.l.b16 %v666
    %v737 = vunpack.c.h.b16 %v666
    %v738 = vunpack.c.l.b16 %v667
    %v739 = vunpack.c.l.b16 %v668
    %v740 = vunpack.c.h.b16 %v668
    %v741 = vunpack.c.l.b16 %v669
    %v742 = vunpack.c.l.b16 %v670
    %v743 = vunpack.c.h.b16 %v670
    %v744 = vunpack.c.l.b16 %v671
    %v745 = vunpack.c.l.b16 %v672
    %v746 = vunpack.c.h.b16 %v672
    %v747 = vunpack.c.l.b16 %v673
    %v748 = vunpack.c.l.b16 %v674
    %v749 = vunpack.c.h.b16 %v674
    %v750 = vunpack.c.l.b16 %v675
    %v751 = vunpack.c.l.b16 %v676
    %v752 = vunpack.c.h.b16 %v676
    %v753 = vunpack.c.l.b16 %v677
    %v754 = vunpack.c.l.b16 %v678
    %v755 = vunpack.c.h.b16 %v678
    %v756 = vunpack.c.l.b16 %v679
    %v757 = vunpack.c.l.b16 %v680
    %v758 = vunpack.c.h.b16 %v680
    %v759 = vunpack.c.l.b16 %v681
    %v760 = vunpack.c.l.b16 %v682
    %v761 = vunpack.c.h.b16 %v682
    %v762 = vunpack.c.l.b16 %v683
    %v763 = vunpack.c.l.b16 %v684
    %v764 = vunpack.c.h.b16 %v684
    %v765 = vunpack.c.l.b16 %v685
    %v766 = vpack.c.b16 %v721, %v718
    %v767 = vpack.c.b16 %v722, %v719
    %v768 = vpack.c.b16 %v723, %v720
    %v769 = vpack.c.b16 %v727, %v724
    %v770 = vpack.c.b16 %v728, %v725
    %v771 = vpack.c.b16 %v729, %v726
    %v772 = vpack.c.b16 %v733, %v730
    %v773 = vpack.c.b16 %v734, %v731
    %v774 = vpack.c.b16 %v735, %v732
    %v775 = vpack.c.b16 %v739, %v736
    %v776 = vpack.c.b16 %v740, %v737
    %v777 = vpack.c.b16 %v741, %v738
    %v778 = vpack.c.b16 %v745, %v742
    %v779 = vpack.c.b16 %v746, %v743
    %v780 = vpack.c.b16 %v747, %v744
    %v781 = vpack.c.b16 %v751, %v748
    %v782 = vpack.c.b16 %v752, %v749
    %v783 = vpack.c.b16 %v753, %v750
    %v784 = vpack.c.b16 %v757, %v754
    %v785 = vpack.c.b16 %v758, %v755
    %v786 = vpack.c.b16 %v759, %v756
    %v787 = vpack.c.b16 %v763, %v760
    %v788 = vpack.c.b16 %v764, %v761
    %v789 = vpack.c.b16 %v765, %v762
    %814 = vmatpush.bf16.msra.mxu0 %v787
    %815 = vmatpush.bf16.msra.mxu0 %v784
    %816 = vmatpush.bf16.msra.mxu0 %v781
    %817 = vmatpush.bf16.msra.mxu0 %v778
    %818 = vmatpush.bf16.msra.mxu0 %v775
    %819 = vmatpush.bf16.msra.mxu0 %v772
    %820 = vmatpush.bf16.msra.mxu0 %v769
    %821 = vmatpush.bf16.msra.mxu0 %v766
    %822 = vmatmul.bf16.gmra.mxu0 %v653
    %v823 = vpop.f32.mrf.mxu0
    %v824 = vadd.f32 0.0, %v823
    %v825 = vpop.f32.mrf.mxu0
    %826 = vdwg.mxu0
    %827 = vmatpush.bf16.msra.mxu0 %v788
    %828 = vmatpush.bf16.msra.mxu0 %v785
    %829 = vmatpush.bf16.msra.mxu0 %v782
    %830 = vmatpush.bf16.msra.mxu0 %v779
    %831 = vmatpush.bf16.msra.mxu0 %v776
    %832 = vmatpush.bf16.msra.mxu0 %v773
    %833 = vmatpush.bf16.msra.mxu0 %v770
    %834 = vmatpush.bf16.msra.mxu0 %v767
    %835 = vmatmul.bf16.gmra.mxu0 %v653
    %v836 = vpop.f32.mrf.mxu0
    %v837 = vadd.f32 0.0, %v836
    %v838 = vpop.f32.mrf.mxu0
    %839 = vdwg.mxu0
    %840 = vmatpush.bf16.msra.mxu0 %v789
    %841 = vmatpush.bf16.msra.mxu0 %v786
    %842 = vmatpush.bf16.msra.mxu0 %v783
    %843 = vmatpush.bf16.msra.mxu0 %v780
    %844 = vmatpush.bf16.msra.mxu0 %v777
    %845 = vmatpush.bf16.msra.mxu0 %v774
    %846 = vmatpush.bf16.msra.mxu0 %v771
    %847 = vmatpush.bf16.msra.mxu0 %v768
    %848 = vmatmul.bf16.gmra.mxu0 %v653
    %v849 = vpop.f32.mrf.mxu0
    %v850 = vadd.f32 0.0, %v849
    %v851 = vpop.f32.mrf.mxu0
    %852 = vdwg.mxu0
    %v853 = vadd.f32 %v650, %v824
    %v854 = vxor.u32 %v853, 2147483648
    %v855 = vmul.f32 %v854, 1.442695
    %v856 = vpow.pop %v855
    %v857 = vadd.f32 %v856, 1.0
    %v858 = vrcp.pop %v857
    %v859 = vmul.f32 %v857, %v858
    %v860 = vsub.f32 1.0, %v859
    %v861 = vmul.f32 %v858, %v860
    %v862 = vadd.f32 %v858, %v861
    %vm863 = vweird.f32 %v857
    %vm864 = vweird.f32 %v858
    %vm865 = vmor %vm863, %vm864
    %v866 = vsel %vm865, %v858, %v862
    %v867 = vand.u32 2147483647, %v857
    %vm868 = vcmp.eq.f32.partialorder %v867, 8.507059e+37
    %v869 = vand.u32 %v857, 2147483648
    %v870 = vor.u32 1.1754944e-38, %v869
    %v871 = vsel %vm868, %v870, %v866
    %v872 = vmul.f32 1.0, %v871
    %v873 = vadd.f32 %v651, %v837
    %v874 = vxor.u32 %v873, 2147483648
    %v875 = vmul.f32 %v874, 1.442695
    %v876 = vpow.pop %v875
    %v877 = vadd.f32 %v876, 1.0
    %v878 = vrcp.pop %v877
    %v879 = vmul.f32 %v877, %v878
    %v880 = vsub.f32 1.0, %v879
    %v881 = vmul.f32 %v878, %v880
    %v882 = vadd.f32 %v878, %v881
    %vm883 = vweird.f32 %v877
    %vm884 = vweird.f32 %v878
    %vm885 = vmor %vm883, %vm884
    %v886 = vsel %vm885, %v878, %v882
    %v887 = vand.u32 2147483647, %v877
    %vm888 = vcmp.eq.f32.partialorder %v887, 8.507059e+37
    %v889 = vand.u32 %v877, 2147483648
    %v890 = vor.u32 1.1754944e-38, %v889
    %v891 = vsel %vm888, %v890, %v886
    %v892 = vmul.f32 1.0, %v891
    %v893 = vld [vmem:[%s5] sm:$0x1]
    %v895 = vperm.slane %v893, 0
    %v897 = vadd.f32 %v850, %v895
    %v898 = vmul.f32 %v872, %v897
    %v899 = vadd.f32 %v652, %v898
    %v900 = vtanh.pop %v899
    %v901 = vsub.f32 1.0, %v892
    %v902 = vmul.f32 %v901, %v900
    %v903 = vmul.f32 %v892, %v648
    %v904 = vadd.f32 %v902, %v903
    %s905 = sadd.s32 %s380, 1
    %p906 = scmp.lt.s32.totalorder %s905, 8
    %s907 = scalar_select %p906, 1, 0
    %s908 = scvt.s32.f32 %s907
    %v909 = vstv %s908
    %v910 = vmul.f32 %v909, %v904
    %s911 = ssub.f32 1.0, %s908
    %v912 = vstv %s911
    %v913 = vmul.f32 %v912, %v648
    %v914 = vadd.f32 %v910, %v913
    %915 = vst [vmem:[#allocation4] sm:$0xff] %v914
    %s916 = scalar_lea.vmem [#allocation3], 8
    %917 = vst [vmem:[%s916] sm:$0xff] %v914
    %v918 = vld [vmem:[#allocation4] sm:$0xff]
    %s919 = scalar_lea.vmem [#allocation2], 48
    %v920 = vld [vmem:[%s919] sm:$0xff]
    %v921 = vld [vmem:[%s919 + $0x8] sm:$0xff]
    %v922 = vld [vmem:[%s919 + $0x10] sm:$0xff]
    %v923 = vpack.c.bf16 %v918, %v918
    %v924 = vld [vmem:[#allocation7] sm:$0xff]
    %v925 = vld [vmem:[#allocation7 + $0x8] sm:$0xf]
    %v926 = vld [vmem:[#allocation7 + $0xc] sm:$0xff]
    %v927 = vld [vmem:[#allocation7 + $0x14] sm:$0xf]
    %v928 = vld [vmem:[#allocation7 + $0x18] sm:$0xff]
    %v929 = vld [vmem:[#allocation7 + $0x20] sm:$0xf]
    %v930 = vld [vmem:[#allocation7 + $0x24] sm:$0xff]
    %v931 = vld [vmem:[#allocation7 + $0x2c] sm:$0xf]
    %v932 = vld [vmem:[#allocation7 + $0x30] sm:$0xff]
    %v933 = vld [vmem:[#allocation7 + $0x38] sm:$0xf]
    %v934 = vld [vmem:[#allocation7 + $0x3c] sm:$0xff]
    %v935 = vld [vmem:[#allocation7 + $0x44] sm:$0xf]
    %v936 = vld [vmem:[#allocation7 + $0x48] sm:$0xff]
    %v937 = vld [vmem:[#allocation7 + $0x50] sm:$0xf]
    %v938 = vld [vmem:[#allocation7 + $0x54] sm:$0xff]
    %v939 = vld [vmem:[#allocation7 + $0x5c] sm:$0xf]
    %v940 = vld [vmem:[#allocation7 + $0x60] sm:$0xff]
    %v941 = vld [vmem:[#allocation7 + $0x68] sm:$0xf]
    %v942 = vld [vmem:[#allocation7 + $0x6c] sm:$0xff]
    %v943 = vld [vmem:[#allocation7 + $0x74] sm:$0xf]
    %v944 = vld [vmem:[#allocation7 + $0x78] sm:$0xff]
    %v945 = vld [vmem:[#allocation7 + $0x80] sm:$0xf]
    %v946 = vld [vmem:[#allocation7 + $0x84] sm:$0xff]
    %v947 = vld [vmem:[#allocation7 + $0x8c] sm:$0xf]
    %v948 = vld [vmem:[#allocation7 + $0x90] sm:$0xff]
    %v949 = vld [vmem:[#allocation7 + $0x98] sm:$0xf]
    %v950 = vld [vmem:[#allocation7 + $0x9c] sm:$0xff]
    %v951 = vld [vmem:[#allocation7 + $0xa4] sm:$0xf]
    %v952 = vld [vmem:[#allocation7 + $0xa8] sm:$0xff]
    %v953 = vld [vmem:[#allocation7 + $0xb0] sm:$0xf]
    %v954 = vld [vmem:[#allocation7 + $0xb4] sm:$0xff]
    %v955 = vld [vmem:[#allocation7 + $0xbc] sm:$0xf]
    %v988 = vunpack.c.l.b16 %v924
    %v989 = vunpack.c.h.b16 %v924
    %v990 = vunpack.c.l.b16 %v925
    %v991 = vunpack.c.l.b16 %v926
    %v992 = vunpack.c.h.b16 %v926
    %v993 = vunpack.c.l.b16 %v927
    %v994 = vunpack.c.l.b16 %v928
    %v995 = vunpack.c.h.b16 %v928
    %v996 = vunpack.c.l.b16 %v929
    %v997 = vunpack.c.l.b16 %v930
    %v998 = vunpack.c.h.b16 %v930
    %v999 = vunpack.c.l.b16 %v931
    %v1000 = vunpack.c.l.b16 %v932
    %v1001 = vunpack.c.h.b16 %v932
    %v1002 = vunpack.c.l.b16 %v933
    %v1003 = vunpack.c.l.b16 %v934
    %v1004 = vunpack.c.h.b16 %v934
    %v1005 = vunpack.c.l.b16 %v935
    %v1006 = vunpack.c.l.b16 %v936
    %v1007 = vunpack.c.h.b16 %v936
    %v1008 = vunpack.c.l.b16 %v937
    %v1009 = vunpack.c.l.b16 %v938
    %v1010 = vunpack.c.h.b16 %v938
    %v1011 = vunpack.c.l.b16 %v939
    %v1012 = vunpack.c.l.b16 %v940
    %v1013 = vunpack.c.h.b16 %v940
    %v1014 = vunpack.c.l.b16 %v941
    %v1015 = vunpack.c.l.b16 %v942
    %v1016 = vunpack.c.h.b16 %v942
    %v1017 = vunpack.c.l.b16 %v943
    %v1018 = vunpack.c.l.b16 %v944
    %v1019 = vunpack.c.h.b16 %v944
    %v1020 = vunpack.c.l.b16 %v945
    %v1021 = vunpack.c.l.b16 %v946
    %v1022 = vunpack.c.h.b16 %v946
    %v1023 = vunpack.c.l.b16 %v947
    %v1024 = vunpack.c.l.b16 %v948
    %v1025 = vunpack.c.h.b16 %v948
    %v1026 = vunpack.c.l.b16 %v949
    %v1027 = vunpack.c.l.b16 %v950
    %v1028 = vunpack.c.h.b16 %v950
    %v1029 = vunpack.c.l.b16 %v951
    %v1030 = vunpack.c.l.b16 %v952
    %v1031 = vunpack.c.h.b16 %v952
    %v1032 = vunpack.c.l.b16 %v953
    %v1033 = vunpack.c.l.b16 %v954
    %v1034 = vunpack.c.h.b16 %v954
    %v1035 = vunpack.c.l.b16 %v955
    %v1036 = vpack.c.b16 %v991, %v988
    %v1037 = vpack.c.b16 %v992, %v989
    %v1038 = vpack.c.b16 %v993, %v990
    %v1039 = vpack.c.b16 %v997, %v994
    %v1040 = vpack.c.b16 %v998, %v995
    %v1041 = vpack.c.b16 %v999, %v996
    %v1042 = vpack.c.b16 %v1003, %v1000
    %v1043 = vpack.c.b16 %v1004, %v1001
    %v1044 = vpack.c.b16 %v1005, %v1002
    %v1045 = vpack.c.b16 %v1009, %v1006
    %v1046 = vpack.c.b16 %v1010, %v1007
    %v1047 = vpack.c.b16 %v1011, %v1008
    %v1048 = vpack.c.b16 %v1015, %v1012
    %v1049 = vpack.c.b16 %v1016, %v1013
    %v1050 = vpack.c.b16 %v1017, %v1014
    %v1051 = vpack.c.b16 %v1021, %v1018
    %v1052 = vpack.c.b16 %v1022, %v1019
    %v1053 = vpack.c.b16 %v1023, %v1020
    %v1054 = vpack.c.b16 %v1027, %v1024
    %v1055 = vpack.c.b16 %v1028, %v1025
    %v1056 = vpack.c.b16 %v1029, %v1026
    %v1057 = vpack.c.b16 %v1033, %v1030
    %v1058 = vpack.c.b16 %v1034, %v1031
    %v1059 = vpack.c.b16 %v1035, %v1032
    %1084 = vmatpush.bf16.msra.mxu0 %v1057
    %1085 = vmatpush.bf16.msra.mxu0 %v1054
    %1086 = vmatpush.bf16.msra.mxu0 %v1051
    %1087 = vmatpush.bf16.msra.mxu0 %v1048
    %1088 = vmatpush.bf16.msra.mxu0 %v1045
    %1089 = vmatpush.bf16.msra.mxu0 %v1042
    %1090 = vmatpush.bf16.msra.mxu0 %v1039
    %1091 = vmatpush.bf16.msra.mxu0 %v1036
    %1092 = vmatmul.bf16.gmra.mxu0 %v923
    %v1093 = vpop.f32.mrf.mxu0
    %v1094 = vadd.f32 0.0, %v1093
    %v1095 = vpop.f32.mrf.mxu0
    %1096 = vdwg.mxu0
    %1097 = vmatpush.bf16.msra.mxu0 %v1058
    %1098 = vmatpush.bf16.msra.mxu0 %v1055
    %1099 = vmatpush.bf16.msra.mxu0 %v1052
    %1100 = vmatpush.bf16.msra.mxu0 %v1049
    %1101 = vmatpush.bf16.msra.mxu0 %v1046
    %1102 = vmatpush.bf16.msra.mxu0 %v1043
    %1103 = vmatpush.bf16.msra.mxu0 %v1040
    %1104 = vmatpush.bf16.msra.mxu0 %v1037
    %1105 = vmatmul.bf16.gmra.mxu0 %v923
    %v1106 = vpop.f32.mrf.mxu0
    %v1107 = vadd.f32 0.0, %v1106
    %v1108 = vpop.f32.mrf.mxu0
    %1109 = vdwg.mxu0
    %1110 = vmatpush.bf16.msra.mxu0 %v1059
    %1111 = vmatpush.bf16.msra.mxu0 %v1056
    %1112 = vmatpush.bf16.msra.mxu0 %v1053
    %1113 = vmatpush.bf16.msra.mxu0 %v1050
    %1114 = vmatpush.bf16.msra.mxu0 %v1047
    %1115 = vmatpush.bf16.msra.mxu0 %v1044
    %1116 = vmatpush.bf16.msra.mxu0 %v1041
    %1117 = vmatpush.bf16.msra.mxu0 %v1038
    %1118 = vmatmul.bf16.gmra.mxu0 %v923
    %v1119 = vpop.f32.mrf.mxu0
    %v1120 = vadd.f32 0.0, %v1119
    %v1121 = vpop.f32.mrf.mxu0
    %1122 = vdwg.mxu0
    %v1123 = vadd.f32 %v920, %v1094
    %v1124 = vxor.u32 %v1123, 2147483648
    %v1125 = vmul.f32 %v1124, 1.442695
    %v1126 = vpow.pop %v1125
    %v1127 = vadd.f32 %v1126, 1.0
    %v1128 = vrcp.pop %v1127
    %v1129 = vmul.f32 %v1127, %v1128
    %v1130 = vsub.f32 1.0, %v1129
    %v1131 = vmul.f32 %v1128, %v1130
    %v1132 = vadd.f32 %v1128, %v1131
    %vm1133 = vweird.f32 %v1127
    %vm1134 = vweird.f32 %v1128
    %vm1135 = vmor %vm1133, %vm1134
    %v1136 = vsel %vm1135, %v1128, %v1132
    %v1137 = vand.u32 2147483647, %v1127
    %vm1138 = vcmp.eq.f32.partialorder %v1137, 8.507059e+37
    %v1139 = vand.u32 %v1127, 2147483648
    %v1140 = vor.u32 1.1754944e-38, %v1139
    %v1141 = vsel %vm1138, %v1140, %v1136
    %v1142 = vmul.f32 1.0, %v1141
    %v1143 = vadd.f32 %v921, %v1107
    %v1144 = vxor.u32 %v1143, 2147483648
    %v1145 = vmul.f32 %v1144, 1.442695
    %v1146 = vpow.pop %v1145
    %v1147 = vadd.f32 %v1146, 1.0
    %v1148 = vrcp.pop %v1147
    %v1149 = vmul.f32 %v1147, %v1148
    %v1150 = vsub.f32 1.0, %v1149
    %v1151 = vmul.f32 %v1148, %v1150
    %v1152 = vadd.f32 %v1148, %v1151
    %vm1153 = vweird.f32 %v1147
    %vm1154 = vweird.f32 %v1148
    %vm1155 = vmor %vm1153, %vm1154
    %v1156 = vsel %vm1155, %v1148, %v1152
    %v1157 = vand.u32 2147483647, %v1147
    %vm1158 = vcmp.eq.f32.partialorder %v1157, 8.507059e+37
    %v1159 = vand.u32 %v1147, 2147483648
    %v1160 = vor.u32 1.1754944e-38, %v1159
    %v1161 = vsel %vm1158, %v1160, %v1156
    %v1162 = vmul.f32 1.0, %v1161
    %v1163 = vld [vmem:[%s5] sm:$0x1]
    %v1165 = vperm.slane %v1163, 0
    %v1167 = vadd.f32 %v1120, %v1165
    %v1168 = vmul.f32 %v1142, %v1167
    %v1169 = vadd.f32 %v922, %v1168
    %v1170 = vtanh.pop %v1169
    %v1171 = vsub.f32 1.0, %v1162
    %v1172 = vmul.f32 %v1171, %v1170
    %v1173 = vmul.f32 %v1162, %v918
    %v1174 = vadd.f32 %v1172, %v1173
    %s1175 = sadd.s32 %s380, 2
    %p1176 = scmp.lt.s32.totalorder %s1175, 8
    %s1177 = scalar_select %p1176, 1, 0
    %s1178 = scvt.s32.f32 %s1177
    %v1179 = vstv %s1178
    %v1180 = vmul.f32 %v1179, %v1174
    %s1181 = ssub.f32 1.0, %s1178
    %v1182 = vstv %s1181
    %v1183 = vmul.f32 %v1182, %v918
    %v1184 = vadd.f32 %v1180, %v1183
    %1185 = vst [vmem:[#allocation4] sm:$0xff] %v1184
    %s1186 = scalar_lea.vmem [#allocation3], 16
    %1187 = vst [vmem:[%s1186] sm:$0xff] %v1184
    %v1188 = vld [vmem:[#allocation4] sm:$0xff]
    %s1189 = scalar_lea.vmem [#allocation2], 72
    %v1190 = vld [vmem:[%s1189] sm:$0xff]
    %v1191 = vld [vmem:[%s1189 + $0x8] sm:$0xff]
    %v1192 = vld [vmem:[%s1189 + $0x10] sm:$0xff]
    %v1193 = vpack.c.bf16 %v1188, %v1188
    %v1194 = vld [vmem:[#allocation7] sm:$0xff]
    %v1195 = vld [vmem:[#allocation7 + $0x8] sm:$0xf]
    %v1196 = vld [vmem:[#allocation7 + $0xc] sm:$0xff]
    %v1197 = vld [vmem:[#allocation7 + $0x14] sm:$0xf]
    %v1198 = vld [vmem:[#allocation7 + $0x18] sm:$0xff]
    %v1199 = vld [vmem:[#allocation7 + $0x20] sm:$0xf]
    %v1200 = vld [vmem:[#allocation7 + $0x24] sm:$0xff]
    %v1201 = vld [vmem:[#allocation7 + $0x2c] sm:$0xf]
    %v1202 = vld [vmem:[#allocation7 + $0x30] sm:$0xff]
    %v1203 = vld [vmem:[#allocation7 + $0x38] sm:$0xf]
    %v1204 = vld [vmem:[#allocation7 + $0x3c] sm:$0xff]
    %v1205 = vld [vmem:[#allocation7 + $0x44] sm:$0xf]
    %v1206 = vld [vmem:[#allocation7 + $0x48] sm:$0xff]
    %v1207 = vld [vmem:[#allocation7 + $0x50] sm:$0xf]
    %v1208 = vld [vmem:[#allocation7 + $0x54] sm:$0xff]
    %v1209 = vld [vmem:[#allocation7 + $0x5c] sm:$0xf]
    %v1210 = vld [vmem:[#allocation7 + $0x60] sm:$0xff]
    %v1211 = vld [vmem:[#allocation7 + $0x68] sm:$0xf]
    %v1212 = vld [vmem:[#allocation7 + $0x6c] sm:$0xff]
    %v1213 = vld [vmem:[#allocation7 + $0x74] sm:$0xf]
    %v1214 = vld [vmem:[#allocation7 + $0x78] sm:$0xff]
    %v1215 = vld [vmem:[#allocation7 + $0x80] sm:$0xf]
    %v1216 = vld [vmem:[#allocation7 + $0x84] sm:$0xff]
    %v1217 = vld [vmem:[#allocation7 + $0x8c] sm:$0xf]
    %v1218 = vld [vmem:[#allocation7 + $0x90] sm:$0xff]
    %v1219 = vld [vmem:[#allocation7 + $0x98] sm:$0xf]
    %v1220 = vld [vmem:[#allocation7 + $0x9c] sm:$0xff]
    %v1221 = vld [vmem:[#allocation7 + $0xa4] sm:$0xf]
    %v1222 = vld [vmem:[#allocation7 + $0xa8] sm:$0xff]
    %v1223 = vld [vmem:[#allocation7 + $0xb0] sm:$0xf]
    %v1224 = vld [vmem:[#allocation7 + $0xb4] sm:$0xff]
    %v1225 = vld [vmem:[#allocation7 + $0xbc] sm:$0xf]
    %v1258 = vunpack.c.l.b16 %v1194
    %v1259 = vunpack.c.h.b16 %v1194
    %v1260 = vunpack.c.l.b16 %v1195
    %v1261 = vunpack.c.l.b16 %v1196
    %v1262 = vunpack.c.h.b16 %v1196
    %v1263 = vunpack.c.l.b16 %v1197
    %v1264 = vunpack.c.l.b16 %v1198
    %v1265 = vunpack.c.h.b16 %v1198
    %v1266 = vunpack.c.l.b16 %v1199
    %v1267 = vunpack.c.l.b16 %v1200
    %v1268 = vunpack.c.h.b16 %v1200
    %v1269 = vunpack.c.l.b16 %v1201
    %v1270 = vunpack.c.l.b16 %v1202
    %v1271 = vunpack.c.h.b16 %v1202
    %v1272 = vunpack.c.l.b16 %v1203
    %v1273 = vunpack.c.l.b16 %v1204
    %v1274 = vunpack.c.h.b16 %v1204
    %v1275 = vunpack.c.l.b16 %v1205
    %v1276 = vunpack.c.l.b16 %v1206
    %v1277 = vunpack.c.h.b16 %v1206
    %v1278 = vunpack.c.l.b16 %v1207
    %v1279 = vunpack.c.l.b16 %v1208
    %v1280 = vunpack.c.h.b16 %v1208
    %v1281 = vunpack.c.l.b16 %v1209
    %v1282 = vunpack.c.l.b16 %v1210
    %v1283 = vunpack.c.h.b16 %v1210
    %v1284 = vunpack.c.l.b16 %v1211
    %v1285 = vunpack.c.l.b16 %v1212
    %v1286 = vunpack.c.h.b16 %v1212
    %v1287 = vunpack.c.l.b16 %v1213
    %v1288 = vunpack.c.l.b16 %v1214
    %v1289 = vunpack.c.h.b16 %v1214
    %v1290 = vunpack.c.l.b16 %v1215
    %v1291 = vunpack.c.l.b16 %v1216
    %v1292 = vunpack.c.h.b16 %v1216
    %v1293 = vunpack.c.l.b16 %v1217
    %v1294 = vunpack.c.l.b16 %v1218
    %v1295 = vunpack.c.h.b16 %v1218
    %v1296 = vunpack.c.l.b16 %v1219
    %v1297 = vunpack.c.l.b16 %v1220
    %v1298 = vunpack.c.h.b16 %v1220
    %v1299 = vunpack.c.l.b16 %v1221
    %v1300 = vunpack.c.l.b16 %v1222
    %v1301 = vunpack.c.h.b16 %v1222
    %v1302 = vunpack.c.l.b16 %v1223
    %v1303 = vunpack.c.l.b16 %v1224
    %v1304 = vunpack.c.h.b16 %v1224
    %v1305 = vunpack.c.l.b16 %v1225
    %v1306 = vpack.c.b16 %v1261, %v1258
    %v1307 = vpack.c.b16 %v1262, %v1259
    %v1308 = vpack.c.b16 %v1263, %v1260
    %v1309 = vpack.c.b16 %v1267, %v1264
    %v1310 = vpack.c.b16 %v1268, %v1265
    %v1311 = vpack.c.b16 %v1269, %v1266
    %v1312 = vpack.c.b16 %v1273, %v1270
    %v1313 = vpack.c.b16 %v1274, %v1271
    %v1314 = vpack.c.b16 %v1275, %v1272
    %v1315 = vpack.c.b16 %v1279, %v1276
    %v1316 = vpack.c.b16 %v1280, %v1277
    %v1317 = vpack.c.b16 %v1281, %v1278
    %v1318 = vpack.c.b16 %v1285, %v1282
    %v1319 = vpack.c.b16 %v1286, %v1283
    %v1320 = vpack.c.b16 %v1287, %v1284
    %v1321 = vpack.c.b16 %v1291, %v1288
    %v1322 = vpack.c.b16 %v1292, %v1289
    %v1323 = vpack.c.b16 %v1293, %v1290
    %v1324 = vpack.c.b16 %v1297, %v1294
    %v1325 = vpack.c.b16 %v1298, %v1295
    %v1326 = vpack.c.b16 %v1299, %v1296
    %v1327 = vpack.c.b16 %v1303, %v1300
    %v1328 = vpack.c.b16 %v1304, %v1301
    %v1329 = vpack.c.b16 %v1305, %v1302
    %1354 = vmatpush.bf16.msra.mxu0 %v1327
    %1355 = vmatpush.bf16.msra.mxu0 %v1324
    %1356 = vmatpush.bf16.msra.mxu0 %v1321
    %1357 = vmatpush.bf16.msra.mxu0 %v1318
    %1358 = vmatpush.bf16.msra.mxu0 %v1315
    %1359 = vmatpush.bf16.msra.mxu0 %v1312
    %1360 = vmatpush.bf16.msra.mxu0 %v1309
    %1361 = vmatpush.bf16.msra.mxu0 %v1306
    %1362 = vmatmul.bf16.gmra.mxu0 %v1193
    %v1363 = vpop.f32.mrf.mxu0
    %v1364 = vadd.f32 0.0, %v1363
    %v1365 = vpop.f32.mrf.mxu0
    %1366 = vdwg.mxu0
    %1367 = vmatpush.bf16.msra.mxu0 %v1328
    %1368 = vmatpush.bf16.msra.mxu0 %v1325
    %1369 = vmatpush.bf16.msra.mxu0 %v1322
    %1370 = vmatpush.bf16.msra.mxu0 %v1319
    %1371 = vmatpush.bf16.msra.mxu0 %v1316
    %1372 = vmatpush.bf16.msra.mxu0 %v1313
    %1373 = vmatpush.bf16.msra.mxu0 %v1310
    %1374 = vmatpush.bf16.msra.mxu0 %v1307
    %1375 = vmatmul.bf16.gmra.mxu0 %v1193
    %v1376 = vpop.f32.mrf.mxu0
    %v1377 = vadd.f32 0.0, %v1376
    %v1378 = vpop.f32.mrf.mxu0
    %1379 = vdwg.mxu0
    %1380 = vmatpush.bf16.msra.mxu0 %v1329
    %1381 = vmatpush.bf16.msra.mxu0 %v1326
    %1382 = vmatpush.bf16.msra.mxu0 %v1323
    %1383 = vmatpush.bf16.msra.mxu0 %v1320
    %1384 = vmatpush.bf16.msra.mxu0 %v1317
    %1385 = vmatpush.bf16.msra.mxu0 %v1314
    %1386 = vmatpush.bf16.msra.mxu0 %v1311
    %1387 = vmatpush.bf16.msra.mxu0 %v1308
    %1388 = vmatmul.bf16.gmra.mxu0 %v1193
    %v1389 = vpop.f32.mrf.mxu0
    %v1390 = vadd.f32 0.0, %v1389
    %v1391 = vpop.f32.mrf.mxu0
    %1392 = vdwg.mxu0
    %v1393 = vadd.f32 %v1190, %v1364
    %v1394 = vxor.u32 %v1393, 2147483648
    %v1395 = vmul.f32 %v1394, 1.442695
    %v1396 = vpow.pop %v1395
    %v1397 = vadd.f32 %v1396, 1.0
    %v1398 = vrcp.pop %v1397
    %v1399 = vmul.f32 %v1397, %v1398
    %v1400 = vsub.f32 1.0, %v1399
    %v1401 = vmul.f32 %v1398, %v1400
    %v1402 = vadd.f32 %v1398, %v1401
    %vm1403 = vweird.f32 %v1397
    %vm1404 = vweird.f32 %v1398
    %vm1405 = vmor %vm1403, %vm1404
    %v1406 = vsel %vm1405, %v1398, %v1402
    %v1407 = vand.u32 2147483647, %v1397
    %vm1408 = vcmp.eq.f32.partialorder %v1407, 8.507059e+37
    %v1409 = vand.u32 %v1397, 2147483648
    %v1410 = vor.u32 1.1754944e-38, %v1409
    %v1411 = vsel %vm1408, %v1410, %v1406
    %v1412 = vmul.f32 1.0, %v1411
    %v1413 = vadd.f32 %v1191, %v1377
    %v1414 = vxor.u32 %v1413, 2147483648
    %v1415 = vmul.f32 %v1414, 1.442695
    %v1416 = vpow.pop %v1415
    %v1417 = vadd.f32 %v1416, 1.0
    %v1418 = vrcp.pop %v1417
    %v1419 = vmul.f32 %v1417, %v1418
    %v1420 = vsub.f32 1.0, %v1419
    %v1421 = vmul.f32 %v1418, %v1420
    %v1422 = vadd.f32 %v1418, %v1421
    %vm1423 = vweird.f32 %v1417
    %vm1424 = vweird.f32 %v1418
    %vm1425 = vmor %vm1423, %vm1424
    %v1426 = vsel %vm1425, %v1418, %v1422
    %v1427 = vand.u32 2147483647, %v1417
    %vm1428 = vcmp.eq.f32.partialorder %v1427, 8.507059e+37
    %v1429 = vand.u32 %v1417, 2147483648
    %v1430 = vor.u32 1.1754944e-38, %v1429
    %v1431 = vsel %vm1428, %v1430, %v1426
    %v1432 = vmul.f32 1.0, %v1431
    %v1433 = vld [vmem:[%s5] sm:$0x1]
    %v1435 = vperm.slane %v1433, 0
    %v1437 = vadd.f32 %v1390, %v1435
    %v1438 = vmul.f32 %v1412, %v1437
    %v1439 = vadd.f32 %v1192, %v1438
    %v1440 = vtanh.pop %v1439
    %v1441 = vsub.f32 1.0, %v1432
    %v1442 = vmul.f32 %v1441, %v1440
    %v1443 = vmul.f32 %v1432, %v1188
    %v1444 = vadd.f32 %v1442, %v1443
    %s1445 = sadd.s32 %s380, 3
    %p1446 = scmp.lt.s32.totalorder %s1445, 8
    %s1447 = scalar_select %p1446, 1, 0
    %s1448 = scvt.s32.f32 %s1447
    %v1449 = vstv %s1448
    %v1450 = vmul.f32 %v1449, %v1444
    %s1451 = ssub.f32 1.0, %s1448
    %v1452 = vstv %s1451
    %v1453 = vmul.f32 %v1452, %v1188
    %v1454 = vadd.f32 %v1450, %v1453
    %1455 = vst [vmem:[#allocation4] sm:$0xff] %v1454
    %s1456 = scalar_lea.vmem [#allocation3], 24
    %1457 = vst [vmem:[%s1456] sm:$0xff] %v1454
    %v1458 = vld [vmem:[#allocation4] sm:$0xff]
    %s1459 = scalar_lea.vmem [#allocation2], 96
    %v1460 = vld [vmem:[%s1459] sm:$0xff]
    %v1461 = vld [vmem:[%s1459 + $0x8] sm:$0xff]
    %v1462 = vld [vmem:[%s1459 + $0x10] sm:$0xff]
    %v1463 = vpack.c.bf16 %v1458, %v1458
    %v1464 = vld [vmem:[#allocation7] sm:$0xff]
    %v1465 = vld [vmem:[#allocation7 + $0x8] sm:$0xf]
    %v1466 = vld [vmem:[#allocation7 + $0xc] sm:$0xff]
    %v1467 = vld [vmem:[#allocation7 + $0x14] sm:$0xf]
    %v1468 = vld [vmem:[#allocation7 + $0x18] sm:$0xff]
    %v1469 = vld [vmem:[#allocation7 + $0x20] sm:$0xf]
    %v1470 = vld [vmem:[#allocation7 + $0x24] sm:$0xff]
    %v1471 = vld [vmem:[#allocation7 + $0x2c] sm:$0xf]
    %v1472 = vld [vmem:[#allocation7 + $0x30] sm:$0xff]
    %v1473 = vld [vmem:[#allocation7 + $0x38] sm:$0xf]
    %v1474 = vld [vmem:[#allocation7 + $0x3c] sm:$0xff]
    %v1475 = vld [vmem:[#allocation7 + $0x44] sm:$0xf]
    %v1476 = vld [vmem:[#allocation7 + $0x48] sm:$0xff]
    %v1477 = vld [vmem:[#allocation7 + $0x50] sm:$0xf]
    %v1478 = vld [vmem:[#allocation7 + $0x54] sm:$0xff]
    %v1479 = vld [vmem:[#allocation7 + $0x5c] sm:$0xf]
    %v1480 = vld [vmem:[#allocation7 + $0x60] sm:$0xff]
    %v1481 = vld [vmem:[#allocation7 + $0x68] sm:$0xf]
    %v1482 = vld [vmem:[#allocation7 + $0x6c] sm:$0xff]
    %v1483 = vld [vmem:[#allocation7 + $0x74] sm:$0xf]
    %v1484 = vld [vmem:[#allocation7 + $0x78] sm:$0xff]
    %v1485 = vld [vmem:[#allocation7 + $0x80] sm:$0xf]
    %v1486 = vld [vmem:[#allocation7 + $0x84] sm:$0xff]
    %v1487 = vld [vmem:[#allocation7 + $0x8c] sm:$0xf]
    %v1488 = vld [vmem:[#allocation7 + $0x90] sm:$0xff]
    %v1489 = vld [vmem:[#allocation7 + $0x98] sm:$0xf]
    %v1490 = vld [vmem:[#allocation7 + $0x9c] sm:$0xff]
    %v1491 = vld [vmem:[#allocation7 + $0xa4] sm:$0xf]
    %v1492 = vld [vmem:[#allocation7 + $0xa8] sm:$0xff]
    %v1493 = vld [vmem:[#allocation7 + $0xb0] sm:$0xf]
    %v1494 = vld [vmem:[#allocation7 + $0xb4] sm:$0xff]
    %v1495 = vld [vmem:[#allocation7 + $0xbc] sm:$0xf]
    %v1528 = vunpack.c.l.b16 %v1464
    %v1529 = vunpack.c.h.b16 %v1464
    %v1530 = vunpack.c.l.b16 %v1465
    %v1531 = vunpack.c.l.b16 %v1466
    %v1532 = vunpack.c.h.b16 %v1466
    %v1533 = vunpack.c.l.b16 %v1467
    %v1534 = vunpack.c.l.b16 %v1468
    %v1535 = vunpack.c.h.b16 %v1468
    %v1536 = vunpack.c.l.b16 %v1469
    %v1537 = vunpack.c.l.b16 %v1470
    %v1538 = vunpack.c.h.b16 %v1470
    %v1539 = vunpack.c.l.b16 %v1471
    %v1540 = vunpack.c.l.b16 %v1472
    %v1541 = vunpack.c.h.b16 %v1472
    %v1542 = vunpack.c.l.b16 %v1473
    %v1543 = vunpack.c.l.b16 %v1474
    %v1544 = vunpack.c.h.b16 %v1474
    %v1545 = vunpack.c.l.b16 %v1475
    %v1546 = vunpack.c.l.b16 %v1476
    %v1547 = vunpack.c.h.b16 %v1476
    %v1548 = vunpack.c.l.b16 %v1477
    %v1549 = vunpack.c.l.b16 %v1478
    %v1550 = vunpack.c.h.b16 %v1478
    %v1551 = vunpack.c.l.b16 %v1479
    %v1552 = vunpack.c.l.b16 %v1480
    %v1553 = vunpack.c.h.b16 %v1480
    %v1554 = vunpack.c.l.b16 %v1481
    %v1555 = vunpack.c.l.b16 %v1482
    %v1556 = vunpack.c.h.b16 %v1482
    %v1557 = vunpack.c.l.b16 %v1483
    %v1558 = vunpack.c.l.b16 %v1484
    %v1559 = vunpack.c.h.b16 %v1484
    %v1560 = vunpack.c.l.b16 %v1485
    %v1561 = vunpack.c.l.b16 %v1486
    %v1562 = vunpack.c.h.b16 %v1486
    %v1563 = vunpack.c.l.b16 %v1487
    %v1564 = vunpack.c.l.b16 %v1488
    %v1565 = vunpack.c.h.b16 %v1488
    %v1566 = vunpack.c.l.b16 %v1489
    %v1567 = vunpack.c.l.b16 %v1490
    %v1568 = vunpack.c.h.b16 %v1490
    %v1569 = vunpack.c.l.b16 %v1491
    %v1570 = vunpack.c.l.b16 %v1492
    %v1571 = vunpack.c.h.b16 %v1492
    %v1572 = vunpack.c.l.b16 %v1493
    %v1573 = vunpack.c.l.b16 %v1494
    %v1574 = vunpack.c.h.b16 %v1494
    %v1575 = vunpack.c.l.b16 %v1495
    %v1576 = vpack.c.b16 %v1531, %v1528
    %v1577 = vpack.c.b16 %v1532, %v1529
    %v1578 = vpack.c.b16 %v1533, %v1530
    %v1579 = vpack.c.b16 %v1537, %v1534
    %v1580 = vpack.c.b16 %v1538, %v1535
    %v1581 = vpack.c.b16 %v1539, %v1536
    %v1582 = vpack.c.b16 %v1543, %v1540
    %v1583 = vpack.c.b16 %v1544, %v1541
    %v1584 = vpack.c.b16 %v1545, %v1542
    %v1585 = vpack.c.b16 %v1549, %v1546
    %v1586 = vpack.c.b16 %v1550, %v1547
    %v1587 = vpack.c.b16 %v1551, %v1548
    %v1588 = vpack.c.b16 %v1555, %v1552
    %v1589 = vpack.c.b16 %v1556, %v1553
    %v1590 = vpack.c.b16 %v1557, %v1554
    %v1591 = vpack.c.b16 %v1561, %v1558
    %v1592 = vpack.c.b16 %v1562, %v1559
    %v1593 = vpack.c.b16 %v1563, %v1560
    %v1594 = vpack.c.b16 %v1567, %v1564
    %v1595 = vpack.c.b16 %v1568, %v1565
    %v1596 = vpack.c.b16 %v1569, %v1566
    %v1597 = vpack.c.b16 %v1573, %v1570
    %v1598 = vpack.c.b16 %v1574, %v1571
    %v1599 = vpack.c.b16 %v1575, %v1572
    %1624 = vmatpush.bf16.msra.mxu0 %v1597
    %1625 = vmatpush.bf16.msra.mxu0 %v1594
    %1626 = vmatpush.bf16.msra.mxu0 %v1591
    %1627 = vmatpush.bf16.msra.mxu0 %v1588
    %1628 = vmatpush.bf16.msra.mxu0 %v1585
    %1629 = vmatpush.bf16.msra.mxu0 %v1582
    %1630 = vmatpush.bf16.msra.mxu0 %v1579
    %1631 = vmatpush.bf16.msra.mxu0 %v1576
    %1632 = vmatmul.bf16.gmra.mxu0 %v1463
    %v1633 = vpop.f32.mrf.mxu0
    %v1634 = vadd.f32 0.0, %v1633
    %v1635 = vpop.f32.mrf.mxu0
    %1636 = vdwg.mxu0
    %1637 = vmatpush.bf16.msra.mxu0 %v1598
    %1638 = vmatpush.bf16.msra.mxu0 %v1595
    %1639 = vmatpush.bf16.msra.mxu0 %v1592
    %1640 = vmatpush.bf16.msra.mxu0 %v1589
    %1641 = vmatpush.bf16.msra.mxu0 %v1586
    %1642 = vmatpush.bf16.msra.mxu0 %v1583
    %1643 = vmatpush.bf16.msra.mxu0 %v1580
    %1644 = vmatpush.bf16.msra.mxu0 %v1577
    %1645 = vmatmul.bf16.gmra.mxu0 %v1463
    %v1646 = vpop.f32.mrf.mxu0
    %v1647 = vadd.f32 0.0, %v1646
    %v1648 = vpop.f32.mrf.mxu0
    %1649 = vdwg.mxu0
    %1650 = vmatpush.bf16.msra.mxu0 %v1599
    %1651 = vmatpush.bf16.msra.mxu0 %v1596
    %1652 = vmatpush.bf16.msra.mxu0 %v1593
    %1653 = vmatpush.bf16.msra.mxu0 %v1590
    %1654 = vmatpush.bf16.msra.mxu0 %v1587
    %1655 = vmatpush.bf16.msra.mxu0 %v1584
    %1656 = vmatpush.bf16.msra.mxu0 %v1581
    %1657 = vmatpush.bf16.msra.mxu0 %v1578
    %1658 = vmatmul.bf16.gmra.mxu0 %v1463
    %v1659 = vpop.f32.mrf.mxu0
    %v1660 = vadd.f32 0.0, %v1659
    %v1661 = vpop.f32.mrf.mxu0
    %1662 = vdwg.mxu0
    %v1663 = vadd.f32 %v1460, %v1634
    %v1664 = vxor.u32 %v1663, 2147483648
    %v1665 = vmul.f32 %v1664, 1.442695
    %v1666 = vpow.pop %v1665
    %v1667 = vadd.f32 %v1666, 1.0
    %v1668 = vrcp.pop %v1667
    %v1669 = vmul.f32 %v1667, %v1668
    %v1670 = vsub.f32 1.0, %v1669
    %v1671 = vmul.f32 %v1668, %v1670
    %v1672 = vadd.f32 %v1668, %v1671
    %vm1673 = vweird.f32 %v1667
    %vm1674 = vweird.f32 %v1668
    %vm1675 = vmor %vm1673, %vm1674
    %v1676 = vsel %vm1675, %v1668, %v1672
    %v1677 = vand.u32 2147483647, %v1667
    %vm1678 = vcmp.eq.f32.partialorder %v1677, 8.507059e+37
    %v1679 = vand.u32 %v1667, 2147483648
    %v1680 = vor.u32 1.1754944e-38, %v1679
    %v1681 = vsel %vm1678, %v1680, %v1676
    %v1682 = vmul.f32 1.0, %v1681
    %v1683 = vadd.f32 %v1461, %v1647
    %v1684 = vxor.u32 %v1683, 2147483648
    %v1685 = vmul.f32 %v1684, 1.442695
    %v1686 = vpow.pop %v1685
    %v1687 = vadd.f32 %v1686, 1.0
    %v1688 = vrcp.pop %v1687
    %v1689 = vmul.f32 %v1687, %v1688
    %v1690 = vsub.f32 1.0, %v1689
    %v1691 = vmul.f32 %v1688, %v1690
    %v1692 = vadd.f32 %v1688, %v1691
    %vm1693 = vweird.f32 %v1687
    %vm1694 = vweird.f32 %v1688
    %vm1695 = vmor %vm1693, %vm1694
    %v1696 = vsel %vm1695, %v1688, %v1692
    %v1697 = vand.u32 2147483647, %v1687
    %vm1698 = vcmp.eq.f32.partialorder %v1697, 8.507059e+37
    %v1699 = vand.u32 %v1687, 2147483648
    %v1700 = vor.u32 1.1754944e-38, %v1699
    %v1701 = vsel %vm1698, %v1700, %v1696
    %v1702 = vmul.f32 1.0, %v1701
    %v1703 = vld [vmem:[%s5] sm:$0x1]
    %v1705 = vperm.slane %v1703, 0
    %v1707 = vadd.f32 %v1660, %v1705
    %v1708 = vmul.f32 %v1682, %v1707
    %v1709 = vadd.f32 %v1462, %v1708
    %v1710 = vtanh.pop %v1709
    %v1711 = vsub.f32 1.0, %v1702
    %v1712 = vmul.f32 %v1711, %v1710
    %v1713 = vmul.f32 %v1702, %v1458
    %v1714 = vadd.f32 %v1712, %v1713
    %s1715 = sadd.s32 %s380, 4
    %p1716 = scmp.lt.s32.totalorder %s1715, 8
    %s1717 = scalar_select %p1716, 1, 0
    %s1718 = scvt.s32.f32 %s1717
    %v1719 = vstv %s1718
    %v1720 = vmul.f32 %v1719, %v1714
    %s1721 = ssub.f32 1.0, %s1718
    %v1722 = vstv %s1721
    %v1723 = vmul.f32 %v1722, %v1458
    %v1724 = vadd.f32 %v1720, %v1723
    %1725 = vst [vmem:[#allocation4] sm:$0xff] %v1724
    %s1726 = scalar_lea.vmem [#allocation3], 32
    %1727 = vst [vmem:[%s1726] sm:$0xff] %v1724
    %v1728 = vld [vmem:[#allocation4] sm:$0xff]
    %s1729 = scalar_lea.vmem [#allocation2], 120
    %v1730 = vld [vmem:[%s1729] sm:$0xff]
    %v1731 = vld [vmem:[%s1729 + $0x8] sm:$0xff]
    %v1732 = vld [vmem:[%s1729 + $0x10] sm:$0xff]
    %v1733 = vpack.c.bf16 %v1728, %v1728
    %v1734 = vld [vmem:[#allocation7] sm:$0xff]
    %v1735 = vld [vmem:[#allocation7 + $0x8] sm:$0xf]
    %v1736 = vld [vmem:[#allocation7 + $0xc] sm:$0xff]
    %v1737 = vld [vmem:[#allocation7 + $0x14] sm:$0xf]
    %v1738 = vld [vmem:[#allocation7 + $0x18] sm:$0xff]
    %v1739 = vld [vmem:[#allocation7 + $0x20] sm:$0xf]
    %v1740 = vld [vmem:[#allocation7 + $0x24] sm:$0xff]
    %v1741 = vld [vmem:[#allocation7 + $0x2c] sm:$0xf]
    %v1742 = vld [vmem:[#allocation7 + $0x30] sm:$0xff]
    %v1743 = vld [vmem:[#allocation7 + $0x38] sm:$0xf]
    %v1744 = vld [vmem:[#allocation7 + $0x3c] sm:$0xff]
    %v1745 = vld [vmem:[#allocation7 + $0x44] sm:$0xf]
    %v1746 = vld [vmem:[#allocation7 + $0x48] sm:$0xff]
    %v1747 = vld [vmem:[#allocation7 + $0x50] sm:$0xf]
    %v1748 = vld [vmem:[#allocation7 + $0x54] sm:$0xff]
    %v1749 = vld [vmem:[#allocation7 + $0x5c] sm:$0xf]
    %v1750 = vld [vmem:[#allocation7 + $0x60] sm:$0xff]
    %v1751 = vld [vmem:[#allocation7 + $0x68] sm:$0xf]
    %v1752 = vld [vmem:[#allocation7 + $0x6c] sm:$0xff]
    %v1753 = vld [vmem:[#allocation7 + $0x74] sm:$0xf]
    %v1754 = vld [vmem:[#allocation7 + $0x78] sm:$0xff]
    %v1755 = vld [vmem:[#allocation7 + $0x80] sm:$0xf]
    %v1756 = vld [vmem:[#allocation7 + $0x84] sm:$0xff]
    %v1757 = vld [vmem:[#allocation7 + $0x8c] sm:$0xf]
    %v1758 = vld [vmem:[#allocation7 + $0x90] sm:$0xff]
    %v1759 = vld [vmem:[#allocation7 + $0x98] sm:$0xf]
    %v1760 = vld [vmem:[#allocation7 + $0x9c] sm:$0xff]
    %v1761 = vld [vmem:[#allocation7 + $0xa4] sm:$0xf]
    %v1762 = vld [vmem:[#allocation7 + $0xa8] sm:$0xff]
    %v1763 = vld [vmem:[#allocation7 + $0xb0] sm:$0xf]
    %v1764 = vld [vmem:[#allocation7 + $0xb4] sm:$0xff]
    %v1765 = vld [vmem:[#allocation7 + $0xbc] sm:$0xf]
    %v1798 = vunpack.c.l.b16 %v1734
    %v1799 = vunpack.c.h.b16 %v1734
    %v1800 = vunpack.c.l.b16 %v1735
    %v1801 = vunpack.c.l.b16 %v1736
    %v1802 = vunpack.c.h.b16 %v1736
    %v1803 = vunpack.c.l.b16 %v1737
    %v1804 = vunpack.c.l.b16 %v1738
    %v1805 = vunpack.c.h.b16 %v1738
    %v1806 = vunpack.c.l.b16 %v1739
    %v1807 = vunpack.c.l.b16 %v1740
    %v1808 = vunpack.c.h.b16 %v1740
    %v1809 = vunpack.c.l.b16 %v1741
    %v1810 = vunpack.c.l.b16 %v1742
    %v1811 = vunpack.c.h.b16 %v1742
    %v1812 = vunpack.c.l.b16 %v1743
    %v1813 = vunpack.c.l.b16 %v1744
    %v1814 = vunpack.c.h.b16 %v1744
    %v1815 = vunpack.c.l.b16 %v1745
    %v1816 = vunpack.c.l.b16 %v1746
    %v1817 = vunpack.c.h.b16 %v1746
    %v1818 = vunpack.c.l.b16 %v1747
    %v1819 = vunpack.c.l.b16 %v1748
    %v1820 = vunpack.c.h.b16 %v1748
    %v1821 = vunpack.c.l.b16 %v1749
    %v1822 = vunpack.c.l.b16 %v1750
    %v1823 = vunpack.c.h.b16 %v1750
    %v1824 = vunpack.c.l.b16 %v1751
    %v1825 = vunpack.c.l.b16 %v1752
    %v1826 = vunpack.c.h.b16 %v1752
    %v1827 = vunpack.c.l.b16 %v1753
    %v1828 = vunpack.c.l.b16 %v1754
    %v1829 = vunpack.c.h.b16 %v1754
    %v1830 = vunpack.c.l.b16 %v1755
    %v1831 = vunpack.c.l.b16 %v1756
    %v1832 = vunpack.c.h.b16 %v1756
    %v1833 = vunpack.c.l.b16 %v1757
    %v1834 = vunpack.c.l.b16 %v1758
    %v1835 = vunpack.c.h.b16 %v1758
    %v1836 = vunpack.c.l.b16 %v1759
    %v1837 = vunpack.c.l.b16 %v1760
    %v1838 = vunpack.c.h.b16 %v1760
    %v1839 = vunpack.c.l.b16 %v1761
    %v1840 = vunpack.c.l.b16 %v1762
    %v1841 = vunpack.c.h.b16 %v1762
    %v1842 = vunpack.c.l.b16 %v1763
    %v1843 = vunpack.c.l.b16 %v1764
    %v1844 = vunpack.c.h.b16 %v1764
    %v1845 = vunpack.c.l.b16 %v1765
    %v1846 = vpack.c.b16 %v1801, %v1798
    %v1847 = vpack.c.b16 %v1802, %v1799
    %v1848 = vpack.c.b16 %v1803, %v1800
    %v1849 = vpack.c.b16 %v1807, %v1804
    %v1850 = vpack.c.b16 %v1808, %v1805
    %v1851 = vpack.c.b16 %v1809, %v1806
    %v1852 = vpack.c.b16 %v1813, %v1810
    %v1853 = vpack.c.b16 %v1814, %v1811
    %v1854 = vpack.c.b16 %v1815, %v1812
    %v1855 = vpack.c.b16 %v1819, %v1816
    %v1856 = vpack.c.b16 %v1820, %v1817
    %v1857 = vpack.c.b16 %v1821, %v1818
    %v1858 = vpack.c.b16 %v1825, %v1822
    %v1859 = vpack.c.b16 %v1826, %v1823
    %v1860 = vpack.c.b16 %v1827, %v1824
    %v1861 = vpack.c.b16 %v1831, %v1828
    %v1862 = vpack.c.b16 %v1832, %v1829
    %v1863 = vpack.c.b16 %v1833, %v1830
    %v1864 = vpack.c.b16 %v1837, %v1834
    %v1865 = vpack.c.b16 %v1838, %v1835
    %v1866 = vpack.c.b16 %v1839, %v1836
    %v1867 = vpack.c.b16 %v1843, %v1840
    %v1868 = vpack.c.b16 %v1844, %v1841
    %v1869 = vpack.c.b16 %v1845, %v1842
    %1894 = vmatpush.bf16.msra.mxu0 %v1867
    %1895 = vmatpush.bf16.msra.mxu0 %v1864
    %1896 = vmatpush.bf16.msra.mxu0 %v1861
    %1897 = vmatpush.bf16.msra.mxu0 %v1858
    %1898 = vmatpush.bf16.msra.mxu0 %v1855
    %1899 = vmatpush.bf16.msra.mxu0 %v1852
    %1900 = vmatpush.bf16.msra.mxu0 %v1849
    %1901 = vmatpush.bf16.msra.mxu0 %v1846
    %1902 = vmatmul.bf16.gmra.mxu0 %v1733
    %v1903 = vpop.f32.mrf.mxu0
    %v1904 = vadd.f32 0.0, %v1903
    %v1905 = vpop.f32.mrf.mxu0
    %1906 = vdwg.mxu0
    %1907 = vmatpush.bf16.msra.mxu0 %v1868
    %1908 = vmatpush.bf16.msra.mxu0 %v1865
    %1909 = vmatpush.bf16.msra.mxu0 %v1862
    %1910 = vmatpush.bf16.msra.mxu0 %v1859
    %1911 = vmatpush.bf16.msra.mxu0 %v1856
    %1912 = vmatpush.bf16.msra.mxu0 %v1853
    %1913 = vmatpush.bf16.msra.mxu0 %v1850
    %1914 = vmatpush.bf16.msra.mxu0 %v1847
    %1915 = vmatmul.bf16.gmra.mxu0 %v1733
    %v1916 = vpop.f32.mrf.mxu0
    %v1917 = vadd.f32 0.0, %v1916
    %v1918 = vpop.f32.mrf.mxu0
    %1919 = vdwg.mxu0
    %1920 = vmatpush.bf16.msra.mxu0 %v1869
    %1921 = vmatpush.bf16.msra.mxu0 %v1866
    %1922 = vmatpush.bf16.msra.mxu0 %v1863
    %1923 = vmatpush.bf16.msra.mxu0 %v1860
    %1924 = vmatpush.bf16.msra.mxu0 %v1857
    %1925 = vmatpush.bf16.msra.mxu0 %v1854
    %1926 = vmatpush.bf16.msra.mxu0 %v1851
    %1927 = vmatpush.bf16.msra.mxu0 %v1848
    %1928 = vmatmul.bf16.gmra.mxu0 %v1733
    %v1929 = vpop.f32.mrf.mxu0
    %v1930 = vadd.f32 0.0, %v1929
    %v1931 = vpop.f32.mrf.mxu0
    %1932 = vdwg.mxu0
    %v1933 = vadd.f32 %v1730, %v1904
    %v1934 = vxor.u32 %v1933, 2147483648
    %v1935 = vmul.f32 %v1934, 1.442695
    %v1936 = vpow.pop %v1935
    %v1937 = vadd.f32 %v1936, 1.0
    %v1938 = vrcp.pop %v1937
    %v1939 = vmul.f32 %v1937, %v1938
    %v1940 = vsub.f32 1.0, %v1939
    %v1941 = vmul.f32 %v1938, %v1940
    %v1942 = vadd.f32 %v1938, %v1941
    %vm1943 = vweird.f32 %v1937
    %vm1944 = vweird.f32 %v1938
    %vm1945 = vmor %vm1943, %vm1944
    %v1946 = vsel %vm1945, %v1938, %v1942
    %v1947 = vand.u32 2147483647, %v1937
    %vm1948 = vcmp.eq.f32.partialorder %v1947, 8.507059e+37
    %v1949 = vand.u32 %v1937, 2147483648
    %v1950 = vor.u32 1.1754944e-38, %v1949
    %v1951 = vsel %vm1948, %v1950, %v1946
    %v1952 = vmul.f32 1.0, %v1951
    %v1953 = vadd.f32 %v1731, %v1917
    %v1954 = vxor.u32 %v1953, 2147483648
    %v1955 = vmul.f32 %v1954, 1.442695
    %v1956 = vpow.pop %v1955
    %v1957 = vadd.f32 %v1956, 1.0
    %v1958 = vrcp.pop %v1957
    %v1959 = vmul.f32 %v1957, %v1958
    %v1960 = vsub.f32 1.0, %v1959
    %v1961 = vmul.f32 %v1958, %v1960
    %v1962 = vadd.f32 %v1958, %v1961
    %vm1963 = vweird.f32 %v1957
    %vm1964 = vweird.f32 %v1958
    %vm1965 = vmor %vm1963, %vm1964
    %v1966 = vsel %vm1965, %v1958, %v1962
    %v1967 = vand.u32 2147483647, %v1957
    %vm1968 = vcmp.eq.f32.partialorder %v1967, 8.507059e+37
    %v1969 = vand.u32 %v1957, 2147483648
    %v1970 = vor.u32 1.1754944e-38, %v1969
    %v1971 = vsel %vm1968, %v1970, %v1966
    %v1972 = vmul.f32 1.0, %v1971
    %v1973 = vld [vmem:[%s5] sm:$0x1]
    %v1975 = vperm.slane %v1973, 0
    %v1977 = vadd.f32 %v1930, %v1975
    %v1978 = vmul.f32 %v1952, %v1977
    %v1979 = vadd.f32 %v1732, %v1978
    %v1980 = vtanh.pop %v1979
    %v1981 = vsub.f32 1.0, %v1972
    %v1982 = vmul.f32 %v1981, %v1980
    %v1983 = vmul.f32 %v1972, %v1728
    %v1984 = vadd.f32 %v1982, %v1983
    %s1985 = sadd.s32 %s380, 5
    %p1986 = scmp.lt.s32.totalorder %s1985, 8
    %s1987 = scalar_select %p1986, 1, 0
    %s1988 = scvt.s32.f32 %s1987
    %v1989 = vstv %s1988
    %v1990 = vmul.f32 %v1989, %v1984
    %s1991 = ssub.f32 1.0, %s1988
    %v1992 = vstv %s1991
    %v1993 = vmul.f32 %v1992, %v1728
    %v1994 = vadd.f32 %v1990, %v1993
    %1995 = vst [vmem:[#allocation4] sm:$0xff] %v1994
    %s1996 = scalar_lea.vmem [#allocation3], 40
    %1997 = vst [vmem:[%s1996] sm:$0xff] %v1994
    %v1998 = vld [vmem:[#allocation4] sm:$0xff]
    %s1999 = scalar_lea.vmem [#allocation2], 144
    %v2000 = vld [vmem:[%s1999] sm:$0xff]
    %v2001 = vld [vmem:[%s1999 + $0x8] sm:$0xff]
    %v2002 = vld [vmem:[%s1999 + $0x10] sm:$0xff]
    %v2003 = vpack.c.bf16 %v1998, %v1998
    %v2004 = vld [vmem:[#allocation7] sm:$0xff]
    %v2005 = vld [vmem:[#allocation7 + $0x8] sm:$0xf]
    %v2006 = vld [vmem:[#allocation7 + $0xc] sm:$0xff]
    %v2007 = vld [vmem:[#allocation7 + $0x14] sm:$0xf]
    %v2008 = vld [vmem:[#allocation7 + $0x18] sm:$0xff]
    %v2009 = vld [vmem:[#allocation7 + $0x20] sm:$0xf]
    %v2010 = vld [vmem:[#allocation7 + $0x24] sm:$0xff]
    %v2011 = vld [vmem:[#allocation7 + $0x2c] sm:$0xf]
    %v2012 = vld [vmem:[#allocation7 + $0x30] sm:$0xff]
    %v2013 = vld [vmem:[#allocation7 + $0x38] sm:$0xf]
    %v2014 = vld [vmem:[#allocation7 + $0x3c] sm:$0xff]
    %v2015 = vld [vmem:[#allocation7 + $0x44] sm:$0xf]
    %v2016 = vld [vmem:[#allocation7 + $0x48] sm:$0xff]
    %v2017 = vld [vmem:[#allocation7 + $0x50] sm:$0xf]
    %v2018 = vld [vmem:[#allocation7 + $0x54] sm:$0xff]
    %v2019 = vld [vmem:[#allocation7 + $0x5c] sm:$0xf]
    %v2020 = vld [vmem:[#allocation7 + $0x60] sm:$0xff]
    %v2021 = vld [vmem:[#allocation7 + $0x68] sm:$0xf]
    %v2022 = vld [vmem:[#allocation7 + $0x6c] sm:$0xff]
    %v2023 = vld [vmem:[#allocation7 + $0x74] sm:$0xf]
    %v2024 = vld [vmem:[#allocation7 + $0x78] sm:$0xff]
    %v2025 = vld [vmem:[#allocation7 + $0x80] sm:$0xf]
    %v2026 = vld [vmem:[#allocation7 + $0x84] sm:$0xff]
    %v2027 = vld [vmem:[#allocation7 + $0x8c] sm:$0xf]
    %v2028 = vld [vmem:[#allocation7 + $0x90] sm:$0xff]
    %v2029 = vld [vmem:[#allocation7 + $0x98] sm:$0xf]
    %v2030 = vld [vmem:[#allocation7 + $0x9c] sm:$0xff]
    %v2031 = vld [vmem:[#allocation7 + $0xa4] sm:$0xf]
    %v2032 = vld [vmem:[#allocation7 + $0xa8] sm:$0xff]
    %v2033 = vld [vmem:[#allocation7 + $0xb0] sm:$0xf]
    %v2034 = vld [vmem:[#allocation7 + $0xb4] sm:$0xff]
    %v2035 = vld [vmem:[#allocation7 + $0xbc] sm:$0xf]
    %v2068 = vunpack.c.l.b16 %v2004
    %v2069 = vunpack.c.h.b16 %v2004
    %v2070 = vunpack.c.l.b16 %v2005
    %v2071 = vunpack.c.l.b16 %v2006
    %v2072 = vunpack.c.h.b16 %v2006
    %v2073 = vunpack.c.l.b16 %v2007
    %v2074 = vunpack.c.l.b16 %v2008
    %v2075 = vunpack.c.h.b16 %v2008
    %v2076 = vunpack.c.l.b16 %v2009
    %v2077 = vunpack.c.l.b16 %v2010
    %v2078 = vunpack.c.h.b16 %v2010
    %v2079 = vunpack.c.l.b16 %v2011
    %v2080 = vunpack.c.l.b16 %v2012
    %v2081 = vunpack.c.h.b16 %v2012
    %v2082 = vunpack.c.l.b16 %v2013
    %v2083 = vunpack.c.l.b16 %v2014
    %v2084 = vunpack.c.h.b16 %v2014
    %v2085 = vunpack.c.l.b16 %v2015
    %v2086 = vunpack.c.l.b16 %v2016
    %v2087 = vunpack.c.h.b16 %v2016
    %v2088 = vunpack.c.l.b16 %v2017
    %v2089 = vunpack.c.l.b16 %v2018
    %v2090 = vunpack.c.h.b16 %v2018
    %v2091 = vunpack.c.l.b16 %v2019
    %v2092 = vunpack.c.l.b16 %v2020
    %v2093 = vunpack.c.h.b16 %v2020
    %v2094 = vunpack.c.l.b16 %v2021
    %v2095 = vunpack.c.l.b16 %v2022
    %v2096 = vunpack.c.h.b16 %v2022
    %v2097 = vunpack.c.l.b16 %v2023
    %v2098 = vunpack.c.l.b16 %v2024
    %v2099 = vunpack.c.h.b16 %v2024
    %v2100 = vunpack.c.l.b16 %v2025
    %v2101 = vunpack.c.l.b16 %v2026
    %v2102 = vunpack.c.h.b16 %v2026
    %v2103 = vunpack.c.l.b16 %v2027
    %v2104 = vunpack.c.l.b16 %v2028
    %v2105 = vunpack.c.h.b16 %v2028
    %v2106 = vunpack.c.l.b16 %v2029
    %v2107 = vunpack.c.l.b16 %v2030
    %v2108 = vunpack.c.h.b16 %v2030
    %v2109 = vunpack.c.l.b16 %v2031
    %v2110 = vunpack.c.l.b16 %v2032
    %v2111 = vunpack.c.h.b16 %v2032
    %v2112 = vunpack.c.l.b16 %v2033
    %v2113 = vunpack.c.l.b16 %v2034
    %v2114 = vunpack.c.h.b16 %v2034
    %v2115 = vunpack.c.l.b16 %v2035
    %v2116 = vpack.c.b16 %v2071, %v2068
    %v2117 = vpack.c.b16 %v2072, %v2069
    %v2118 = vpack.c.b16 %v2073, %v2070
    %v2119 = vpack.c.b16 %v2077, %v2074
    %v2120 = vpack.c.b16 %v2078, %v2075
    %v2121 = vpack.c.b16 %v2079, %v2076
    %v2122 = vpack.c.b16 %v2083, %v2080
    %v2123 = vpack.c.b16 %v2084, %v2081
    %v2124 = vpack.c.b16 %v2085, %v2082
    %v2125 = vpack.c.b16 %v2089, %v2086
    %v2126 = vpack.c.b16 %v2090, %v2087
    %v2127 = vpack.c.b16 %v2091, %v2088
    %v2128 = vpack.c.b16 %v2095, %v2092
    %v2129 = vpack.c.b16 %v2096, %v2093
    %v2130 = vpack.c.b16 %v2097, %v2094
    %v2131 = vpack.c.b16 %v2101, %v2098
    %v2132 = vpack.c.b16 %v2102, %v2099
    %v2133 = vpack.c.b16 %v2103, %v2100
    %v2134 = vpack.c.b16 %v2107, %v2104
    %v2135 = vpack.c.b16 %v2108, %v2105
    %v2136 = vpack.c.b16 %v2109, %v2106
    %v2137 = vpack.c.b16 %v2113, %v2110
    %v2138 = vpack.c.b16 %v2114, %v2111
    %v2139 = vpack.c.b16 %v2115, %v2112
    %2164 = vmatpush.bf16.msra.mxu0 %v2137
    %2165 = vmatpush.bf16.msra.mxu0 %v2134
    %2166 = vmatpush.bf16.msra.mxu0 %v2131
    %2167 = vmatpush.bf16.msra.mxu0 %v2128
    %2168 = vmatpush.bf16.msra.mxu0 %v2125
    %2169 = vmatpush.bf16.msra.mxu0 %v2122
    %2170 = vmatpush.bf16.msra.mxu0 %v2119
    %2171 = vmatpush.bf16.msra.mxu0 %v2116
    %2172 = vmatmul.bf16.gmra.mxu0 %v2003
    %v2173 = vpop.f32.mrf.mxu0
    %v2174 = vadd.f32 0.0, %v2173
    %v2175 = vpop.f32.mrf.mxu0
    %2176 = vdwg.mxu0
    %2177 = vmatpush.bf16.msra.mxu0 %v2138
    %2178 = vmatpush.bf16.msra.mxu0 %v2135
    %2179 = vmatpush.bf16.msra.mxu0 %v2132
    %2180 = vmatpush.bf16.msra.mxu0 %v2129
    %2181 = vmatpush.bf16.msra.mxu0 %v2126
    %2182 = vmatpush.bf16.msra.mxu0 %v2123
    %2183 = vmatpush.bf16.msra.mxu0 %v2120
    %2184 = vmatpush.bf16.msra.mxu0 %v2117
    %2185 = vmatmul.bf16.gmra.mxu0 %v2003
    %v2186 = vpop.f32.mrf.mxu0
    %v2187 = vadd.f32 0.0, %v2186
    %v2188 = vpop.f32.mrf.mxu0
    %2189 = vdwg.mxu0
    %2190 = vmatpush.bf16.msra.mxu0 %v2139
    %2191 = vmatpush.bf16.msra.mxu0 %v2136
    %2192 = vmatpush.bf16.msra.mxu0 %v2133
    %2193 = vmatpush.bf16.msra.mxu0 %v2130
    %2194 = vmatpush.bf16.msra.mxu0 %v2127
    %2195 = vmatpush.bf16.msra.mxu0 %v2124
    %2196 = vmatpush.bf16.msra.mxu0 %v2121
    %2197 = vmatpush.bf16.msra.mxu0 %v2118
    %2198 = vmatmul.bf16.gmra.mxu0 %v2003
    %v2199 = vpop.f32.mrf.mxu0
    %v2200 = vadd.f32 0.0, %v2199
    %v2201 = vpop.f32.mrf.mxu0
    %2202 = vdwg.mxu0
    %v2203 = vadd.f32 %v2000, %v2174
    %v2204 = vxor.u32 %v2203, 2147483648
    %v2205 = vmul.f32 %v2204, 1.442695
    %v2206 = vpow.pop %v2205
    %v2207 = vadd.f32 %v2206, 1.0
    %v2208 = vrcp.pop %v2207
    %v2209 = vmul.f32 %v2207, %v2208
    %v2210 = vsub.f32 1.0, %v2209
    %v2211 = vmul.f32 %v2208, %v2210
    %v2212 = vadd.f32 %v2208, %v2211
    %vm2213 = vweird.f32 %v2207
    %vm2214 = vweird.f32 %v2208
    %vm2215 = vmor %vm2213, %vm2214
    %v2216 = vsel %vm2215, %v2208, %v2212
    %v2217 = vand.u32 2147483647, %v2207
    %vm2218 = vcmp.eq.f32.partialorder %v2217, 8.507059e+37
    %v2219 = vand.u32 %v2207, 2147483648
    %v2220 = vor.u32 1.1754944e-38, %v2219
    %v2221 = vsel %vm2218, %v2220, %v2216
    %v2222 = vmul.f32 1.0, %v2221
    %v2223 = vadd.f32 %v2001, %v2187
    %v2224 = vxor.u32 %v2223, 2147483648
    %v2225 = vmul.f32 %v2224, 1.442695
    %v2226 = vpow.pop %v2225
    %v2227 = vadd.f32 %v2226, 1.0
    %v2228 = vrcp.pop %v2227
    %v2229 = vmul.f32 %v2227, %v2228
    %v2230 = vsub.f32 1.0, %v2229
    %v2231 = vmul.f32 %v2228, %v2230
    %v2232 = vadd.f32 %v2228, %v2231
    %vm2233 = vweird.f32 %v2227
    %vm2234 = vweird.f32 %v2228
    %vm2235 = vmor %vm2233, %vm2234
    %v2236 = vsel %vm2235, %v2228, %v2232
    %v2237 = vand.u32 2147483647, %v2227
    %vm2238 = vcmp.eq.f32.partialorder %v2237, 8.507059e+37
    %v2239 = vand.u32 %v2227, 2147483648
    %v2240 = vor.u32 1.1754944e-38, %v2239
    %v2241 = vsel %vm2238, %v2240, %v2236
    %v2242 = vmul.f32 1.0, %v2241
    %v2243 = vld [vmem:[%s5] sm:$0x1]
    %v2245 = vperm.slane %v2243, 0
    %v2247 = vadd.f32 %v2200, %v2245
    %v2248 = vmul.f32 %v2222, %v2247
    %v2249 = vadd.f32 %v2002, %v2248
    %v2250 = vtanh.pop %v2249
    %v2251 = vsub.f32 1.0, %v2242
    %v2252 = vmul.f32 %v2251, %v2250
    %v2253 = vmul.f32 %v2242, %v1998
    %v2254 = vadd.f32 %v2252, %v2253
    %s2255 = sadd.s32 %s380, 6
    %p2256 = scmp.lt.s32.totalorder %s2255, 8
    %s2257 = scalar_select %p2256, 1, 0
    %s2258 = scvt.s32.f32 %s2257
    %v2259 = vstv %s2258
    %v2260 = vmul.f32 %v2259, %v2254
    %s2261 = ssub.f32 1.0, %s2258
    %v2262 = vstv %s2261
    %v2263 = vmul.f32 %v2262, %v1998
    %v2264 = vadd.f32 %v2260, %v2263
    %2265 = vst [vmem:[#allocation4] sm:$0xff] %v2264
    %s2266 = scalar_lea.vmem [#allocation3], 48
    %2267 = vst [vmem:[%s2266] sm:$0xff] %v2264
    %v2268 = vld [vmem:[#allocation4] sm:$0xff]
    %s2269 = scalar_lea.vmem [#allocation2], 168
    %v2270 = vld [vmem:[%s2269] sm:$0xff]
    %v2271 = vld [vmem:[%s2269 + $0x8] sm:$0xff]
    %v2272 = vld [vmem:[%s2269 + $0x10] sm:$0xff]
    %v2273 = vpack.c.bf16 %v2268, %v2268
    %v2274 = vld [vmem:[#allocation7] sm:$0xff]
    %v2275 = vld [vmem:[#allocation7 + $0x8] sm:$0xf]
    %v2276 = vld [vmem:[#allocation7 + $0xc] sm:$0xff]
    %v2277 = vld [vmem:[#allocation7 + $0x14] sm:$0xf]
    %v2278 = vld [vmem:[#allocation7 + $0x18] sm:$0xff]
    %v2279 = vld [vmem:[#allocation7 + $0x20] sm:$0xf]
    %v2280 = vld [vmem:[#allocation7 + $0x24] sm:$0xff]
    %v2281 = vld [vmem:[#allocation7 + $0x2c] sm:$0xf]
    %v2282 = vld [vmem:[#allocation7 + $0x30] sm:$0xff]
    %v2283 = vld [vmem:[#allocation7 + $0x38] sm:$0xf]
    %v2284 = vld [vmem:[#allocation7 + $0x3c] sm:$0xff]
    %v2285 = vld [vmem:[#allocation7 + $0x44] sm:$0xf]
    %v2286 = vld [vmem:[#allocation7 + $0x48] sm:$0xff]
    %v2287 = vld [vmem:[#allocation7 + $0x50] sm:$0xf]
    %v2288 = vld [vmem:[#allocation7 + $0x54] sm:$0xff]
    %v2289 = vld [vmem:[#allocation7 + $0x5c] sm:$0xf]
    %v2290 = vld [vmem:[#allocation7 + $0x60] sm:$0xff]
    %v2291 = vld [vmem:[#allocation7 + $0x68] sm:$0xf]
    %v2292 = vld [vmem:[#allocation7 + $0x6c] sm:$0xff]
    %v2293 = vld [vmem:[#allocation7 + $0x74] sm:$0xf]
    %v2294 = vld [vmem:[#allocation7 + $0x78] sm:$0xff]
    %v2295 = vld [vmem:[#allocation7 + $0x80] sm:$0xf]
    %v2296 = vld [vmem:[#allocation7 + $0x84] sm:$0xff]
    %v2297 = vld [vmem:[#allocation7 + $0x8c] sm:$0xf]
    %v2298 = vld [vmem:[#allocation7 + $0x90] sm:$0xff]
    %v2299 = vld [vmem:[#allocation7 + $0x98] sm:$0xf]
    %v2300 = vld [vmem:[#allocation7 + $0x9c] sm:$0xff]
    %v2301 = vld [vmem:[#allocation7 + $0xa4] sm:$0xf]
    %v2302 = vld [vmem:[#allocation7 + $0xa8] sm:$0xff]
    %v2303 = vld [vmem:[#allocation7 + $0xb0] sm:$0xf]
    %v2304 = vld [vmem:[#allocation7 + $0xb4] sm:$0xff]
    %v2305 = vld [vmem:[#allocation7 + $0xbc] sm:$0xf]
    %v2338 = vunpack.c.l.b16 %v2274
    %v2339 = vunpack.c.h.b16 %v2274
    %v2340 = vunpack.c.l.b16 %v2275
    %v2341 = vunpack.c.l.b16 %v2276
    %v2342 = vunpack.c.h.b16 %v2276
    %v2343 = vunpack.c.l.b16 %v2277
    %v2344 = vunpack.c.l.b16 %v2278
    %v2345 = vunpack.c.h.b16 %v2278
    %v2346 = vunpack.c.l.b16 %v2279
    %v2347 = vunpack.c.l.b16 %v2280
    %v2348 = vunpack.c.h.b16 %v2280
    %v2349 = vunpack.c.l.b16 %v2281
    %v2350 = vunpack.c.l.b16 %v2282
    %v2351 = vunpack.c.h.b16 %v2282
    %v2352 = vunpack.c.l.b16 %v2283
    %v2353 = vunpack.c.l.b16 %v2284
    %v2354 = vunpack.c.h.b16 %v2284
    %v2355 = vunpack.c.l.b16 %v2285
    %v2356 = vunpack.c.l.b16 %v2286
    %v2357 = vunpack.c.h.b16 %v2286
    %v2358 = vunpack.c.l.b16 %v2287
    %v2359 = vunpack.c.l.b16 %v2288
    %v2360 = vunpack.c.h.b16 %v2288
    %v2361 = vunpack.c.l.b16 %v2289
    %v2362 = vunpack.c.l.b16 %v2290
    %v2363 = vunpack.c.h.b16 %v2290
    %v2364 = vunpack.c.l.b16 %v2291
    %v2365 = vunpack.c.l.b16 %v2292
    %v2366 = vunpack.c.h.b16 %v2292
    %v2367 = vunpack.c.l.b16 %v2293
    %v2368 = vunpack.c.l.b16 %v2294
    %v2369 = vunpack.c.h.b16 %v2294
    %v2370 = vunpack.c.l.b16 %v2295
    %v2371 = vunpack.c.l.b16 %v2296
    %v2372 = vunpack.c.h.b16 %v2296
    %v2373 = vunpack.c.l.b16 %v2297
    %v2374 = vunpack.c.l.b16 %v2298
    %v2375 = vunpack.c.h.b16 %v2298
    %v2376 = vunpack.c.l.b16 %v2299
    %v2377 = vunpack.c.l.b16 %v2300
    %v2378 = vunpack.c.h.b16 %v2300
    %v2379 = vunpack.c.l.b16 %v2301
    %v2380 = vunpack.c.l.b16 %v2302
    %v2381 = vunpack.c.h.b16 %v2302
    %v2382 = vunpack.c.l.b16 %v2303
    %v2383 = vunpack.c.l.b16 %v2304
    %v2384 = vunpack.c.h.b16 %v2304
    %v2385 = vunpack.c.l.b16 %v2305
    %v2386 = vpack.c.b16 %v2341, %v2338
    %v2387 = vpack.c.b16 %v2342, %v2339
    %v2388 = vpack.c.b16 %v2343, %v2340
    %v2389 = vpack.c.b16 %v2347, %v2344
    %v2390 = vpack.c.b16 %v2348, %v2345
    %v2391 = vpack.c.b16 %v2349, %v2346
    %v2392 = vpack.c.b16 %v2353, %v2350
    %v2393 = vpack.c.b16 %v2354, %v2351
    %v2394 = vpack.c.b16 %v2355, %v2352
    %v2395 = vpack.c.b16 %v2359, %v2356
    %v2396 = vpack.c.b16 %v2360, %v2357
    %v2397 = vpack.c.b16 %v2361, %v2358
    %v2398 = vpack.c.b16 %v2365, %v2362
    %v2399 = vpack.c.b16 %v2366, %v2363
    %v2400 = vpack.c.b16 %v2367, %v2364
    %v2401 = vpack.c.b16 %v2371, %v2368
    %v2402 = vpack.c.b16 %v2372, %v2369
    %v2403 = vpack.c.b16 %v2373, %v2370
    %v2404 = vpack.c.b16 %v2377, %v2374
    %v2405 = vpack.c.b16 %v2378, %v2375
    %v2406 = vpack.c.b16 %v2379, %v2376
    %v2407 = vpack.c.b16 %v2383, %v2380
    %v2408 = vpack.c.b16 %v2384, %v2381
    %v2409 = vpack.c.b16 %v2385, %v2382
    %2434 = vmatpush.bf16.msra.mxu0 %v2407
    %2435 = vmatpush.bf16.msra.mxu0 %v2404
    %2436 = vmatpush.bf16.msra.mxu0 %v2401
    %2437 = vmatpush.bf16.msra.mxu0 %v2398
    %2438 = vmatpush.bf16.msra.mxu0 %v2395
    %2439 = vmatpush.bf16.msra.mxu0 %v2392
    %2440 = vmatpush.bf16.msra.mxu0 %v2389
    %2441 = vmatpush.bf16.msra.mxu0 %v2386
    %2442 = vmatmul.bf16.gmra.mxu0 %v2273
    %v2443 = vpop.f32.mrf.mxu0
    %v2444 = vadd.f32 0.0, %v2443
    %v2445 = vpop.f32.mrf.mxu0
    %2446 = vdwg.mxu0
    %2447 = vmatpush.bf16.msra.mxu0 %v2408
    %2448 = vmatpush.bf16.msra.mxu0 %v2405
    %2449 = vmatpush.bf16.msra.mxu0 %v2402
    %2450 = vmatpush.bf16.msra.mxu0 %v2399
    %2451 = vmatpush.bf16.msra.mxu0 %v2396
    %2452 = vmatpush.bf16.msra.mxu0 %v2393
    %2453 = vmatpush.bf16.msra.mxu0 %v2390
    %2454 = vmatpush.bf16.msra.mxu0 %v2387
    %2455 = vmatmul.bf16.gmra.mxu0 %v2273
    %v2456 = vpop.f32.mrf.mxu0
    %v2457 = vadd.f32 0.0, %v2456
    %v2458 = vpop.f32.mrf.mxu0
    %2459 = vdwg.mxu0
    %2460 = vmatpush.bf16.msra.mxu0 %v2409
    %2461 = vmatpush.bf16.msra.mxu0 %v2406
    %2462 = vmatpush.bf16.msra.mxu0 %v2403
    %2463 = vmatpush.bf16.msra.mxu0 %v2400
    %2464 = vmatpush.bf16.msra.mxu0 %v2397
    %2465 = vmatpush.bf16.msra.mxu0 %v2394
    %2466 = vmatpush.bf16.msra.mxu0 %v2391
    %2467 = vmatpush.bf16.msra.mxu0 %v2388
    %2468 = vmatmul.bf16.gmra.mxu0 %v2273
    %v2469 = vpop.f32.mrf.mxu0
    %v2470 = vadd.f32 0.0, %v2469
    %v2471 = vpop.f32.mrf.mxu0
    %2472 = vdwg.mxu0
    %v2473 = vadd.f32 %v2270, %v2444
    %v2474 = vxor.u32 %v2473, 2147483648
    %v2475 = vmul.f32 %v2474, 1.442695
    %v2476 = vpow.pop %v2475
    %v2477 = vadd.f32 %v2476, 1.0
    %v2478 = vrcp.pop %v2477
    %v2479 = vmul.f32 %v2477, %v2478
    %v2480 = vsub.f32 1.0, %v2479
    %v2481 = vmul.f32 %v2478, %v2480
    %v2482 = vadd.f32 %v2478, %v2481
    %vm2483 = vweird.f32 %v2477
    %vm2484 = vweird.f32 %v2478
    %vm2485 = vmor %vm2483, %vm2484
    %v2486 = vsel %vm2485, %v2478, %v2482
    %v2487 = vand.u32 2147483647, %v2477
    %vm2488 = vcmp.eq.f32.partialorder %v2487, 8.507059e+37
    %v2489 = vand.u32 %v2477, 2147483648
    %v2490 = vor.u32 1.1754944e-38, %v2489
    %v2491 = vsel %vm2488, %v2490, %v2486
    %v2492 = vmul.f32 1.0, %v2491
    %v2493 = vadd.f32 %v2271, %v2457
    %v2494 = vxor.u32 %v2493, 2147483648
    %v2495 = vmul.f32 %v2494, 1.442695
    %v2496 = vpow.pop %v2495
    %v2497 = vadd.f32 %v2496, 1.0
    %v2498 = vrcp.pop %v2497
    %v2499 = vmul.f32 %v2497, %v2498
    %v2500 = vsub.f32 1.0, %v2499
    %v2501 = vmul.f32 %v2498, %v2500
    %v2502 = vadd.f32 %v2498, %v2501
    %vm2503 = vweird.f32 %v2497
    %vm2504 = vweird.f32 %v2498
    %vm2505 = vmor %vm2503, %vm2504
    %v2506 = vsel %vm2505, %v2498, %v2502
    %v2507 = vand.u32 2147483647, %v2497
    %vm2508 = vcmp.eq.f32.partialorder %v2507, 8.507059e+37
    %v2509 = vand.u32 %v2497, 2147483648
    %v2510 = vor.u32 1.1754944e-38, %v2509
    %v2511 = vsel %vm2508, %v2510, %v2506
    %v2512 = vmul.f32 1.0, %v2511
    %v2513 = vld [vmem:[%s5] sm:$0x1]
    %v2515 = vperm.slane %v2513, 0
    %v2517 = vadd.f32 %v2470, %v2515
    %v2518 = vmul.f32 %v2492, %v2517
    %v2519 = vadd.f32 %v2272, %v2518
    %v2520 = vtanh.pop %v2519
    %v2521 = vsub.f32 1.0, %v2512
    %v2522 = vmul.f32 %v2521, %v2520
    %v2523 = vmul.f32 %v2512, %v2268
    %v2524 = vadd.f32 %v2522, %v2523
    %s2525 = sadd.s32 %s380, 7
    %p2526 = scmp.lt.s32.totalorder %s2525, 8
    %s2527 = scalar_select %p2526, 1, 0
    %s2528 = scvt.s32.f32 %s2527
    %v2529 = vstv %s2528
    %v2530 = vmul.f32 %v2529, %v2524
    %s2531 = ssub.f32 1.0, %s2528
    %v2532 = vstv %s2531
    %v2533 = vmul.f32 %v2532, %v2268
    %v2534 = vadd.f32 %v2530, %v2533
    %2535 = vst [vmem:[#allocation4] sm:$0xff] %v2534
    %s2536 = scalar_lea.vmem [#allocation3], 56
    %2537 = vst [vmem:[%s2536] sm:$0xff] %v2534
    %v2538 = vld [vmem:[#allocation4] sm:$0xff]
    %2539 = vst [vmem:[%s9] sm:$0xff] %v2538
    %v2540 = vld [vmem:[#allocation3] sm:$0xff]
    %v2541 = vld [vmem:[#allocation3 + $0x8] sm:$0xff]
    %v2542 = vld [vmem:[#allocation3 + $0x10] sm:$0xff]
    %v2543 = vld [vmem:[#allocation3 + $0x18] sm:$0xff]
    %v2544 = vld [vmem:[#allocation3 + $0x20] sm:$0xff]
    %v2545 = vld [vmem:[#allocation3 + $0x28] sm:$0xff]
    %v2546 = vld [vmem:[#allocation3 + $0x30] sm:$0xff]
    %v2547 = vld [vmem:[#allocation3 + $0x38] sm:$0xff]
    %v2548 = vpack.c.bf16 %v2541, %v2540
    %v2549 = vpack.c.bf16 %v2543, %v2542
    %v2550 = vpack.c.bf16 %v2545, %v2544
    %v2551 = vpack.c.bf16 %v2547, %v2546
    %v2552 = vld [vmem:[%s6] sm:$0xf]
    %v2553 = vld [vmem:[%s6 + $0x4] sm:$0xf]
    %v2554 = vld [vmem:[%s6 + $0x8] sm:$0xf]
    %v2555 = vld [vmem:[%s6 + $0xc] sm:$0xf]
    %v2556 = vld [vmem:[%s6 + $0x10] sm:$0xf]
    %v2557 = vld [vmem:[%s6 + $0x14] sm:$0xf]
    %v2558 = vld [vmem:[%s6 + $0x18] sm:$0xf]
    %v2559 = vld [vmem:[%s6 + $0x1c] sm:$0xf]
    %v2560 = vld [vmem:[%s6 + $0x20] sm:$0xf]
    %v2561 = vld [vmem:[%s6 + $0x24] sm:$0xf]
    %v2562 = vld [vmem:[%s6 + $0x28] sm:$0xf]
    %v2563 = vld [vmem:[%s6 + $0x2c] sm:$0xf]
    %v2564 = vld [vmem:[%s6 + $0x30] sm:$0xf]
    %v2565 = vld [vmem:[%s6 + $0x34] sm:$0xf]
    %v2566 = vld [vmem:[%s6 + $0x38] sm:$0xf]
    %v2567 = vld [vmem:[%s6 + $0x3c] sm:$0xf]
    %v2568 = vld [vmem:[%s7] sm:$0x1]
    %v2570 = vperm.slane %v2568, 0
    %v2588 = vunpack.c.l.b16 %v2552
    %v2589 = vunpack.c.l.b16 %v2553
    %v2590 = vunpack.c.l.b16 %v2554
    %v2591 = vunpack.c.l.b16 %v2555
    %v2592 = vunpack.c.l.b16 %v2556
    %v2593 = vunpack.c.l.b16 %v2557
    %v2594 = vunpack.c.l.b16 %v2558
    %v2595 = vunpack.c.l.b16 %v2559
    %v2596 = vunpack.c.l.b16 %v2560
    %v2597 = vunpack.c.l.b16 %v2561
    %v2598 = vunpack.c.l.b16 %v2562
    %v2599 = vunpack.c.l.b16 %v2563
    %v2600 = vunpack.c.l.b16 %v2564
    %v2601 = vunpack.c.l.b16 %v2565
    %v2602 = vunpack.c.l.b16 %v2566
    %v2603 = vunpack.c.l.b16 %v2567
    %v2604 = vpack.c.b16 %v2589, %v2588
    %v2605 = vpack.c.b16 %v2591, %v2590
    %v2606 = vpack.c.b16 %v2593, %v2592
    %v2607 = vpack.c.b16 %v2595, %v2594
    %v2608 = vpack.c.b16 %v2597, %v2596
    %v2609 = vpack.c.b16 %v2599, %v2598
    %v2610 = vpack.c.b16 %v2601, %v2600
    %v2611 = vpack.c.b16 %v2603, %v2602
    %2620 = vmatpush.bf16.msra.mxu0 %v2611
    %2621 = vmatpush.bf16.msra.mxu0 %v2610
    %2622 = vmatpush.bf16.msra.mxu0 %v2609
    %2623 = vmatpush.bf16.msra.mxu0 %v2608
    %2624 = vmatpush.bf16.msra.mxu0 %v2607
    %2625 = vmatpush.bf16.msra.mxu0 %v2606
    %2626 = vmatpush.bf16.msra.mxu0 %v2605
    %2627 = vmatpush.bf16.msra.mxu0 %v2604
    %2628 = vmatmul.bf16.gmra.mxu0 %v2548
    %v2629 = vpop.f32.mrf.mxu0
    %v2630 = vadd.f32 %v2570, %v2629
    %v2631 = vpop.f32.mrf.mxu0
    %v2632 = vadd.f32 %v2570, %v2631
    %2633 = vmatmul.bf16.gmra.mxu0 %v2549
    %v2634 = vpop.f32.mrf.mxu0
    %v2635 = vadd.f32 %v2570, %v2634
    %v2636 = vpop.f32.mrf.mxu0
    %v2637 = vadd.f32 %v2570, %v2636
    %2638 = vmatmul.bf16.gmra.mxu0 %v2550
    %v2639 = vpop.f32.mrf.mxu0
    %v2640 = vadd.f32 %v2570, %v2639
    %v2641 = vpop.f32.mrf.mxu0
    %v2642 = vadd.f32 %v2570, %v2641
    %2643 = vmatmul.bf16.gmra.mxu0 %v2551
    %v2644 = vpop.f32.mrf.mxu0
    %v2645 = vadd.f32 %v2570, %v2644
    %v2646 = vpop.f32.mrf.mxu0
    %v2647 = vadd.f32 %v2570, %v2646
    %2648 = vdwg.mxu0
    %v2649 = vxor.u32 %v2630, 2147483648
    %v2650 = vxor.u32 %v2632, 2147483648
    %v2651 = vxor.u32 %v2635, 2147483648
    %v2652 = vxor.u32 %v2637, 2147483648
    %v2653 = vxor.u32 %v2640, 2147483648
    %v2654 = vxor.u32 %v2642, 2147483648
    %v2655 = vxor.u32 %v2645, 2147483648
    %v2656 = vxor.u32 %v2647, 2147483648
    %v2657 = vmul.f32 %v2649, 1.442695
    %v2658 = vpow.pop %v2657
    %v2659 = vmul.f32 %v2650, 1.442695
    %v2660 = vpow.pop %v2659
    %v2661 = vmul.f32 %v2651, 1.442695
    %v2662 = vpow.pop %v2661
    %v2663 = vmul.f32 %v2652, 1.442695
    %v2664 = vpow.pop %v2663
    %v2665 = vmul.f32 %v2653, 1.442695
    %v2666 = vpow.pop %v2665
    %v2667 = vmul.f32 %v2654, 1.442695
    %v2668 = vpow.pop %v2667
    %v2669 = vmul.f32 %v2655, 1.442695
    %v2670 = vpow.pop %v2669
    %v2671 = vmul.f32 %v2656, 1.442695
    %v2672 = vpow.pop %v2671
    %v2673 = vadd.f32 %v2658, 1.0
    %v2674 = vadd.f32 %v2660, 1.0
    %v2675 = vadd.f32 %v2662, 1.0
    %v2676 = vadd.f32 %v2664, 1.0
    %v2677 = vadd.f32 %v2666, 1.0
    %v2678 = vadd.f32 %v2668, 1.0
    %v2679 = vadd.f32 %v2670, 1.0
    %v2680 = vadd.f32 %v2672, 1.0
    %v2681 = vrcp.pop %v2673
    %v2682 = vmul.f32 %v2673, %v2681
    %v2683 = vsub.f32 1.0, %v2682
    %v2684 = vmul.f32 %v2681, %v2683
    %v2685 = vadd.f32 %v2681, %v2684
    %vm2686 = vweird.f32 %v2673
    %vm2687 = vweird.f32 %v2681
    %vm2688 = vmor %vm2686, %vm2687
    %v2689 = vsel %vm2688, %v2681, %v2685
    %v2690 = vand.u32 2147483647, %v2673
    %vm2691 = vcmp.eq.f32.partialorder %v2690, 8.507059e+37
    %v2692 = vand.u32 %v2673, 2147483648
    %v2693 = vor.u32 1.1754944e-38, %v2692
    %v2694 = vsel %vm2691, %v2693, %v2689
    %v2695 = vmul.f32 1.0, %v2694
    %v2696 = vrcp.pop %v2674
    %v2697 = vmul.f32 %v2674, %v2696
    %v2698 = vsub.f32 1.0, %v2697
    %v2699 = vmul.f32 %v2696, %v2698
    %v2700 = vadd.f32 %v2696, %v2699
    %vm2701 = vweird.f32 %v2674
    %vm2702 = vweird.f32 %v2696
    %vm2703 = vmor %vm2701, %vm2702
    %v2704 = vsel %vm2703, %v2696, %v2700
    %v2705 = vand.u32 2147483647, %v2674
    %vm2706 = vcmp.eq.f32.partialorder %v2705, 8.507059e+37
    %v2707 = vand.u32 %v2674, 2147483648
    %v2708 = vor.u32 1.1754944e-38, %v2707
    %v2709 = vsel %vm2706, %v2708, %v2704
    %v2710 = vmul.f32 1.0, %v2709
    %v2711 = vrcp.pop %v2675
    %v2712 = vmul.f32 %v2675, %v2711
    %v2713 = vsub.f32 1.0, %v2712
    %v2714 = vmul.f32 %v2711, %v2713
    %v2715 = vadd.f32 %v2711, %v2714
    %vm2716 = vweird.f32 %v2675
    %vm2717 = vweird.f32 %v2711
    %vm2718 = vmor %vm2716, %vm2717
    %v2719 = vsel %vm2718, %v2711, %v2715
    %v2720 = vand.u32 2147483647, %v2675
    %vm2721 = vcmp.eq.f32.partialorder %v2720, 8.507059e+37
    %v2722 = vand.u32 %v2675, 2147483648
    %v2723 = vor.u32 1.1754944e-38, %v2722
    %v2724 = vsel %vm2721, %v2723, %v2719
    %v2725 = vmul.f32 1.0, %v2724
    %v2726 = vrcp.pop %v2676
    %v2727 = vmul.f32 %v2676, %v2726
    %v2728 = vsub.f32 1.0, %v2727
    %v2729 = vmul.f32 %v2726, %v2728
    %v2730 = vadd.f32 %v2726, %v2729
    %vm2731 = vweird.f32 %v2676
    %vm2732 = vweird.f32 %v2726
    %vm2733 = vmor %vm2731, %vm2732
    %v2734 = vsel %vm2733, %v2726, %v2730
    %v2735 = vand.u32 2147483647, %v2676
    %vm2736 = vcmp.eq.f32.partialorder %v2735, 8.507059e+37
    %v2737 = vand.u32 %v2676, 2147483648
    %v2738 = vor.u32 1.1754944e-38, %v2737
    %v2739 = vsel %vm2736, %v2738, %v2734
    %v2740 = vmul.f32 1.0, %v2739
    %v2741 = vrcp.pop %v2677
    %v2742 = vmul.f32 %v2677, %v2741
    %v2743 = vsub.f32 1.0, %v2742
    %v2744 = vmul.f32 %v2741, %v2743
    %v2745 = vadd.f32 %v2741, %v2744
    %vm2746 = vweird.f32 %v2677
    %vm2747 = vweird.f32 %v2741
    %vm2748 = vmor %vm2746, %vm2747
    %v2749 = vsel %vm2748, %v2741, %v2745
    %v2750 = vand.u32 2147483647, %v2677
    %vm2751 = vcmp.eq.f32.partialorder %v2750, 8.507059e+37
    %v2752 = vand.u32 %v2677, 2147483648
    %v2753 = vor.u32 1.1754944e-38, %v2752
    %v2754 = vsel %vm2751, %v2753, %v2749
    %v2755 = vmul.f32 1.0, %v2754
    %v2756 = vrcp.pop %v2678
    %v2757 = vmul.f32 %v2678, %v2756
    %v2758 = vsub.f32 1.0, %v2757
    %v2759 = vmul.f32 %v2756, %v2758
    %v2760 = vadd.f32 %v2756, %v2759
    %vm2761 = vweird.f32 %v2678
    %vm2762 = vweird.f32 %v2756
    %vm2763 = vmor %vm2761, %vm2762
    %v2764 = vsel %vm2763, %v2756, %v2760
    %v2765 = vand.u32 2147483647, %v2678
    %vm2766 = vcmp.eq.f32.partialorder %v2765, 8.507059e+37
    %v2767 = vand.u32 %v2678, 2147483648
    %v2768 = vor.u32 1.1754944e-38, %v2767
    %v2769 = vsel %vm2766, %v2768, %v2764
    %v2770 = vmul.f32 1.0, %v2769
    %v2771 = vrcp.pop %v2679
    %v2772 = vmul.f32 %v2679, %v2771
    %v2773 = vsub.f32 1.0, %v2772
    %v2774 = vmul.f32 %v2771, %v2773
    %v2775 = vadd.f32 %v2771, %v2774
    %vm2776 = vweird.f32 %v2679
    %vm2777 = vweird.f32 %v2771
    %vm2778 = vmor %vm2776, %vm2777
    %v2779 = vsel %vm2778, %v2771, %v2775
    %v2780 = vand.u32 2147483647, %v2679
    %vm2781 = vcmp.eq.f32.partialorder %v2780, 8.507059e+37
    %v2782 = vand.u32 %v2679, 2147483648
    %v2783 = vor.u32 1.1754944e-38, %v2782
    %v2784 = vsel %vm2781, %v2783, %v2779
    %v2785 = vmul.f32 1.0, %v2784
    %v2786 = vrcp.pop %v2680
    %v2787 = vmul.f32 %v2680, %v2786
    %v2788 = vsub.f32 1.0, %v2787
    %v2789 = vmul.f32 %v2786, %v2788
    %v2790 = vadd.f32 %v2786, %v2789
    %vm2791 = vweird.f32 %v2680
    %vm2792 = vweird.f32 %v2786
    %vm2793 = vmor %vm2791, %vm2792
    %v2794 = vsel %vm2793, %v2786, %v2790
    %v2795 = vand.u32 2147483647, %v2680
    %vm2796 = vcmp.eq.f32.partialorder %v2795, 8.507059e+37
    %v2797 = vand.u32 %v2680, 2147483648
    %v2798 = vor.u32 1.1754944e-38, %v2797
    %v2799 = vsel %vm2796, %v2798, %v2794
    %v2800 = vmul.f32 1.0, %v2799
    %2801 = vst [vmem:[%s8] sm:$0xff] %v2695
    %2802 = vst [vmem:[%s8 + $0x8] sm:$0xff] %v2710
    %2803 = vst [vmem:[%s8 + $0x10] sm:$0xff] %v2725
    %2804 = vst [vmem:[%s8 + $0x18] sm:$0xff] %v2740
    %2805 = vst [vmem:[%s8 + $0x20] sm:$0xff] %v2755
    %2806 = vst [vmem:[%s8 + $0x28] sm:$0xff] %v2770
    %2807 = vst [vmem:[%s8 + $0x30] sm:$0xff] %v2785
    %2808 = vst [vmem:[%s8 + $0x38] sm:$0xff] %v2800
    // Predicated region
    $region46: #{decoder_rnn_forward.1} parent=1 // pred_check
      _
    $region47: #{decoder_rnn_forward.1} parent=1 // pred_check_branch
      %2810 = sbr.rel (0) target = $region49
    $region48: #{decoder_rnn_forward.1} parent=1 // pred_region
      _
    $region49: #{decoder_rnn_forward.1} parent=1 // pred_fallthru
      _
    // Predicated region
    $region50: #{decoder_rnn_forward.1} parent=1 // pred_check
      _
    $region51: #{decoder_rnn_forward.1} parent=1 // pred_check_branch
      %2812 = sbr.rel (0) target = $region53
    $region52: #{decoder_rnn_forward.1} parent=1 // pred_region
      _
    $region53: #{decoder_rnn_forward.1} parent=1 // pred_fallthru
      _
    // Predicated region
    $region54: #{decoder_rnn_forward.1} parent=1 // pred_check
      _
    $region55: #{decoder_rnn_forward.1} parent=1 // pred_check_branch
      %2814 = sbr.rel (0) target = $region57
    $region56: #{decoder_rnn_forward.1} parent=1 // pred_region
      _
    $region57: #{decoder_rnn_forward.1} parent=1 // pred_fallthru
      _
    // Predicated region
    $region58: #{decoder_rnn_forward.1} parent=1 // pred_check
      _
    $region59: #{decoder_rnn_forward.1} parent=1 // pred_check_branch
      %2816 = sbr.rel (0) target = $region61
    $region60: #{decoder_rnn_forward.1} parent=1 // pred_region
      _
    $region61: #{decoder_rnn_forward.1} parent=1 // pred_fallthru
      _
    %2817 = vsyncpa [#allocation6], 1
    %2818 = vsyncpa [#allocation8], 1

</llo_original>
